<compile_context>
chip_gen: v7x
topology: tpu7x:2x2x1
jax: 0.10.0
libtpu: 0.0.40
codegen_flags: <defaults>
</compile_context>

<pallas_src>
import math
from functools import partial
from typing import NamedTuple

import jax
import jax.numpy as jnp
from jax.experimental import pallas as pl
from jax.experimental.pallas import tpu as pltpu

_LANE = 128

# pltpu.CompilerParams is the current name; fall back gracefully on older JAX builds.
_CompilerParamsCls = getattr(pltpu, "CompilerParams", None) or getattr(pltpu, "TPUCompilerParams")
_COMPILER_PARAMS = _CompilerParamsCls(
    dimension_semantics=("parallel",),      # batch grid axis -> both TensorCores on v7x
    vmem_limit_bytes=48 * 1024 * 1024,      # fits v7x's 64 MiB physical VMEM, fine on v5e/v6e
)


def _round_up(x, m):
    return ((x + m - 1) // m) * m


class _ConvMeta(NamedTuple):
    c_in: int
    c_out: int
    k: int
    stride: int
    pad: int
    groups: int
    act: bool       # fused LeakyReLU(negative_slope)
    c_store: int    # lane-padded stored output channel count (multiple of 128)
    is_inter: bool  # collected as an intermediate by forward()


# ---------------------------------------------------------------------------------------------
# Pallas kernel: one (grouped) Conv1d layer. Stride has already been folded to 1 by the wrapper
# (phase packing), so the kernel only sees static shifted slices of a single halo'd tile.
# ---------------------------------------------------------------------------------------------
def _conv1d_kernel(x_ref, w_ref, b_ref, o_ref, lhs_ref, *,
                   n_taps, cg_eff, cg_out, groups, offsets, l_out,
                   c_out, c_store, apply_act, negative_slope):
    """Refs:
      x_ref  : (1, M, C_in_eff)          bf16   halo'd (padded / phase-packed) activation
      w_ref  : (groups, n_taps*cg_eff, cg_out) bf16 tap-folded per-group weights
      b_ref  : (1, c_store)              f32    zero-padded bias
      o_ref  : (1, l_out, c_store)              lane-dense output slab
      lhs_ref: (l_out, n_taps*cg_eff)    bf16   VMEM im2col staging scratch
    """
    bias = b_ref[...]                                        # (1, c_store) f32

    for g in range(groups):                                  # static unroll (groups <= 4 here)
        lo = offsets[g]
        if cg_eff == 1:
            # C_in == 1: MXU contraction depth would be 1 -> do the taps as VPU FMAs instead.
            wg = w_ref[g].astype(jnp.float32)                # (n_taps, cg_out)
            acc = jnp.zeros((l_out, cg_out), jnp.float32)
            for t in range(n_taps):
                col = x_ref[0, t:t + l_out, lo:lo + 1].astype(jnp.float32)   # (l_out, 1)
                acc = acc + col * wg[t:t + 1, :]
        else:
            # Fold the taps into the contraction dim: build the (l_out, n_taps*cg_eff) im2col
            # block from static shifted slices of the halo'd tile, then ONE MXU matmul with
            # K = n_taps * cg_eff.
            for t in range(n_taps):
                lhs_ref[:, t * cg_eff:(t + 1) * cg_eff] = x_ref[0, t:t + l_out, lo:lo + cg_eff]
            acc = jnp.dot(lhs_ref[...], w_ref[g],
                          preferred_element_type=jnp.float32)               # (l_out, cg_out)

        # f32 epilogue (bias + LeakyReLU), then a single cast into this group's output lanes.
        acc = acc + bias[:, g * cg_out:(g + 1) * cg_out]
        if apply_act:
            acc = jnp.where(acc >= 0.0, acc, negative_slope * acc)
        o_ref[0, :, g * cg_out:(g + 1) * cg_out] = acc.astype(o_ref.dtype)

    if c_store > c_out:                                       # zero the lane padding once
        o_ref[0, :, c_out:] = jnp.zeros((l_out, c_store - c_out), o_ref.dtype)


# ---------------------------------------------------------------------------------------------
# Weight folding (done once at init): torch layout (C_out, C_in/groups, K) -> per-group,
# tap-folded (groups, K_fold, Cg_out) matrices matching the kernel's im2col column order.
# ---------------------------------------------------------------------------------------------
def _fold_weight_stride1(w, groups):
    """Row index t*cg + c  <->  tap t, in-channel c (within the group)."""
    c_out, cg, k = w.shape
    cg_out = c_out // groups
    wf = jnp.transpose(w, (2, 1, 0))                    # (k, cg, c_out)
    wf = wf.reshape(k, cg, groups, cg_out)
    wf = jnp.transpose(wf, (2, 0, 1, 3))                # (groups, k, cg, cg_out)
    return wf.reshape(groups, k * cg, cg_out)


def _fold_weight_stride2(w, groups):
    """Phase-packed stride-1 rewrite: row s*(2cg) + 2c + p  <->  tap 2s+p, in-channel c
    (zero-filled for 2s+p >= k)."""
    c_out, cg, k = w.shape
    cg_out = c_out // groups
    s = (k + 1) // 2
    wp = jnp.pad(w, ((0, 0), (0, 0), (0, 2 * s - k)))   # (c_out, cg, 2s)
    wp = wp.reshape(c_out, cg, s, 2)
    wp = jnp.transpose(wp, (2, 1, 3, 0))                # (s, cg, 2, c_out)
    wp = wp.reshape(s, 2 * cg, groups, cg_out)
    wp = jnp.transpose(wp, (2, 0, 1, 3))                # (groups, s, 2cg, cg_out)
    return wp.reshape(groups, s * 2 * cg, cg_out)


# ---------------------------------------------------------------------------------------------
# One conv layer = pad / phase-pack in XLA + one pallas_call (grid over batch).
# ---------------------------------------------------------------------------------------------
def _conv_layer_pallas(h, w_fold, b_pad, meta, *, negative_slope, out_dtype):
    """h: (B, L_in, C_in_store) bf16 channels-last activation (lane-padded channels)."""
    B, l_in, c_in_store = h.shape
    cg = meta.c_in // meta.groups
    cg_out = meta.c_out // meta.groups

    if meta.stride == 1:
        l_out = l_in + 2 * meta.pad - meta.k + 1
        n_taps = meta.k
        cg_eff = cg
        offsets = tuple(g * cg for g in range(meta.groups))
        x_k = jnp.pad(h, ((0, 0), (meta.pad, meta.pad), (0, 0)))
    elif meta.stride == 2:
        # Rewrite the stride-2 conv as a stride-1 conv over the even/odd phase-packed input
        # (channel layout [c0_even, c0_odd, c1_even, ...]) with n_taps = ceil(k / 2).
        l_out = (l_in + 2 * meta.pad - meta.k) // 2 + 1
        s = (meta.k + 1) // 2
        total = 2 * (l_out + s - 1)
        x_pad = jnp.pad(h, ((0, 0), (meta.pad, total - l_in - meta.pad), (0, 0)))
        m_len = total // 2
        x_k = x_pad.reshape(B, m_len, 2, c_in_store)
        x_k = jnp.transpose(x_k, (0, 1, 3, 2)).reshape(B, m_len, 2 * c_in_store)
        n_taps = s
        cg_eff = 2 * cg
        offsets = tuple(2 * g * cg for g in range(meta.groups))
    else:
        # TODO(synk): general strides (the module only uses stride 1 and 2).
        raise NotImplementedError("only stride 1 and 2 are supported")

    # TODO(synk): for very long sequences, add an L grid axis with halo'd (overlapping) input
    # blocks instead of a single whole-L block per batch element.
    _, m_len, c_in_eff = x_k.shape
    k_fold = n_taps * cg_eff

    kernel = partial(
        _conv1d_kernel,
        n_taps=n_taps, cg_eff=cg_eff, cg_out=cg_out, groups=meta.groups, offsets=offsets,
        l_out=l_out, c_out=meta.c_out, c_store=meta.c_store, apply_act=meta.act,
        negative_slope=negative_slope)

    flops = 2 * B * l_out * meta.groups * k_fold * cg_out
    bytes_accessed = (x_k.size * x_k.dtype.itemsize
                      + w_fold.size * w_fold.dtype.itemsize
                      + b_pad.size * b_pad.dtype.itemsize
                      + B * l_out * meta.c_store * jnp.dtype(out_dtype).itemsize)

    return pl.pallas_call(
        kernel,
        out_shape=jax.ShapeDtypeStruct((B, l_out, meta.c_store), out_dtype),
        grid_spec=pltpu.PrefetchScalarGridSpec(
            num_scalar_prefetch=0,
            grid=(B,),
            in_specs=[
                # One whole padded (L x C) tile per batch element; the weight / bias block
                # index is constant across the grid so they stay VMEM-resident.
                pl.BlockSpec((1, m_len, c_in_eff), lambda b: (b, 0, 0)),
                pl.BlockSpec(w_fold.shape, lambda b: (0, 0, 0)),
                pl.BlockSpec(b_pad.shape, lambda b: (0, 0)),
            ],
            out_specs=pl.BlockSpec((1, l_out, meta.c_store), lambda b: (b, 0, 0)),
            scratch_shapes=[pltpu.VMEM((l_out, k_fold), jnp.bfloat16)],
        ),
        compiler_params=_COMPILER_PARAMS,
        cost_estimate=pl.CostEstimate(
            flops=flops, transcendentals=0, bytes_accessed=bytes_accessed),
    )(x_k, w_fold, b_pad)


# ---------------------------------------------------------------------------------------------
# Full forward pass (matches MultiScaleDiscriminator.forward).
# ---------------------------------------------------------------------------------------------
def _msd_forward(params, x, *, metas, negative_slope, return_intermediates=False):
    # x: (B, C_in, L) float32 (PyTorch NCL). Single boundary transpose to channels-last.
    h = jnp.transpose(x, (0, 2, 1)).astype(jnp.bfloat16)
    inters = []
    n = len(metas)
    for i, (meta, (w_fold, b_pad)) in enumerate(zip(metas, params)):
        out_dtype = jnp.float32 if i == n - 1 else jnp.bfloat16
        h = _conv_layer_pallas(h, w_fold, b_pad, meta,
                               negative_slope=negative_slope, out_dtype=out_dtype)
        if meta.is_inter:
            inters.append((h, meta))
    out = jnp.transpose(h[..., :metas[-1].c_out], (0, 2, 1)).astype(jnp.float32)
    if not return_intermediates:
        return out
    inters_ncl = [jnp.transpose(t[..., :m.c_out], (0, 2, 1)).astype(jnp.float32)
                  for (t, m) in inters]
    return out, inters_ncl


def _build_layer_configs(channels, layers, groups, chan_max, input_channels):
    cfgs = [(input_channels, channels, 5, 1, 2, 1, False, False)]      # init_conv (no act)
    curr = channels
    for _, g in zip(range(layers), groups):
        c_out = min(curr * 2, chan_max)
        cfgs.append((curr, c_out, 7, 2, 3, g, True, True))             # grouped stride-2 + LReLU
        curr = c_out
    cfgs.append((curr, curr, 5, 1, 2, 1, True, False))                 # final_conv[0] + LReLU
    cfgs.append((curr, input_channels, 3, 1, 1, 1, False, False))      # final_conv[2]
    return cfgs


class MultiScaleDiscriminatorPallas:
    def __init__(self, channels=16, layers=2, groups=(2, 4), chan_max=1024,
                 input_channels=1, *, key, negative_slope=0.1):
        cfgs = _build_layer_configs(channels, layers, groups, chan_max, input_channels)
        metas, torch_params, kernel_params = [], [], []
        for (c_in, c_out, k, stride, pad, g, act, is_inter) in cfgs:
            key, kw, kb = jax.random.split(key, 3)
            fan_in = (c_in // g) * k
            bound = 1.0 / math.sqrt(fan_in)
            w = jax.random.uniform(kw, (c_out, c_in // g, k), jnp.float32, -bound, bound)
            b = jax.random.uniform(kb, (c_out,), jnp.float32, -bound, bound)
            c_store = _round_up(c_out, _LANE)
            fold = _fold_weight_stride2 if stride == 2 else _fold_weight_stride1
            w_fold = fold(w, g).astype(jnp.bfloat16)
            b_pad = jnp.zeros((1, c_store), jnp.float32).at[0, :c_out].set(b)
            metas.append(_ConvMeta(c_in, c_out, k, stride, pad, g, act, c_store, is_inter))
            torch_params.append((w, b))
            kernel_params.append((w_fold, b_pad))

        self.metas = tuple(metas)
        self.torch_params = tuple(torch_params)   # raw torch-layout f32 params (for reference)
        self.params = tuple(kernel_params)        # folded bf16 weights + padded f32 biases
        self.negative_slope = negative_slope

        metas_c, ns = self.metas, negative_slope

        def fwd(params, x, *, return_intermediates=False):
            return _msd_forward(params, x, metas=metas_c, negative_slope=ns,
                                return_intermediates=return_intermediates)

        self._fwd = jax.jit(fwd, static_argnames=("return_intermediates",))

    def __call__(self, x, return_intermediates=False):
        return self._fwd(self.params, x, return_intermediates=return_intermediates)


# ---------------------------------------------------------------------------------------------
# Pure-XLA reference (mirrors the kernel's bf16 activation/weight storage).
# ---------------------------------------------------------------------------------------------
def _reference_forward(x, torch_params, metas, negative_slope=0.1):
    h = jnp.transpose(x, (0, 2, 1))                                     # (B, L, C) f32
    for meta, (w, b) in zip(metas, torch_params):
        h_q = h.astype(jnp.bfloat16).astype(jnp.float32)
        w_q = w.astype(jnp.bfloat16).astype(jnp.float32)
        y = jax.lax.conv_general_dilated(
            jnp.transpose(h_q, (0, 2, 1)), w_q,
            window_strides=(meta.stride,), padding=[(meta.pad, meta.pad)],
            dimension_numbers=("NCH", "OIH", "NCH"),
            feature_group_count=meta.groups,
            precision=jax.lax.Precision.HIGHEST,
            preferred_element_type=jnp.float32)
        y = y + b[None, :, None]
        y = jnp.transpose(y, (0, 2, 1))
        if meta.act:
            y = jnp.where(y >= 0.0, y, negative_slope * y)
        h = y
    return jnp.transpose(h, (0, 2, 1))                                  # (B, C_out, L_out)


if __name__ == "__main__":
    root = jax.random.PRNGKey(0)
    k_model, k_x = jax.random.split(root)

    model = MultiScaleDiscriminatorPallas(channels=16, layers=2, groups=(2, 4),
                                          chan_max=1024, input_channels=1, key=k_model)

    B, L = 2, 128
    x = jax.random.normal(k_x, (B, 1, L), dtype=jnp.float32)

    out = model(x)
    out = jax.block_until_ready(out)
    assert out.shape == (B, 1, L // 4), out.shape

    out_i, intermediates = model(x, return_intermediates=True)
    jax.block_until_ready((out_i, intermediates))
    assert len(intermediates) == 2
    assert intermediates[0].shape == (B, 32, L // 2)
    assert intermediates[1].shape == (B, 64, L // 4)

    ref = jax.block_until_ready(_reference_forward(x, model.torch_params, model.metas))
    max_err = float(jnp.max(jnp.abs(out - ref)))
    if not (max_err < 2e-2):
        raise AssertionError(f"Pallas output mismatch vs reference (max abs err = {max_err})")

    print("KERNEL_OK")
</pallas_src>

<mosaic_0001>
module attributes {stable_mosaic.version = 11 : i64} {
  func.func @_conv1d_kernel(%arg0: i32, %arg1: memref<1x132x1xbf16, #tpu.memory_space<vmem>>, %arg2: memref<1x5x16xbf16, #tpu.memory_space<vmem>>, %arg3: memref<1x128xf32, #tpu.memory_space<vmem>>, %arg4: memref<1x128x128xbf16, #tpu.memory_space<vmem>>, %arg5: memref<128x5xbf16, #tpu.memory_space<vmem>>) attributes {dimension_semantics = [#tpu.dimension_semantics<parallel>], iteration_bounds = array<i64: 2>, scalar_prefetch = 0 : i64, scratch_operands = 1 : i64, tpu.core_type = #tpu.core_type<tc>, window_params = [{transform_indices = @transform_0, window_bounds = array<i64: 1, 132, 1>}, {pipeline_mode = #tpu.pipeline_mode<synchronous>, transform_indices = @transform_1, window_bounds = array<i64: 1, 5, 16>}, {pipeline_mode = #tpu.pipeline_mode<synchronous>, transform_indices = @transform_2, window_bounds = array<i64: 1, 128>}, {transform_indices = @transform_3, window_bounds = array<i64: 1, 128, 128>}]} {
    %c0 = arith.constant 0 : index
    %c0_0 = arith.constant 0 : index
    %0 = vector.load %arg3[%c0, %c0_0] : memref<1x128xf32, #tpu.memory_space<vmem>>, vector<1x128xf32>
    %c0_1 = arith.constant 0 : index
    %c0_2 = arith.constant 0 : index
    %c0_3 = arith.constant 0 : index
    %1 = vector.load %arg2[%c0_1, %c0_2, %c0_3] : memref<1x5x16xbf16, #tpu.memory_space<vmem>>, vector<1x5x16xbf16>
    %2 = vector.shape_cast %1 : vector<1x5x16xbf16> to vector<5x16xbf16>
    %3 = arith.extf %2 : vector<5x16xbf16> to vector<5x16xf32>
    %cst = arith.constant 0.000000e+00 : f32
    %4 = vector.broadcast %cst : f32 to vector<128x16xf32>
    %c0_4 = arith.constant 0 : index
    %c0_5 = arith.constant 0 : index
    %c0_6 = arith.constant 0 : index
    %5 = vector.load %arg1[%c0_4, %c0_5, %c0_6] : memref<1x132x1xbf16, #tpu.memory_space<vmem>>, vector<1x128x1xbf16>
    %6 = vector.shape_cast %5 : vector<1x128x1xbf16> to vector<128x1xbf16>
    %7 = arith.extf %6 : vector<128x1xbf16> to vector<128x1xf32>
    %8 = vector.extract_strided_slice %3 {offsets = [0, 0], sizes = [1, 16], strides = [1, 1]} : vector<5x16xf32> to vector<1x16xf32>
    %9 = vector.broadcast %7 : vector<128x1xf32> to vector<128x16xf32>
    %10 = vector.broadcast %8 : vector<1x16xf32> to vector<128x16xf32>
    %11 = arith.mulf %9, %10 : vector<128x16xf32>
    %12 = arith.addf %4, %11 : vector<128x16xf32>
    %c0_7 = arith.constant 0 : index
    %c1 = arith.constant 1 : index
    %c0_8 = arith.constant 0 : index
    %13 = vector.load %arg1[%c0_7, %c1, %c0_8] : memref<1x132x1xbf16, #tpu.memory_space<vmem>>, vector<1x128x1xbf16>
    %14 = vector.shape_cast %13 : vector<1x128x1xbf16> to vector<128x1xbf16>
    %15 = arith.extf %14 : vector<128x1xbf16> to vector<128x1xf32>
    %16 = vector.extract_strided_slice %3 {offsets = [1, 0], sizes = [1, 16], strides = [1, 1]} : vector<5x16xf32> to vector<1x16xf32>
    %17 = vector.broadcast %15 : vector<128x1xf32> to vector<128x16xf32>
    %18 = vector.broadcast %16 : vector<1x16xf32> to vector<128x16xf32>
    %19 = arith.mulf %17, %18 : vector<128x16xf32>
    %20 = arith.addf %12, %19 : vector<128x16xf32>
    %c0_9 = arith.constant 0 : index
    %c2 = arith.constant 2 : index
    %c0_10 = arith.constant 0 : index
    %21 = vector.load %arg1[%c0_9, %c2, %c0_10] : memref<1x132x1xbf16, #tpu.memory_space<vmem>>, vector<1x128x1xbf16>
    %22 = vector.shape_cast %21 : vector<1x128x1xbf16> to vector<128x1xbf16>
    %23 = arith.extf %22 : vector<128x1xbf16> to vector<128x1xf32>
    %24 = vector.extract_strided_slice %3 {offsets = [2, 0], sizes = [1, 16], strides = [1, 1]} : vector<5x16xf32> to vector<1x16xf32>
    %25 = vector.broadcast %23 : vector<128x1xf32> to vector<128x16xf32>
    %26 = vector.broadcast %24 : vector<1x16xf32> to vector<128x16xf32>
    %27 = arith.mulf %25, %26 : vector<128x16xf32>
    %28 = arith.addf %20, %27 : vector<128x16xf32>
    %c0_11 = arith.constant 0 : index
    %c3 = arith.constant 3 : index
    %c0_12 = arith.constant 0 : index
    %29 = vector.load %arg1[%c0_11, %c3, %c0_12] : memref<1x132x1xbf16, #tpu.memory_space<vmem>>, vector<1x128x1xbf16>
    %30 = vector.shape_cast %29 : vector<1x128x1xbf16> to vector<128x1xbf16>
    %31 = arith.extf %30 : vector<128x1xbf16> to vector<128x1xf32>
    %32 = vector.extract_strided_slice %3 {offsets = [3, 0], sizes = [1, 16], strides = [1, 1]} : vector<5x16xf32> to vector<1x16xf32>
    %33 = vector.broadcast %31 : vector<128x1xf32> to vector<128x16xf32>
    %34 = vector.broadcast %32 : vector<1x16xf32> to vector<128x16xf32>
    %35 = arith.mulf %33, %34 : vector<128x16xf32>
    %36 = arith.addf %28, %35 : vector<128x16xf32>
    %c0_13 = arith.constant 0 : index
    %c4 = arith.constant 4 : index
    %c0_14 = arith.constant 0 : index
    %37 = vector.load %arg1[%c0_13, %c4, %c0_14] : memref<1x132x1xbf16, #tpu.memory_space<vmem>>, vector<1x128x1xbf16>
    %38 = vector.shape_cast %37 : vector<1x128x1xbf16> to vector<128x1xbf16>
    %39 = arith.extf %38 : vector<128x1xbf16> to vector<128x1xf32>
    %40 = vector.extract_strided_slice %3 {offsets = [4, 0], sizes = [1, 16], strides = [1, 1]} : vector<5x16xf32> to vector<1x16xf32>
    %41 = vector.broadcast %39 : vector<128x1xf32> to vector<128x16xf32>
    %42 = vector.broadcast %40 : vector<1x16xf32> to vector<128x16xf32>
    %43 = arith.mulf %41, %42 : vector<128x16xf32>
    %44 = arith.addf %36, %43 : vector<128x16xf32>
    %45 = vector.extract_strided_slice %0 {offsets = [0, 0], sizes = [1, 16], strides = [1, 1]} : vector<1x128xf32> to vector<1x16xf32>
    %46 = vector.broadcast %45 : vector<1x16xf32> to vector<128x16xf32>
    %47 = arith.addf %44, %46 : vector<128x16xf32>
    %48 = arith.truncf %47 : vector<128x16xf32> to vector<128x16xbf16>
    %c0_15 = arith.constant 0 : index
    %c0_16 = arith.constant 0 : index
    %c0_17 = arith.constant 0 : index
    %49 = vector.load %arg4[%c0_15, %c0_16, %c0_17] : memref<1x128x128xbf16, #tpu.memory_space<vmem>>, vector<1x128x16xbf16>
    %50 = vector.shape_cast %49 : vector<1x128x16xbf16> to vector<128x16xbf16>
    %51 = vector.shape_cast %48 : vector<128x16xbf16> to vector<1x128x16xbf16>
    tpu.vector_store %arg4[%c0_15, %c0_16, %c0_17], %51 {strides = array<i32>} : memref<1x128x128xbf16, #tpu.memory_space<vmem>>, vector<1x128x16xbf16>,
    %cst_18 = arith.constant 0.000000e+00 : bf16
    %52 = vector.broadcast %cst_18 : bf16 to vector<128x112xbf16>
    %c0_19 = arith.constant 0 : index
    %c0_20 = arith.constant 0 : index
    %c16 = arith.constant 16 : index
    %53 = vector.load %arg4[%c0_19, %c0_20, %c16] : memref<1x128x128xbf16, #tpu.memory_space<vmem>>, vector<1x128x112xbf16>
    %54 = vector.shape_cast %53 : vector<1x128x112xbf16> to vector<128x112xbf16>
    %55 = vector.shape_cast %52 : vector<128x112xbf16> to vector<1x128x112xbf16>
    tpu.vector_store %arg4[%c0_19, %c0_20, %c16], %55 {strides = array<i32>} : memref<1x128x128xbf16, #tpu.memory_space<vmem>>, vector<1x128x112xbf16>,
    return
  }
  func.func @transform_0(%arg0: i32) -> (i32, i32, i32) {
    %c0_i32 = arith.constant 0 : i32
    %c0_i32_0 = arith.constant 0 : i32
    %c0_i32_1 = arith.constant 0 : i32
    return %arg0, %c0_i32, %c0_i32_0 : i32, i32, i32
  }
  func.func @transform_1(%arg0: i32) -> (i32, i32, i32) {
    %c0_i32 = arith.constant 0 : i32
    %c0_i32_0 = arith.constant 0 : i32
    %c0_i32_1 = arith.constant 0 : i32
    %c0_i32_2 = arith.constant 0 : i32
    return %c0_i32, %c0_i32_0, %c0_i32_1 : i32, i32, i32
  }
  func.func @transform_2(%arg0: i32) -> (i32, i32) {
    %c0_i32 = arith.constant 0 : i32
    %c0_i32_0 = arith.constant 0 : i32
    %c0_i32_1 = arith.constant 0 : i32
    return %c0_i32, %c0_i32_0 : i32, i32
  }
  func.func @transform_3(%arg0: i32) -> (i32, i32, i32) {
    %c0_i32 = arith.constant 0 : i32
    %c0_i32_0 = arith.constant 0 : i32
    %c0_i32_1 = arith.constant 0 : i32
    return %arg0, %c0_i32, %c0_i32_0 : i32, i32, i32
  }
}

module attributes {stable_mosaic.version = 11 : i64} {
  func.func @_conv1d_kernel(%arg0: i32, %arg1: memref<1x67x256xbf16, #tpu.memory_space<vmem>>, %arg2: memref<2x64x16xbf16, #tpu.memory_space<vmem>>, %arg3: memref<1x128xf32, #tpu.memory_space<vmem>>, %arg4: memref<1x64x128xbf16, #tpu.memory_space<vmem>>, %arg5: memref<64x64xbf16, #tpu.memory_space<vmem>>) attributes {dimension_semantics = [#tpu.dimension_semantics<parallel>], iteration_bounds = array<i64: 2>, scalar_prefetch = 0 : i64, scratch_operands = 1 : i64, tpu.core_type = #tpu.core_type<tc>, window_params = [{transform_indices = @transform_0, window_bounds = array<i64: 1, 67, 256>}, {pipeline_mode = #tpu.pipeline_mode<synchronous>, transform_indices = @transform_1, window_bounds = array<i64: 2, 64, 16>}, {pipeline_mode = #tpu.pipeline_mode<synchronous>, transform_indices = @transform_2, window_bounds = array<i64: 1, 128>}, {transform_indices = @transform_3, window_bounds = array<i64: 1, 64, 128>}]} {
    %c0 = arith.constant 0 : index
    %c0_0 = arith.constant 0 : index
    %0 = vector.load %arg3[%c0, %c0_0] : memref<1x128xf32, #tpu.memory_space<vmem>>, vector<1x128xf32>
    %c0_1 = arith.constant 0 : index
    %c0_2 = arith.constant 0 : index
    %c0_3 = arith.constant 0 : index
    %1 = vector.load %arg1[%c0_1, %c0_2, %c0_3] : memref<1x67x256xbf16, #tpu.memory_space<vmem>>, vector<1x64x16xbf16>
    %2 = vector.shape_cast %1 : vector<1x64x16xbf16> to vector<64x16xbf16>
    %c0_4 = arith.constant 0 : index
    %c0_5 = arith.constant 0 : index
    %3 = vector.load %arg5[%c0_4, %c0_5] : memref<64x64xbf16, #tpu.memory_space<vmem>>, vector<64x16xbf16>
    tpu.vector_store %arg5[%c0_4, %c0_5], %2 {strides = array<i32>} : memref<64x64xbf16, #tpu.memory_space<vmem>>, vector<64x16xbf16>,
    %c0_6 = arith.constant 0 : index
    %c1 = arith.constant 1 : index
    %c0_7 = arith.constant 0 : index
    %4 = vector.load %arg1[%c0_6, %c1, %c0_7] : memref<1x67x256xbf16, #tpu.memory_space<vmem>>, vector<1x64x16xbf16>
    %5 = vector.shape_cast %4 : vector<1x64x16xbf16> to vector<64x16xbf16>
    %c0_8 = arith.constant 0 : index
    %c16 = arith.constant 16 : index
    %6 = vector.load %arg5[%c0_8, %c16] : memref<64x64xbf16, #tpu.memory_space<vmem>>, vector<64x16xbf16>
    tpu.vector_store %arg5[%c0_8, %c16], %5 {strides = array<i32>} : memref<64x64xbf16, #tpu.memory_space<vmem>>, vector<64x16xbf16>,
    %c0_9 = arith.constant 0 : index
    %c2 = arith.constant 2 : index
    %c0_10 = arith.constant 0 : index
    %7 = vector.load %arg1[%c0_9, %c2, %c0_10] : memref<1x67x256xbf16, #tpu.memory_space<vmem>>, vector<1x64x16xbf16>
    %8 = vector.shape_cast %7 : vector<1x64x16xbf16> to vector<64x16xbf16>
    %c0_11 = arith.constant 0 : index
    %c32 = arith.constant 32 : index
    %9 = vector.load %arg5[%c0_11, %c32] : memref<64x64xbf16, #tpu.memory_space<vmem>>, vector<64x16xbf16>
    tpu.vector_store %arg5[%c0_11, %c32], %8 {strides = array<i32>} : memref<64x64xbf16, #tpu.memory_space<vmem>>, vector<64x16xbf16>,
    %c0_12 = arith.constant 0 : index
    %c3 = arith.constant 3 : index
    %c0_13 = arith.constant 0 : index
    %10 = vector.load %arg1[%c0_12, %c3, %c0_13] : memref<1x67x256xbf16, #tpu.memory_space<vmem>>, vector<1x64x16xbf16>
    %11 = vector.shape_cast %10 : vector<1x64x16xbf16> to vector<64x16xbf16>
    %c0_14 = arith.constant 0 : index
    %c48 = arith.constant 48 : index
    %12 = vector.load %arg5[%c0_14, %c48] : memref<64x64xbf16, #tpu.memory_space<vmem>>, vector<64x16xbf16>
    tpu.vector_store %arg5[%c0_14, %c48], %11 {strides = array<i32>} : memref<64x64xbf16, #tpu.memory_space<vmem>>, vector<64x16xbf16>,
    %c0_15 = arith.constant 0 : index
    %c0_16 = arith.constant 0 : index
    %13 = vector.load %arg5[%c0_15, %c0_16] : memref<64x64xbf16, #tpu.memory_space<vmem>>, vector<64x64xbf16>
    %c0_17 = arith.constant 0 : index
    %c0_18 = arith.constant 0 : index
    %c0_19 = arith.constant 0 : index
    %14 = vector.load %arg2[%c0_17, %c0_18, %c0_19] : memref<2x64x16xbf16, #tpu.memory_space<vmem>>, vector<1x64x16xbf16>
    %15 = vector.shape_cast %14 : vector<1x64x16xbf16> to vector<64x16xbf16>
    %cst = arith.constant dense<0.000000e+00> : vector<64x16xf32>
    %16 = tpu.matmul %13, %15, %cst {dimension_numbers = #tpu.dot_dimension_numbers<[1], [0], [0], [1], [0, 0, 1, 1], [], []>} : vector<64x64xbf16>, vector<64x16xbf16>, vector<64x16xf32> -> vector<64x16xf32>
    %17 = vector.extract_strided_slice %0 {offsets = [0, 0], sizes = [1, 16], strides = [1, 1]} : vector<1x128xf32> to vector<1x16xf32>
    %18 = vector.broadcast %17 : vector<1x16xf32> to vector<64x16xf32>
    %19 = arith.addf %16, %18 : vector<64x16xf32>
    %cst_20 = arith.constant 0.000000e+00 : f32
    %20 = vector.broadcast %cst_20 : f32 to vector<64x16xf32>
    %21 = arith.cmpf oge, %19, %20 : vector<64x16xf32>
    %cst_21 = arith.constant 1.000000e-01 : f32
    %22 = vector.broadcast %cst_21 : f32 to vector<64x16xf32>
    %23 = arith.mulf %22, %19 : vector<64x16xf32>
    %24 = arith.select %21, %19, %23 : vector<64x16xi1>, vector<64x16xf32>
    %25 = arith.truncf %24 : vector<64x16xf32> to vector<64x16xbf16>
    %c0_22 = arith.constant 0 : index
    %c0_23 = arith.constant 0 : index
    %c0_24 = arith.constant 0 : index
    %26 = vector.load %arg4[%c0_22, %c0_23, %c0_24] : memref<1x64x128xbf16, #tpu.memory_space<vmem>>, vector<1x64x16xbf16>
    %27 = vector.shape_cast %26 : vector<1x64x16xbf16> to vector<64x16xbf16>
    %28 = vector.shape_cast %25 : vector<64x16xbf16> to vector<1x64x16xbf16>
    tpu.vector_store %arg4[%c0_22, %c0_23, %c0_24], %28 {strides = array<i32>} : memref<1x64x128xbf16, #tpu.memory_space<vmem>>, vector<1x64x16xbf16>,
    %c0_25 = arith.constant 0 : index
    %c0_26 = arith.constant 0 : index
    %c16_27 = arith.constant 16 : index
    %29 = vector.load %arg1[%c0_25, %c0_26, %c16_27] : memref<1x67x256xbf16, #tpu.memory_space<vmem>>, vector<1x64x16xbf16>
    %30 = vector.shape_cast %29 : vector<1x64x16xbf16> to vector<64x16xbf16>
    %c0_28 = arith.constant 0 : index
    %c0_29 = arith.constant 0 : index
    %31 = vector.load %arg5[%c0_28, %c0_29] : memref<64x64xbf16, #tpu.memory_space<vmem>>, vector<64x16xbf16>
    tpu.vector_store %arg5[%c0_28, %c0_29], %30 {strides = array<i32>} : memref<64x64xbf16, #tpu.memory_space<vmem>>, vector<64x16xbf16>,
    %c0_30 = arith.constant 0 : index
    %c1_31 = arith.constant 1 : index
    %c16_32 = arith.constant 16 : index
    %32 = vector.load %arg1[%c0_30, %c1_31, %c16_32] : memref<1x67x256xbf16, #tpu.memory_space<vmem>>, vector<1x64x16xbf16>
    %33 = vector.shape_cast %32 : vector<1x64x16xbf16> to vector<64x16xbf16>
    %c0_33 = arith.constant 0 : index
    %c16_34 = arith.constant 16 : index
    %34 = vector.load %arg5[%c0_33, %c16_34] : memref<64x64xbf16, #tpu.memory_space<vmem>>, vector<64x16xbf16>
    tpu.vector_store %arg5[%c0_33, %c16_34], %33 {strides = array<i32>} : memref<64x64xbf16, #tpu.memory_space<vmem>>, vector<64x16xbf16>,
    %c0_35 = arith.constant 0 : index
    %c2_36 = arith.constant 2 : index
    %c16_37 = arith.constant 16 : index
    %35 = vector.load %arg1[%c0_35, %c2_36, %c16_37] : memref<1x67x256xbf16, #tpu.memory_space<vmem>>, vector<1x64x16xbf16>
    %36 = vector.shape_cast %35 : vector<1x64x16xbf16> to vector<64x16xbf16>
    %c0_38 = arith.constant 0 : index
    %c32_39 = arith.constant 32 : index
    %37 = vector.load %arg5[%c0_38, %c32_39] : memref<64x64xbf16, #tpu.memory_space<vmem>>, vector<64x16xbf16>
    tpu.vector_store %arg5[%c0_38, %c32_39], %36 {strides = array<i32>} : memref<64x64xbf16, #tpu.memory_space<vmem>>, vector<64x16xbf16>,
    %c0_40 = arith.constant 0 : index
    %c3_41 = arith.constant 3 : index
    %c16_42 = arith.constant 16 : index
    %38 = vector.load %arg1[%c0_40, %c3_41, %c16_42] : memref<1x67x256xbf16, #tpu.memory_space<vmem>>, vector<1x64x16xbf16>
    %39 = vector.shape_cast %38 : vector<1x64x16xbf16> to vector<64x16xbf16>
    %c0_43 = arith.constant 0 : index
    %c48_44 = arith.constant 48 : index
    %40 = vector.load %arg5[%c0_43, %c48_44] : memref<64x64xbf16, #tpu.memory_space<vmem>>, vector<64x16xbf16>
    tpu.vector_store %arg5[%c0_43, %c48_44], %39 {strides = array<i32>} : memref<64x64xbf16, #tpu.memory_space<vmem>>, vector<64x16xbf16>,
    %c0_45 = arith.constant 0 : index
    %c0_46 = arith.constant 0 : index
    %41 = vector.load %arg5[%c0_45, %c0_46] : memref<64x64xbf16, #tpu.memory_space<vmem>>, vector<64x64xbf16>
    %c1_47 = arith.constant 1 : index
    %c0_48 = arith.constant 0 : index
    %c0_49 = arith.constant 0 : index
    %42 = vector.load %arg2[%c1_47, %c0_48, %c0_49] : memref<2x64x16xbf16, #tpu.memory_space<vmem>>, vector<1x64x16xbf16>
    %43 = vector.shape_cast %42 : vector<1x64x16xbf16> to vector<64x16xbf16>
    %cst_50 = arith.constant dense<0.000000e+00> : vector<64x16xf32>
    %44 = tpu.matmul %41, %43, %cst_50 {dimension_numbers = #tpu.dot_dimension_numbers<[1], [0], [0], [1], [0, 0, 1, 1], [], []>} : vector<64x64xbf16>, vector<64x16xbf16>, vector<64x16xf32> -> vector<64x16xf32>
    %45 = vector.extract_strided_slice %0 {offsets = [0, 16], sizes = [1, 16], strides = [1, 1]} : vector<1x128xf32> to vector<1x16xf32>
    %46 = vector.broadcast %45 : vector<1x16xf32> to vector<64x16xf32>
    %47 = arith.addf %44, %46 : vector<64x16xf32>
    %cst_51 = arith.constant 0.000000e+00 : f32
    %48 = vector.broadcast %cst_51 : f32 to vector<64x16xf32>
    %49 = arith.cmpf oge, %47, %48 : vector<64x16xf32>
    %cst_52 = arith.constant 1.000000e-01 : f32
    %50 = vector.broadcast %cst_52 : f32 to vector<64x16xf32>
    %51 = arith.mulf %50, %47 : vector<64x16xf32>
    %52 = arith.select %49, %47, %51 : vector<64x16xi1>, vector<64x16xf32>
    %53 = arith.truncf %52 : vector<64x16xf32> to vector<64x16xbf16>
    %c0_53 = arith.constant 0 : index
    %c0_54 = arith.constant 0 : index
    %c16_55 = arith.constant 16 : index
    %54 = vector.load %arg4[%c0_53, %c0_54, %c16_55] : memref<1x64x128xbf16, #tpu.memory_space<vmem>>, vector<1x64x16xbf16>
    %55 = vector.shape_cast %54 : vector<1x64x16xbf16> to vector<64x16xbf16>
    %56 = vector.shape_cast %53 : vector<64x16xbf16> to vector<1x64x16xbf16>
    tpu.vector_store %arg4[%c0_53, %c0_54, %c16_55], %56 {strides = array<i32>} : memref<1x64x128xbf16, #tpu.memory_space<vmem>>, vector<1x64x16xbf16>,
    %cst_56 = arith.constant 0.000000e+00 : bf16
    %57 = vector.broadcast %cst_56 : bf16 to vector<64x96xbf16>
    %c0_57 = arith.constant 0 : index
    %c0_58 = arith.constant 0 : index
    %c32_59 = arith.constant 32 : index
    %58 = vector.load %arg4[%c0_57, %c0_58, %c32_59] : memref<1x64x128xbf16, #tpu.memory_space<vmem>>, vector<1x64x96xbf16>
    %59 = vector.shape_cast %58 : vector<1x64x96xbf16> to vector<64x96xbf16>
    %60 = vector.shape_cast %57 : vector<64x96xbf16> to vector<1x64x96xbf16>
    tpu.vector_store %arg4[%c0_57, %c0_58, %c32_59], %60 {strides = array<i32>} : memref<1x64x128xbf16, #tpu.memory_space<vmem>>, vector<1x64x96xbf16>,
    return
  }
  func.func @transform_0(%arg0: i32) -> (i32, i32, i32) {
    %c0_i32 = arith.constant 0 : i32
    %c0_i32_0 = arith.constant 0 : i32
    %c0_i32_1 = arith.constant 0 : i32
    return %arg0, %c0_i32, %c0_i32_0 : i32, i32, i32
  }
  func.func @transform_1(%arg0: i32) -> (i32, i32, i32) {
    %c0_i32 = arith.constant 0 : i32
    %c0_i32_0 = arith.constant 0 : i32
    %c0_i32_1 = arith.constant 0 : i32
    %c0_i32_2 = arith.constant 0 : i32
    return %c0_i32, %c0_i32_0, %c0_i32_1 : i32, i32, i32
  }
  func.func @transform_2(%arg0: i32) -> (i32, i32) {
    %c0_i32 = arith.constant 0 : i32
    %c0_i32_0 = arith.constant 0 : i32
    %c0_i32_1 = arith.constant 0 : i32
    return %c0_i32, %c0_i32_0 : i32, i32
  }
  func.func @transform_3(%arg0: i32) -> (i32, i32, i32) {
    %c0_i32 = arith.constant 0 : i32
    %c0_i32_0 = arith.constant 0 : i32
    %c0_i32_1 = arith.constant 0 : i32
    return %arg0, %c0_i32, %c0_i32_0 : i32, i32, i32
  }
}

module attributes {stable_mosaic.version = 11 : i64} {
  func.func @_conv1d_kernel(%arg0: i32, %arg1: memref<1x36x128xbf16, #tpu.memory_space<vmem>>, %arg2: memref<1x320x64xbf16, #tpu.memory_space<vmem>>, %arg3: memref<1x128xf32, #tpu.memory_space<vmem>>, %arg4: memref<1x32x128xbf16, #tpu.memory_space<vmem>>, %arg5: memref<32x320xbf16, #tpu.memory_space<vmem>>) attributes {dimension_semantics = [#tpu.dimension_semantics<parallel>], iteration_bounds = array<i64: 2>, scalar_prefetch = 0 : i64, scratch_operands = 1 : i64, tpu.core_type = #tpu.core_type<tc>, window_params = [{transform_indices = @transform_0, window_bounds = array<i64: 1, 36, 128>}, {pipeline_mode = #tpu.pipeline_mode<synchronous>, transform_indices = @transform_1, window_bounds = array<i64: 1, 320, 64>}, {pipeline_mode = #tpu.pipeline_mode<synchronous>, transform_indices = @transform_2, window_bounds = array<i64: 1, 128>}, {transform_indices = @transform_3, window_bounds = array<i64: 1, 32, 128>}]} {
    %c0 = arith.constant 0 : index
    %c0_0 = arith.constant 0 : index
    %0 = vector.load %arg3[%c0, %c0_0] : memref<1x128xf32, #tpu.memory_space<vmem>>, vector<1x128xf32>
    %c0_1 = arith.constant 0 : index
    %c0_2 = arith.constant 0 : index
    %c0_3 = arith.constant 0 : index
    %1 = vector.load %arg1[%c0_1, %c0_2, %c0_3] : memref<1x36x128xbf16, #tpu.memory_space<vmem>>, vector<1x32x64xbf16>
    %2 = vector.shape_cast %1 : vector<1x32x64xbf16> to vector<32x64xbf16>
    %c0_4 = arith.constant 0 : index
    %c0_5 = arith.constant 0 : index
    %3 = vector.load %arg5[%c0_4, %c0_5] : memref<32x320xbf16, #tpu.memory_space<vmem>>, vector<32x64xbf16>
    tpu.vector_store %arg5[%c0_4, %c0_5], %2 {strides = array<i32>} : memref<32x320xbf16, #tpu.memory_space<vmem>>, vector<32x64xbf16>,
    %c0_6 = arith.constant 0 : index
    %c1 = arith.constant 1 : index
    %c0_7 = arith.constant 0 : index
    %4 = vector.load %arg1[%c0_6, %c1, %c0_7] : memref<1x36x128xbf16, #tpu.memory_space<vmem>>, vector<1x32x64xbf16>
    %5 = vector.shape_cast %4 : vector<1x32x64xbf16> to vector<32x64xbf16>
    %c0_8 = arith.constant 0 : index
    %c64 = arith.constant 64 : index
    %6 = vector.load %arg5[%c0_8, %c64] : memref<32x320xbf16, #tpu.memory_space<vmem>>, vector<32x64xbf16>
    tpu.vector_store %arg5[%c0_8, %c64], %5 {strides = array<i32>} : memref<32x320xbf16, #tpu.memory_space<vmem>>, vector<32x64xbf16>,
    %c0_9 = arith.constant 0 : index
    %c2 = arith.constant 2 : index
    %c0_10 = arith.constant 0 : index
    %7 = vector.load %arg1[%c0_9, %c2, %c0_10] : memref<1x36x128xbf16, #tpu.memory_space<vmem>>, vector<1x32x64xbf16>
    %8 = vector.shape_cast %7 : vector<1x32x64xbf16> to vector<32x64xbf16>
    %c0_11 = arith.constant 0 : index
    %c128 = arith.constant 128 : index
    %9 = vector.load %arg5[%c0_11, %c128] : memref<32x320xbf16, #tpu.memory_space<vmem>>, vector<32x64xbf16>
    tpu.vector_store %arg5[%c0_11, %c128], %8 {strides = array<i32>} : memref<32x320xbf16, #tpu.memory_space<vmem>>, vector<32x64xbf16>,
    %c0_12 = arith.constant 0 : index
    %c3 = arith.constant 3 : index
    %c0_13 = arith.constant 0 : index
    %10 = vector.load %arg1[%c0_12, %c3, %c0_13] : memref<1x36x128xbf16, #tpu.memory_space<vmem>>, vector<1x32x64xbf16>
    %11 = vector.shape_cast %10 : vector<1x32x64xbf16> to vector<32x64xbf16>
    %c0_14 = arith.constant 0 : index
    %c192 = arith.constant 192 : index
    %12 = vector.load %arg5[%c0_14, %c192] : memref<32x320xbf16, #tpu.memory_space<vmem>>, vector<32x64xbf16>
    tpu.vector_store %arg5[%c0_14, %c192], %11 {strides = array<i32>} : memref<32x320xbf16, #tpu.memory_space<vmem>>, vector<32x64xbf16>,
    %c0_15 = arith.constant 0 : index
    %c4 = arith.constant 4 : index
    %c0_16 = arith.constant 0 : index
    %13 = vector.load %arg1[%c0_15, %c4, %c0_16] : memref<1x36x128xbf16, #tpu.memory_space<vmem>>, vector<1x32x64xbf16>
    %14 = vector.shape_cast %13 : vector<1x32x64xbf16> to vector<32x64xbf16>
    %c0_17 = arith.constant 0 : index
    %c256 = arith.constant 256 : index
    %15 = vector.load %arg5[%c0_17, %c256] : memref<32x320xbf16, #tpu.memory_space<vmem>>, vector<32x64xbf16>
    tpu.vector_store %arg5[%c0_17, %c256], %14 {strides = array<i32>} : memref<32x320xbf16, #tpu.memory_space<vmem>>, vector<32x64xbf16>,
    %c0_18 = arith.constant 0 : index
    %c0_19 = arith.constant 0 : index
    %16 = vector.load %arg5[%c0_18, %c0_19] : memref<32x320xbf16, #tpu.memory_space<vmem>>, vector<32x320xbf16>
    %c0_20 = arith.constant 0 : index
    %c0_21 = arith.constant 0 : index
    %c0_22 = arith.constant 0 : index
    %17 = vector.load %arg2[%c0_20, %c0_21, %c0_22] : memref<1x320x64xbf16, #tpu.memory_space<vmem>>, vector<1x320x64xbf16>
    %18 = vector.shape_cast %17 : vector<1x320x64xbf16> to vector<320x64xbf16>
    %cst = arith.constant dense<0.000000e+00> : vector<32x64xf32>
    %19 = tpu.matmul %16, %18, %cst {dimension_numbers = #tpu.dot_dimension_numbers<[1], [0], [0], [1], [0, 0, 1, 1], [], []>} : vector<32x320xbf16>, vector<320x64xbf16>, vector<32x64xf32> -> vector<32x64xf32>
    %20 = vector.extract_strided_slice %0 {offsets = [0, 0], sizes = [1, 64], strides = [1, 1]} : vector<1x128xf32> to vector<1x64xf32>
    %21 = vector.broadcast %20 : vector<1x64xf32> to vector<32x64xf32>
    %22 = arith.addf %19, %21 : vector<32x64xf32>
    %cst_23 = arith.constant 0.000000e+00 : f32
    %23 = vector.broadcast %cst_23 : f32 to vector<32x64xf32>
    %24 = arith.cmpf oge, %22, %23 : vector<32x64xf32>
    %cst_24 = arith.constant 1.000000e-01 : f32
    %25 = vector.broadcast %cst_24 : f32 to vector<32x64xf32>
    %26 = arith.mulf %25, %22 : vector<32x64xf32>
    %27 = arith.select %24, %22, %26 : vector<32x64xi1>, vector<32x64xf32>
    %28 = arith.truncf %27 : vector<32x64xf32> to vector<32x64xbf16>
    %c0_25 = arith.constant 0 : index
    %c0_26 = arith.constant 0 : index
    %c0_27 = arith.constant 0 : index
    %29 = vector.load %arg4[%c0_25, %c0_26, %c0_27] : memref<1x32x128xbf16, #tpu.memory_space<vmem>>, vector<1x32x64xbf16>
    %30 = vector.shape_cast %29 : vector<1x32x64xbf16> to vector<32x64xbf16>
    %31 = vector.shape_cast %28 : vector<32x64xbf16> to vector<1x32x64xbf16>
    tpu.vector_store %arg4[%c0_25, %c0_26, %c0_27], %31 {strides = array<i32>} : memref<1x32x128xbf16, #tpu.memory_space<vmem>>, vector<1x32x64xbf16>,
    %cst_28 = arith.constant 0.000000e+00 : bf16
    %32 = vector.broadcast %cst_28 : bf16 to vector<32x64xbf16>
    %c0_29 = arith.constant 0 : index
    %c0_30 = arith.constant 0 : index
    %c64_31 = arith.constant 64 : index
    %33 = vector.load %arg4[%c0_29, %c0_30, %c64_31] : memref<1x32x128xbf16, #tpu.memory_space<vmem>>, vector<1x32x64xbf16>
    %34 = vector.shape_cast %33 : vector<1x32x64xbf16> to vector<32x64xbf16>
    %35 = vector.shape_cast %32 : vector<32x64xbf16> to vector<1x32x64xbf16>
    tpu.vector_store %arg4[%c0_29, %c0_30, %c64_31], %35 {strides = array<i32>} : memref<1x32x128xbf16, #tpu.memory_space<vmem>>, vector<1x32x64xbf16>,
    return
  }
  func.func @transform_0(%arg0: i32) -> (i32, i32, i32) {
    %c0_i32 = arith.constant 0 : i32
    %c0_i32_0 = arith.constant 0 : i32
    %c0_i32_1 = arith.constant 0 : i32
    return %arg0, %c0_i32, %c0_i32_0 : i32, i32, i32
  }
  func.func @transform_1(%arg0: i32) -> (i32, i32, i32) {
    %c0_i32 = arith.constant 0 : i32
    %c0_i32_0 = arith.constant 0 : i32
    %c0_i32_1 = arith.constant 0 : i32
    %c0_i32_2 = arith.constant 0 : i32
    return %c0_i32, %c0_i32_0, %c0_i32_1 : i32, i32, i32
  }
  func.func @transform_2(%arg0: i32) -> (i32, i32) {
    %c0_i32 = arith.constant 0 : i32
    %c0_i32_0 = arith.constant 0 : i32
    %c0_i32_1 = arith.constant 0 : i32
    return %c0_i32, %c0_i32_0 : i32, i32
  }
  func.func @transform_3(%arg0: i32) -> (i32, i32, i32) {
    %c0_i32 = arith.constant 0 : i32
    %c0_i32_0 = arith.constant 0 : i32
    %c0_i32_1 = arith.constant 0 : i32
    return %arg0, %c0_i32, %c0_i32_0 : i32, i32, i32
  }
}

module attributes {stable_mosaic.version = 11 : i64} {
  func.func @_conv1d_kernel(%arg0: i32, %arg1: memref<1x35x256xbf16, #tpu.memory_space<vmem>>, %arg2: memref<4x64x16xbf16, #tpu.memory_space<vmem>>, %arg3: memref<1x128xf32, #tpu.memory_space<vmem>>, %arg4: memref<1x32x128xbf16, #tpu.memory_space<vmem>>, %arg5: memref<32x64xbf16, #tpu.memory_space<vmem>>) attributes {dimension_semantics = [#tpu.dimension_semantics<parallel>], iteration_bounds = array<i64: 2>, scalar_prefetch = 0 : i64, scratch_operands = 1 : i64, tpu.core_type = #tpu.core_type<tc>, window_params = [{transform_indices = @transform_0, window_bounds = array<i64: 1, 35, 256>}, {pipeline_mode = #tpu.pipeline_mode<synchronous>, transform_indices = @transform_1, window_bounds = array<i64: 4, 64, 16>}, {pipeline_mode = #tpu.pipeline_mode<synchronous>, transform_indices = @transform_2, window_bounds = array<i64: 1, 128>}, {transform_indices = @transform_3, window_bounds = array<i64: 1, 32, 128>}]} {
    %c0 = arith.constant 0 : index
    %c0_0 = arith.constant 0 : index
    %0 = vector.load %arg3[%c0, %c0_0] : memref<1x128xf32, #tpu.memory_space<vmem>>, vector<1x128xf32>
    %c0_1 = arith.constant 0 : index
    %c0_2 = arith.constant 0 : index
    %c0_3 = arith.constant 0 : index
    %1 = vector.load %arg1[%c0_1, %c0_2, %c0_3] : memref<1x35x256xbf16, #tpu.memory_space<vmem>>, vector<1x32x16xbf16>
    %2 = vector.shape_cast %1 : vector<1x32x16xbf16> to vector<32x16xbf16>
    %c0_4 = arith.constant 0 : index
    %c0_5 = arith.constant 0 : index
    %3 = vector.load %arg5[%c0_4, %c0_5] : memref<32x64xbf16, #tpu.memory_space<vmem>>, vector<32x16xbf16>
    tpu.vector_store %arg5[%c0_4, %c0_5], %2 {strides = array<i32>} : memref<32x64xbf16, #tpu.memory_space<vmem>>, vector<32x16xbf16>,
    %c0_6 = arith.constant 0 : index
    %c1 = arith.constant 1 : index
    %c0_7 = arith.constant 0 : index
    %4 = vector.load %arg1[%c0_6, %c1, %c0_7] : memref<1x35x256xbf16, #tpu.memory_space<vmem>>, vector<1x32x16xbf16>
    %5 = vector.shape_cast %4 : vector<1x32x16xbf16> to vector<32x16xbf16>
    %c0_8 = arith.constant 0 : index
    %c16 = arith.constant 16 : index
    %6 = vector.load %arg5[%c0_8, %c16] : memref<32x64xbf16, #tpu.memory_space<vmem>>, vector<32x16xbf16>
    tpu.vector_store %arg5[%c0_8, %c16], %5 {strides = array<i32>} : memref<32x64xbf16, #tpu.memory_space<vmem>>, vector<32x16xbf16>,
    %c0_9 = arith.constant 0 : index
    %c2 = arith.constant 2 : index
    %c0_10 = arith.constant 0 : index
    %7 = vector.load %arg1[%c0_9, %c2, %c0_10] : memref<1x35x256xbf16, #tpu.memory_space<vmem>>, vector<1x32x16xbf16>
    %8 = vector.shape_cast %7 : vector<1x32x16xbf16> to vector<32x16xbf16>
    %c0_11 = arith.constant 0 : index
    %c32 = arith.constant 32 : index
    %9 = vector.load %arg5[%c0_11, %c32] : memref<32x64xbf16, #tpu.memory_space<vmem>>, vector<32x16xbf16>
    tpu.vector_store %arg5[%c0_11, %c32], %8 {strides = array<i32>} : memref<32x64xbf16, #tpu.memory_space<vmem>>, vector<32x16xbf16>,
    %c0_12 = arith.constant 0 : index
    %c3 = arith.constant 3 : index
    %c0_13 = arith.constant 0 : index
    %10 = vector.load %arg1[%c0_12, %c3, %c0_13] : memref<1x35x256xbf16, #tpu.memory_space<vmem>>, vector<1x32x16xbf16>
    %11 = vector.shape_cast %10 : vector<1x32x16xbf16> to vector<32x16xbf16>
    %c0_14 = arith.constant 0 : index
    %c48 = arith.constant 48 : index
    %12 = vector.load %arg5[%c0_14, %c48] : memref<32x64xbf16, #tpu.memory_space<vmem>>, vector<32x16xbf16>
    tpu.vector_store %arg5[%c0_14, %c48], %11 {strides = array<i32>} : memref<32x64xbf16, #tpu.memory_space<vmem>>, vector<32x16xbf16>,
    %c0_15 = arith.constant 0 : index
    %c0_16 = arith.constant 0 : index
    %13 = vector.load %arg5[%c0_15, %c0_16] : memref<32x64xbf16, #tpu.memory_space<vmem>>, vector<32x64xbf16>
    %c0_17 = arith.constant 0 : index
    %c0_18 = arith.constant 0 : index
    %c0_19 = arith.constant 0 : index
    %14 = vector.load %arg2[%c0_17, %c0_18, %c0_19] : memref<4x64x16xbf16, #tpu.memory_space<vmem>>, vector<1x64x16xbf16>
    %15 = vector.shape_cast %14 : vector<1x64x16xbf16> to vector<64x16xbf16>
    %cst = arith.constant dense<0.000000e+00> : vector<32x16xf32>
    %16 = tpu.matmul %13, %15, %cst {dimension_numbers = #tpu.dot_dimension_numbers<[1], [0], [0], [1], [0, 0, 1, 1], [], []>} : vector<32x64xbf16>, vector<64x16xbf16>, vector<32x16xf32> -> vector<32x16xf32>
    %17 = vector.extract_strided_slice %0 {offsets = [0, 0], sizes = [1, 16], strides = [1, 1]} : vector<1x128xf32> to vector<1x16xf32>
    %18 = vector.broadcast %17 : vector<1x16xf32> to vector<32x16xf32>
    %19 = arith.addf %16, %18 : vector<32x16xf32>
    %cst_20 = arith.constant 0.000000e+00 : f32
    %20 = vector.broadcast %cst_20 : f32 to vector<32x16xf32>
    %21 = arith.cmpf oge, %19, %20 : vector<32x16xf32>
    %cst_21 = arith.constant 1.000000e-01 : f32
    %22 = vector.broadcast %cst_21 : f32 to vector<32x16xf32>
    %23 = arith.mulf %22, %19 : vector<32x16xf32>
    %24 = arith.select %21, %19, %23 : vector<32x16xi1>, vector<32x16xf32>
    %25 = arith.truncf %24 : vector<32x16xf32> to vector<32x16xbf16>
    %c0_22 = arith.constant 0 : index
    %c0_23 = arith.constant 0 : index
    %c0_24 = arith.constant 0 : index
    %26 = vector.load %arg4[%c0_22, %c0_23, %c0_24] : memref<1x32x128xbf16, #tpu.memory_space<vmem>>, vector<1x32x16xbf16>
    %27 = vector.shape_cast %26 : vector<1x32x16xbf16> to vector<32x16xbf16>
    %28 = vector.shape_cast %25 : vector<32x16xbf16> to vector<1x32x16xbf16>
    tpu.vector_store %arg4[%c0_22, %c0_23, %c0_24], %28 {strides = array<i32>} : memref<1x32x128xbf16, #tpu.memory_space<vmem>>, vector<1x32x16xbf16>,
    %c0_25 = arith.constant 0 : index
    %c0_26 = arith.constant 0 : index
    %c16_27 = arith.constant 16 : index
    %29 = vector.load %arg1[%c0_25, %c0_26, %c16_27] : memref<1x35x256xbf16, #tpu.memory_space<vmem>>, vector<1x32x16xbf16>
    %30 = vector.shape_cast %29 : vector<1x32x16xbf16> to vector<32x16xbf16>
    %c0_28 = arith.constant 0 : index
    %c0_29 = arith.constant 0 : index
    %31 = vector.load %arg5[%c0_28, %c0_29] : memref<32x64xbf16, #tpu.memory_space<vmem>>, vector<32x16xbf16>
    tpu.vector_store %arg5[%c0_28, %c0_29], %30 {strides = array<i32>} : memref<32x64xbf16, #tpu.memory_space<vmem>>, vector<32x16xbf16>,
    %c0_30 = arith.constant 0 : index
    %c1_31 = arith.constant 1 : index
    %c16_32 = arith.constant 16 : index
    %32 = vector.load %arg1[%c0_30, %c1_31, %c16_32] : memref<1x35x256xbf16, #tpu.memory_space<vmem>>, vector<1x32x16xbf16>
    %33 = vector.shape_cast %32 : vector<1x32x16xbf16> to vector<32x16xbf16>
    %c0_33 = arith.constant 0 : index
    %c16_34 = arith.constant 16 : index
    %34 = vector.load %arg5[%c0_33, %c16_34] : memref<32x64xbf16, #tpu.memory_space<vmem>>, vector<32x16xbf16>
    tpu.vector_store %arg5[%c0_33, %c16_34], %33 {strides = array<i32>} : memref<32x64xbf16, #tpu.memory_space<vmem>>, vector<32x16xbf16>,
    %c0_35 = arith.constant 0 : index
    %c2_36 = arith.constant 2 : index
    %c16_37 = arith.constant 16 : index
    %35 = vector.load %arg1[%c0_35, %c2_36, %c16_37] : memref<1x35x256xbf16, #tpu.memory_space<vmem>>, vector<1x32x16xbf16>
    %36 = vector.shape_cast %35 : vector<1x32x16xbf16> to vector<32x16xbf16>
    %c0_38 = arith.constant 0 : index
    %c32_39 = arith.constant 32 : index
    %37 = vector.load %arg5[%c0_38, %c32_39] : memref<32x64xbf16, #tpu.memory_space<vmem>>, vector<32x16xbf16>
    tpu.vector_store %arg5[%c0_38, %c32_39], %36 {strides = array<i32>} : memref<32x64xbf16, #tpu.memory_space<vmem>>, vector<32x16xbf16>,
    %c0_40 = arith.constant 0 : index
    %c3_41 = arith.constant 3 : index
    %c16_42 = arith.constant 16 : index
    %38 = vector.load %arg1[%c0_40, %c3_41, %c16_42] : memref<1x35x256xbf16, #tpu.memory_space<vmem>>, vector<1x32x16xbf16>
    %39 = vector.shape_cast %38 : vector<1x32x16xbf16> to vector<32x16xbf16>
    %c0_43 = arith.constant 0 : index
    %c48_44 = arith.constant 48 : index
    %40 = vector.load %arg5[%c0_43, %c48_44] : memref<32x64xbf16, #tpu.memory_space<vmem>>, vector<32x16xbf16>
    tpu.vector_store %arg5[%c0_43, %c48_44], %39 {strides = array<i32>} : memref<32x64xbf16, #tpu.memory_space<vmem>>, vector<32x16xbf16>,
    %c0_45 = arith.constant 0 : index
    %c0_46 = arith.constant 0 : index
    %41 = vector.load %arg5[%c0_45, %c0_46] : memref<32x64xbf16, #tpu.memory_space<vmem>>, vector<32x64xbf16>
    %c1_47 = arith.constant 1 : index
    %c0_48 = arith.constant 0 : index
    %c0_49 = arith.constant 0 : index
    %42 = vector.load %arg2[%c1_47, %c0_48, %c0_49] : memref<4x64x16xbf16, #tpu.memory_space<vmem>>, vector<1x64x16xbf16>
    %43 = vector.shape_cast %42 : vector<1x64x16xbf16> to vector<64x16xbf16>
    %cst_50 = arith.constant dense<0.000000e+00> : vector<32x16xf32>
    %44 = tpu.matmul %41, %43, %cst_50 {dimension_numbers = #tpu.dot_dimension_numbers<[1], [0], [0], [1], [0, 0, 1, 1], [], []>} : vector<32x64xbf16>, vector<64x16xbf16>, vector<32x16xf32> -> vector<32x16xf32>
    %45 = vector.extract_strided_slice %0 {offsets = [0, 16], sizes = [1, 16], strides = [1, 1]} : vector<1x128xf32> to vector<1x16xf32>
    %46 = vector.broadcast %45 : vector<1x16xf32> to vector<32x16xf32>
    %47 = arith.addf %44, %46 : vector<32x16xf32>
    %cst_51 = arith.constant 0.000000e+00 : f32
    %48 = vector.broadcast %cst_51 : f32 to vector<32x16xf32>
    %49 = arith.cmpf oge, %47, %48 : vector<32x16xf32>
    %cst_52 = arith.constant 1.000000e-01 : f32
    %50 = vector.broadcast %cst_52 : f32 to vector<32x16xf32>
    %51 = arith.mulf %50, %47 : vector<32x16xf32>
    %52 = arith.select %49, %47, %51 : vector<32x16xi1>, vector<32x16xf32>
    %53 = arith.truncf %52 : vector<32x16xf32> to vector<32x16xbf16>
    %c0_53 = arith.constant 0 : index
    %c0_54 = arith.constant 0 : index
    %c16_55 = arith.constant 16 : index
    %54 = vector.load %arg4[%c0_53, %c0_54, %c16_55] : memref<1x32x128xbf16, #tpu.memory_space<vmem>>, vector<1x32x16xbf16>
    %55 = vector.shape_cast %54 : vector<1x32x16xbf16> to vector<32x16xbf16>
    %56 = vector.shape_cast %53 : vector<32x16xbf16> to vector<1x32x16xbf16>
    tpu.vector_store %arg4[%c0_53, %c0_54, %c16_55], %56 {strides = array<i32>} : memref<1x32x128xbf16, #tpu.memory_space<vmem>>, vector<1x32x16xbf16>,
    %c0_56 = arith.constant 0 : index
    %c0_57 = arith.constant 0 : index
    %c32_58 = arith.constant 32 : index
    %57 = vector.load %arg1[%c0_56, %c0_57, %c32_58] : memref<1x35x256xbf16, #tpu.memory_space<vmem>>, vector<1x32x16xbf16>
    %58 = vector.shape_cast %57 : vector<1x32x16xbf16> to vector<32x16xbf16>
    %c0_59 = arith.constant 0 : index
    %c0_60 = arith.constant 0 : index
    %59 = vector.load %arg5[%c0_59, %c0_60] : memref<32x64xbf16, #tpu.memory_space<vmem>>, vector<32x16xbf16>
    tpu.vector_store %arg5[%c0_59, %c0_60], %58 {strides = array<i32>} : memref<32x64xbf16, #tpu.memory_space<vmem>>, vector<32x16xbf16>,
    %c0_61 = arith.constant 0 : index
    %c1_62 = arith.constant 1 : index
    %c32_63 = arith.constant 32 : index
    %60 = vector.load %arg1[%c0_61, %c1_62, %c32_63] : memref<1x35x256xbf16, #tpu.memory_space<vmem>>, vector<1x32x16xbf16>
    %61 = vector.shape_cast %60 : vector<1x32x16xbf16> to vector<32x16xbf16>
    %c0_64 = arith.constant 0 : index
    %c16_65 = arith.constant 16 : index
    %62 = vector.load %arg5[%c0_64, %c16_65] : memref<32x64xbf16, #tpu.memory_space<vmem>>, vector<32x16xbf16>
    tpu.vector_store %arg5[%c0_64, %c16_65], %61 {strides = array<i32>} : memref<32x64xbf16, #tpu.memory_space<vmem>>, vector<32x16xbf16>,
    %c0_66 = arith.constant 0 : index
    %c2_67 = arith.constant 2 : index
    %c32_68 = arith.constant 32 : index
    %63 = vector.load %arg1[%c0_66, %c2_67, %c32_68] : memref<1x35x256xbf16, #tpu.memory_space<vmem>>, vector<1x32x16xbf16>
    %64 = vector.shape_cast %63 : vector<1x32x16xbf16> to vector<32x16xbf16>
    %c0_69 = arith.constant 0 : index
    %c32_70 = arith.constant 32 : index
    %65 = vector.load %arg5[%c0_69, %c32_70] : memref<32x64xbf16, #tpu.memory_space<vmem>>, vector<32x16xbf16>
    tpu.vector_store %arg5[%c0_69, %c32_70], %64 {strides = array<i32>} : memref<32x64xbf16, #tpu.memory_space<vmem>>, vector<32x16xbf16>,
    %c0_71 = arith.constant 0 : index
    %c3_72 = arith.constant 3 : index
    %c32_73 = arith.constant 32 : index
    %66 = vector.load %arg1[%c0_71, %c3_72, %c32_73] : memref<1x35x256xbf16, #tpu.memory_space<vmem>>, vector<1x32x16xbf16>
    %67 = vector.shape_cast %66 : vector<1x32x16xbf16> to vector<32x16xbf16>
    %c0_74 = arith.constant 0 : index
    %c48_75 = arith.constant 48 : index
    %68 = vector.load %arg5[%c0_74, %c48_75] : memref<32x64xbf16, #tpu.memory_space<vmem>>, vector<32x16xbf16>
    tpu.vector_store %arg5[%c0_74, %c48_75], %67 {strides = array<i32>} : memref<32x64xbf16, #tpu.memory_space<vmem>>, vector<32x16xbf16>,
    %c0_76 = arith.constant 0 : index
    %c0_77 = arith.constant 0 : index
    %69 = vector.load %arg5[%c0_76, %c0_77] : memref<32x64xbf16, #tpu.memory_space<vmem>>, vector<32x64xbf16>
    %c2_78 = arith.constant 2 : index
    %c0_79 = arith.constant 0 : index
    %c0_80 = arith.constant 0 : index
    %70 = vector.load %arg2[%c2_78, %c0_79, %c0_80] : memref<4x64x16xbf16, #tpu.memory_space<vmem>>, vector<1x64x16xbf16>
    %71 = vector.shape_cast %70 : vector<1x64x16xbf16> to vector<64x16xbf16>
    %cst_81 = arith.constant dense<0.000000e+00> : vector<32x16xf32>
    %72 = tpu.matmul %69, %71, %cst_81 {dimension_numbers = #tpu.dot_dimension_numbers<[1], [0], [0], [1], [0, 0, 1, 1], [], []>} : vector<32x64xbf16>, vector<64x16xbf16>, vector<32x16xf32> -> vector<32x16xf32>
    %73 = vector.extract_strided_slice %0 {offsets = [0, 32], sizes = [1, 16], strides = [1, 1]} : vector<1x128xf32> to vector<1x16xf32>
    %74 = vector.broadcast %73 : vector<1x16xf32> to vector<32x16xf32>
    %75 = arith.addf %72, %74 : vector<32x16xf32>
    %cst_82 = arith.constant 0.000000e+00 : f32
    %76 = vector.broadcast %cst_82 : f32 to vector<32x16xf32>
    %77 = arith.cmpf oge, %75, %76 : vector<32x16xf32>
    %cst_83 = arith.constant 1.000000e-01 : f32
    %78 = vector.broadcast %cst_83 : f32 to vector<32x16xf32>
    %79 = arith.mulf %78, %75 : vector<32x16xf32>
    %80 = arith.select %77, %75, %79 : vector<32x16xi1>, vector<32x16xf32>
    %81 = arith.truncf %80 : vector<32x16xf32> to vector<32x16xbf16>
    %c0_84 = arith.constant 0 : index
    %c0_85 = arith.constant 0 : index
    %c32_86 = arith.constant 32 : index
    %82 = vector.load %arg4[%c0_84, %c0_85, %c32_86] : memref<1x32x128xbf16, #tpu.memory_space<vmem>>, vector<1x32x16xbf16>
    %83 = vector.shape_cast %82 : vector<1x32x16xbf16> to vector<32x16xbf16>
    %84 = vector.shape_cast %81 : vector<32x16xbf16> to vector<1x32x16xbf16>
    tpu.vector_store %arg4[%c0_84, %c0_85, %c32_86], %84 {strides = array<i32>} : memref<1x32x128xbf16, #tpu.memory_space<vmem>>, vector<1x32x16xbf16>,
    %c0_87 = arith.constant 0 : index
    %c0_88 = arith.constant 0 : index
    %c48_89 = arith.constant 48 : index
    %85 = vector.load %arg1[%c0_87, %c0_88, %c48_89] : memref<1x35x256xbf16, #tpu.memory_space<vmem>>, vector<1x32x16xbf16>
    %86 = vector.shape_cast %85 : vector<1x32x16xbf16> to vector<32x16xbf16>
    %c0_90 = arith.constant 0 : index
    %c0_91 = arith.constant 0 : index
    %87 = vector.load %arg5[%c0_90, %c0_91] : memref<32x64xbf16, #tpu.memory_space<vmem>>, vector<32x16xbf16>
    tpu.vector_store %arg5[%c0_90, %c0_91], %86 {strides = array<i32>} : memref<32x64xbf16, #tpu.memory_space<vmem>>, vector<32x16xbf16>,
    %c0_92 = arith.constant 0 : index
    %c1_93 = arith.constant 1 : index
    %c48_94 = arith.constant 48 : index
    %88 = vector.load %arg1[%c0_92, %c1_93, %c48_94] : memref<1x35x256xbf16, #tpu.memory_space<vmem>>, vector<1x32x16xbf16>
    %89 = vector.shape_cast %88 : vector<1x32x16xbf16> to vector<32x16xbf16>
    %c0_95 = arith.constant 0 : index
    %c16_96 = arith.constant 16 : index
    %90 = vector.load %arg5[%c0_95, %c16_96] : memref<32x64xbf16, #tpu.memory_space<vmem>>, vector<32x16xbf16>
    tpu.vector_store %arg5[%c0_95, %c16_96], %89 {strides = array<i32>} : memref<32x64xbf16, #tpu.memory_space<vmem>>, vector<32x16xbf16>,
    %c0_97 = arith.constant 0 : index
    %c2_98 = arith.constant 2 : index
    %c48_99 = arith.constant 48 : index
    %91 = vector.load %arg1[%c0_97, %c2_98, %c48_99] : memref<1x35x256xbf16, #tpu.memory_space<vmem>>, vector<1x32x16xbf16>
    %92 = vector.shape_cast %91 : vector<1x32x16xbf16> to vector<32x16xbf16>
    %c0_100 = arith.constant 0 : index
    %c32_101 = arith.constant 32 : index
    %93 = vector.load %arg5[%c0_100, %c32_101] : memref<32x64xbf16, #tpu.memory_space<vmem>>, vector<32x16xbf16>
    tpu.vector_store %arg5[%c0_100, %c32_101], %92 {strides = array<i32>} : memref<32x64xbf16, #tpu.memory_space<vmem>>, vector<32x16xbf16>,
    %c0_102 = arith.constant 0 : index
    %c3_103 = arith.constant 3 : index
    %c48_104 = arith.constant 48 : index
    %94 = vector.load %arg1[%c0_102, %c3_103, %c48_104] : memref<1x35x256xbf16, #tpu.memory_space<vmem>>, vector<1x32x16xbf16>
    %95 = vector.shape_cast %94 : vector<1x32x16xbf16> to vector<32x16xbf16>
    %c0_105 = arith.constant 0 : index
    %c48_106 = arith.constant 48 : index
    %96 = vector.load %arg5[%c0_105, %c48_106] : memref<32x64xbf16, #tpu.memory_space<vmem>>, vector<32x16xbf16>
    tpu.vector_store %arg5[%c0_105, %c48_106], %95 {strides = array<i32>} : memref<32x64xbf16, #tpu.memory_space<vmem>>, vector<32x16xbf16>,
    %c0_107 = arith.constant 0 : index
    %c0_108 = arith.constant 0 : index
    %97 = vector.load %arg5[%c0_107, %c0_108] : memref<32x64xbf16, #tpu.memory_space<vmem>>, vector<32x64xbf16>
    %c3_109 = arith.constant 3 : index
    %c0_110 = arith.constant 0 : index
    %c0_111 = arith.constant 0 : index
    %98 = vector.load %arg2[%c3_109, %c0_110, %c0_111] : memref<4x64x16xbf16, #tpu.memory_space<vmem>>, vector<1x64x16xbf16>
    %99 = vector.shape_cast %98 : vector<1x64x16xbf16> to vector<64x16xbf16>
    %cst_112 = arith.constant dense<0.000000e+00> : vector<32x16xf32>
    %100 = tpu.matmul %97, %99, %cst_112 {dimension_numbers = #tpu.dot_dimension_numbers<[1], [0], [0], [1], [0, 0, 1, 1], [], []>} : vector<32x64xbf16>, vector<64x16xbf16>, vector<32x16xf32> -> vector<32x16xf32>
    %101 = vector.extract_strided_slice %0 {offsets = [0, 48], sizes = [1, 16], strides = [1, 1]} : vector<1x128xf32> to vector<1x16xf32>
    %102 = vector.broadcast %101 : vector<1x16xf32> to vector<32x16xf32>
    %103 = arith.addf %100, %102 : vector<32x16xf32>
    %cst_113 = arith.constant 0.000000e+00 : f32
    %104 = vector.broadcast %cst_113 : f32 to vector<32x16xf32>
    %105 = arith.cmpf oge, %103, %104 : vector<32x16xf32>
    %cst_114 = arith.constant 1.000000e-01 : f32
    %106 = vector.broadcast %cst_114 : f32 to vector<32x16xf32>
    %107 = arith.mulf %106, %103 : vector<32x16xf32>
    %108 = arith.select %105, %103, %107 : vector<32x16xi1>, vector<32x16xf32>
    %109 = arith.truncf %108 : vector<32x16xf32> to vector<32x16xbf16>
    %c0_115 = arith.constant 0 : index
    %c0_116 = arith.constant 0 : index
    %c48_117 = arith.constant 48 : index
    %110 = vector.load %arg4[%c0_115, %c0_116, %c48_117] : memref<1x32x128xbf16, #tpu.memory_space<vmem>>, vector<1x32x16xbf16>
    %111 = vector.shape_cast %110 : vector<1x32x16xbf16> to vector<32x16xbf16>
    %112 = vector.shape_cast %109 : vector<32x16xbf16> to vector<1x32x16xbf16>
    tpu.vector_store %arg4[%c0_115, %c0_116, %c48_117], %112 {strides = array<i32>} : memref<1x32x128xbf16, #tpu.memory_space<vmem>>, vector<1x32x16xbf16>,
    %cst_118 = arith.constant 0.000000e+00 : bf16
    %113 = vector.broadcast %cst_118 : bf16 to vector<32x64xbf16>
    %c0_119 = arith.constant 0 : index
    %c0_120 = arith.constant 0 : index
    %c64 = arith.constant 64 : index
    %114 = vector.load %arg4[%c0_119, %c0_120, %c64] : memref<1x32x128xbf16, #tpu.memory_space<vmem>>, vector<1x32x64xbf16>
    %115 = vector.shape_cast %114 : vector<1x32x64xbf16> to vector<32x64xbf16>
    %116 = vector.shape_cast %113 : vector<32x64xbf16> to vector<1x32x64xbf16>
    tpu.vector_store %arg4[%c0_119, %c0_120, %c64], %116 {strides = array<i32>} : memref<1x32x128xbf16, #tpu.memory_space<vmem>>, vector<1x32x64xbf16>,
    return
  }
  func.func @transform_0(%arg0: i32) -> (i32, i32, i32) {
    %c0_i32 = arith.constant 0 : i32
    %c0_i32_0 = arith.constant 0 : i32
    %c0_i32_1 = arith.constant 0 : i32
    return %arg0, %c0_i32, %c0_i32_0 : i32, i32, i32
  }
  func.func @transform_1(%arg0: i32) -> (i32, i32, i32) {
    %c0_i32 = arith.constant 0 : i32
    %c0_i32_0 = arith.constant 0 : i32
    %c0_i32_1 = arith.constant 0 : i32
    %c0_i32_2 = arith.constant 0 : i32
    return %c0_i32, %c0_i32_0, %c0_i32_1 : i32, i32, i32
  }
  func.func @transform_2(%arg0: i32) -> (i32, i32) {
    %c0_i32 = arith.constant 0 : i32
    %c0_i32_0 = arith.constant 0 : i32
    %c0_i32_1 = arith.constant 0 : i32
    return %c0_i32, %c0_i32_0 : i32, i32
  }
  func.func @transform_3(%arg0: i32) -> (i32, i32, i32) {
    %c0_i32 = arith.constant 0 : i32
    %c0_i32_0 = arith.constant 0 : i32
    %c0_i32_1 = arith.constant 0 : i32
    return %arg0, %c0_i32, %c0_i32_0 : i32, i32, i32
  }
}

module attributes {stable_mosaic.version = 11 : i64} {
  func.func @_conv1d_kernel(%arg0: i32, %arg1: memref<1x34x128xbf16, #tpu.memory_space<vmem>>, %arg2: memref<1x192x1xbf16, #tpu.memory_space<vmem>>, %arg3: memref<1x128xf32, #tpu.memory_space<vmem>>, %arg4: memref<1x32x128xf32, #tpu.memory_space<vmem>>, %arg5: memref<32x192xbf16, #tpu.memory_space<vmem>>) attributes {dimension_semantics = [#tpu.dimension_semantics<parallel>], iteration_bounds = array<i64: 2>, scalar_prefetch = 0 : i64, scratch_operands = 1 : i64, tpu.core_type = #tpu.core_type<tc>, window_params = [{transform_indices = @transform_0, window_bounds = array<i64: 1, 34, 128>}, {pipeline_mode = #tpu.pipeline_mode<synchronous>, transform_indices = @transform_1, window_bounds = array<i64: 1, 192, 1>}, {pipeline_mode = #tpu.pipeline_mode<synchronous>, transform_indices = @transform_2, window_bounds = array<i64: 1, 128>}, {transform_indices = @transform_3, window_bounds = array<i64: 1, 32, 128>}]} {
    %c0 = arith.constant 0 : index
    %c0_0 = arith.constant 0 : index
    %0 = vector.load %arg3[%c0, %c0_0] : memref<1x128xf32, #tpu.memory_space<vmem>>, vector<1x128xf32>
    %c0_1 = arith.constant 0 : index
    %c0_2 = arith.constant 0 : index
    %c0_3 = arith.constant 0 : index
    %1 = vector.load %arg1[%c0_1, %c0_2, %c0_3] : memref<1x34x128xbf16, #tpu.memory_space<vmem>>, vector<1x32x64xbf16>
    %2 = vector.shape_cast %1 : vector<1x32x64xbf16> to vector<32x64xbf16>
    %c0_4 = arith.constant 0 : index
    %c0_5 = arith.constant 0 : index
    %3 = vector.load %arg5[%c0_4, %c0_5] : memref<32x192xbf16, #tpu.memory_space<vmem>>, vector<32x64xbf16>
    tpu.vector_store %arg5[%c0_4, %c0_5], %2 {strides = array<i32>} : memref<32x192xbf16, #tpu.memory_space<vmem>>, vector<32x64xbf16>,
    %c0_6 = arith.constant 0 : index
    %c1 = arith.constant 1 : index
    %c0_7 = arith.constant 0 : index
    %4 = vector.load %arg1[%c0_6, %c1, %c0_7] : memref<1x34x128xbf16, #tpu.memory_space<vmem>>, vector<1x32x64xbf16>
    %5 = vector.shape_cast %4 : vector<1x32x64xbf16> to vector<32x64xbf16>
    %c0_8 = arith.constant 0 : index
    %c64 = arith.constant 64 : index
    %6 = vector.load %arg5[%c0_8, %c64] : memref<32x192xbf16, #tpu.memory_space<vmem>>, vector<32x64xbf16>
    tpu.vector_store %arg5[%c0_8, %c64], %5 {strides = array<i32>} : memref<32x192xbf16, #tpu.memory_space<vmem>>, vector<32x64xbf16>,
    %c0_9 = arith.constant 0 : index
    %c2 = arith.constant 2 : index
    %c0_10 = arith.constant 0 : index
    %7 = vector.load %arg1[%c0_9, %c2, %c0_10] : memref<1x34x128xbf16, #tpu.memory_space<vmem>>, vector<1x32x64xbf16>
    %8 = vector.shape_cast %7 : vector<1x32x64xbf16> to vector<32x64xbf16>
    %c0_11 = arith.constant 0 : index
    %c128 = arith.constant 128 : index
    %9 = vector.load %arg5[%c0_11, %c128] : memref<32x192xbf16, #tpu.memory_space<vmem>>, vector<32x64xbf16>
    tpu.vector_store %arg5[%c0_11, %c128], %8 {strides = array<i32>} : memref<32x192xbf16, #tpu.memory_space<vmem>>, vector<32x64xbf16>,
    %c0_12 = arith.constant 0 : index
    %c0_13 = arith.constant 0 : index
    %10 = vector.load %arg5[%c0_12, %c0_13] : memref<32x192xbf16, #tpu.memory_space<vmem>>, vector<32x192xbf16>
    %c0_14 = arith.constant 0 : index
    %c0_15 = arith.constant 0 : index
    %c0_16 = arith.constant 0 : index
    %11 = vector.load %arg2[%c0_14, %c0_15, %c0_16] : memref<1x192x1xbf16, #tpu.memory_space<vmem>>, vector<1x192x1xbf16>
    %12 = vector.shape_cast %11 : vector<1x192x1xbf16> to vector<192x1xbf16>
    %cst = arith.constant dense<0.000000e+00> : vector<32x1xf32>
    %13 = tpu.matmul %10, %12, %cst {dimension_numbers = #tpu.dot_dimension_numbers<[1], [0], [0], [1], [0, 0, 1, 1], [], []>} : vector<32x192xbf16>, vector<192x1xbf16>, vector<32x1xf32> -> vector<32x1xf32>
    %14 = vector.extract_strided_slice %0 {offsets = [0, 0], sizes = [1, 1], strides = [1, 1]} : vector<1x128xf32> to vector<1x1xf32>
    %15 = vector.broadcast %14 : vector<1x1xf32> to vector<32x1xf32>
    %16 = arith.addf %13, %15 : vector<32x1xf32>
    %c0_17 = arith.constant 0 : index
    %c0_18 = arith.constant 0 : index
    %c0_19 = arith.constant 0 : index
    %17 = vector.load %arg4[%c0_17, %c0_18, %c0_19] : memref<1x32x128xf32, #tpu.memory_space<vmem>>, vector<1x32x1xf32>
    %18 = vector.shape_cast %17 : vector<1x32x1xf32> to vector<32x1xf32>
    %19 = vector.shape_cast %16 : vector<32x1xf32> to vector<1x32x1xf32>
    tpu.vector_store %arg4[%c0_17, %c0_18, %c0_19], %19 {strides = array<i32>} : memref<1x32x128xf32, #tpu.memory_space<vmem>>, vector<1x32x1xf32>,
    %cst_20 = arith.constant 0.000000e+00 : f32
    %20 = vector.broadcast %cst_20 : f32 to vector<32x127xf32>
    %c0_21 = arith.constant 0 : index
    %c0_22 = arith.constant 0 : index
    %c1_23 = arith.constant 1 : index
    %21 = vector.load %arg4[%c0_21, %c0_22, %c1_23] : memref<1x32x128xf32, #tpu.memory_space<vmem>>, vector<1x32x127xf32>
    %22 = vector.shape_cast %21 : vector<1x32x127xf32> to vector<32x127xf32>
    %23 = vector.shape_cast %20 : vector<32x127xf32> to vector<1x32x127xf32>
    tpu.vector_store %arg4[%c0_21, %c0_22, %c1_23], %23 {strides = array<i32>} : memref<1x32x128xf32, #tpu.memory_space<vmem>>, vector<1x32x127xf32>,
    return
  }
  func.func @transform_0(%arg0: i32) -> (i32, i32, i32) {
    %c0_i32 = arith.constant 0 : i32
    %c0_i32_0 = arith.constant 0 : i32
    %c0_i32_1 = arith.constant 0 : i32
    return %arg0, %c0_i32, %c0_i32_0 : i32, i32, i32
  }
  func.func @transform_1(%arg0: i32) -> (i32, i32, i32) {
    %c0_i32 = arith.constant 0 : i32
    %c0_i32_0 = arith.constant 0 : i32
    %c0_i32_1 = arith.constant 0 : i32
    %c0_i32_2 = arith.constant 0 : i32
    return %c0_i32, %c0_i32_0, %c0_i32_1 : i32, i32, i32
  }
  func.func @transform_2(%arg0: i32) -> (i32, i32) {
    %c0_i32 = arith.constant 0 : i32
    %c0_i32_0 = arith.constant 0 : i32
    %c0_i32_1 = arith.constant 0 : i32
    return %c0_i32, %c0_i32_0 : i32, i32
  }
  func.func @transform_3(%arg0: i32) -> (i32, i32, i32) {
    %c0_i32 = arith.constant 0 : i32
    %c0_i32_0 = arith.constant 0 : i32
    %c0_i32_1 = arith.constant 0 : i32
    return %arg0, %c0_i32, %c0_i32_0 : i32, i32, i32
  }
}

</mosaic_0001>

<llo_original>
// kernel: fwd.5
$region0: #{fwd.5}
  #allocation0 [shape = 'u32[]', space=smem, size = 0x4, offset = 0x4, fixed_abs, tag = 'smem constant byte address 0x4 - core index']
  #allocation1 [shape = 'u32[144,128]{1,0:T(1,128)}', space=vmem, size = 0x12000, scoped, tag = 'internal scratch']
  #allocation2 [shape = 'bf16[128,5]{1,0:T(16,128)(2,1)}', space=vmem, size = 0x8000, scoped, tag = 'scratch operand']
  %s0 = inlined_call_operand.vmem [shape: bf16[2,132,1], index: 0, kind: input, shape index: {}]
  %s1 = inlined_call_operand.vmem [shape: bf16[1,5,16], index: 1, kind: input, shape index: {}]
  %s2 = inlined_call_operand.vmem [shape: f32[1,128], index: 2, kind: input, shape index: {}]
  %s3 = inlined_call_operand.vmem [shape: bf16[2,128,128], index: 3, kind: output, shape index: {}]
  %s4 = sld [smem:[#allocation0]]
  $region45: #{fwd.5} parent=0
    _
  %s6 = ssub.s32 1, %s4
  %s7 = scalar_select 0, %s6, %s4
  loop: start=0, step=1, limit=4
  $region2: #{fwd.5} parent=0 // loop_pre_header
    _
  $region3: #{fwd.5} parent=0 // loop_header
    %s9 = sphi 0, %s13
    %p10 = scmp.ge.s32.totalorder %s9, 4
    %s19 = sphi 0, %s21
    %s22 = sphi 0, %s19
    %s23 = sphi 0, %s22
    %s39 = sphi 0, %s23
    %s43 = sphi 0, %s43
    %s45 = sphi 0, %s43
    %s46 = sphi 0, %s45
    %s60 = sphi 0, %s46
    %s64 = sphi 0, %s64
    %s66 = sphi 0, %s64
    %s67 = sphi 0, %s66
    %s81 = sphi 0, %s67
    %s87 = sphi 0, %s89
    %s90 = sphi 0, %s87
    %s91 = sphi 0, %s90
    %s107 = sphi 0, %s91
  $region4: #{fwd.5} parent=0 // loop_header_branch
    %12 = sbr.rel (%p10) target = $region8
  $region5: #{fwd.5} parent=0 // loop_body
    %s14 = ssub.s32 %s9, 1
    %s15 = ssub.s32 %s9, 2
    %s16 = sadd.s32 %s9, 1
    %s17 = ssub.s32 %s9, %s16
    %p18 = scmp.eq.s32.totalorder %s17, 0
    %s20 = sadd.s32 %s19, 1
    %s21 = scalar_select %p18, %s19, %s20
    %p24 = pneg %p18
    %p25 = scmp.eq.s32.totalorder %s9, 1
    %p26 = por %p24, %p25
    %p27 = scmp.ne.s32.totalorder %s19, %s22
    %p28 = scmp.eq.s32.totalorder %s9, 0
    %p29 = por %p27, %p28
    %p30 = scmp.ne.s32.totalorder %s19, %s22
    %p31 = scmp.eq.s32.totalorder %s14, 1
    %p32 = por %p30, %p31
    %p33 = scmp.ne.s32.totalorder %s22, %s23
    %p34 = scmp.eq.s32.totalorder %s14, 0
    %p35 = por %p33, %p34
    %p36 = scmp.ne.s32.totalorder %s22, %s23
    %p37 = scmp.eq.s32.totalorder %s15, 1
    %p38 = por %p36, %p37
    %p40 = scmp.ne.s32.totalorder %s23, %s39
    %p41 = scmp.eq.s32.totalorder %s15, 0
    %p42 = por %p40, %p41
    %s44 = sadd.s32 %s43, 1
    %p47 = scmp.eq.s32.totalorder %s9, 1
    %p48 = scmp.ne.s32.totalorder %s43, %s45
    %p49 = scmp.eq.s32.totalorder %s9, 0
    %p50 = por %p48, %p49
    %p51 = scmp.ne.s32.totalorder %s43, %s45
    %p52 = scmp.eq.s32.totalorder %s14, 1
    %p53 = por %p51, %p52
    %p54 = scmp.ne.s32.totalorder %s45, %s46
    %p55 = scmp.eq.s32.totalorder %s14, 0
    %p56 = por %p54, %p55
    %p57 = scmp.ne.s32.totalorder %s45, %s46
    %p58 = scmp.eq.s32.totalorder %s15, 1
    %p59 = por %p57, %p58
    %p61 = scmp.ne.s32.totalorder %s46, %s60
    %p62 = scmp.eq.s32.totalorder %s15, 0
    %p63 = por %p61, %p62
    %s65 = sadd.s32 %s64, 1
    %p68 = scmp.eq.s32.totalorder %s9, 1
    %p69 = scmp.ne.s32.totalorder %s64, %s66
    %p70 = scmp.eq.s32.totalorder %s9, 0
    %p71 = por %p69, %p70
    %p72 = scmp.ne.s32.totalorder %s64, %s66
    %p73 = scmp.eq.s32.totalorder %s14, 1
    %p74 = por %p72, %p73
    %p75 = scmp.ne.s32.totalorder %s66, %s67
    %p76 = scmp.eq.s32.totalorder %s14, 0
    %p77 = por %p75, %p76
    %p78 = scmp.ne.s32.totalorder %s66, %s67
    %p79 = scmp.eq.s32.totalorder %s15, 1
    %p80 = por %p78, %p79
    %p82 = scmp.ne.s32.totalorder %s67, %s81
    %p83 = scmp.eq.s32.totalorder %s15, 0
    %p84 = por %p82, %p83
    %s85 = ssub.s32 %s9, %s16
    %p86 = scmp.eq.s32.totalorder %s85, 0
    %s88 = sadd.s32 %s87, 1
    %s89 = scalar_select %p86, %s87, %s88
    %p92 = pneg %p86
    %p93 = scmp.eq.s32.totalorder %s9, 1
    %p94 = por %p92, %p93
    %p95 = scmp.ne.s32.totalorder %s87, %s90
    %p96 = scmp.eq.s32.totalorder %s9, 0
    %p97 = por %p95, %p96
    %p98 = scmp.ne.s32.totalorder %s87, %s90
    %p99 = scmp.eq.s32.totalorder %s14, 1
    %p100 = por %p98, %p99
    %p101 = scmp.ne.s32.totalorder %s90, %s91
    %p102 = scmp.eq.s32.totalorder %s14, 0
    %p103 = por %p101, %p102
    %p104 = scmp.ne.s32.totalorder %s90, %s91
    %p105 = scmp.eq.s32.totalorder %s15, 1
    %p106 = por %p104, %p105
    %p108 = scmp.ne.s32.totalorder %s91, %s107
    %p109 = scmp.eq.s32.totalorder %s15, 0
    %p110 = por %p108, %p109
    %p111 = scmp.le.s32.totalorder 1, %s9
    %p112 = scmp.lt.s32.totalorder %s9, 3
    %p113 = pnand %p111, %p112
    %p114 = pneg %p113
    // Predicated region
    $region9: #{fwd.5} parent=5 // pred_check
      _
    $region10: #{fwd.5} parent=5 // pred_check_branch
      %116 = sbr.rel (%p113) target = $region12
    $region11: #{fwd.5} parent=5 // pred_region
      %s117 = ssub.s32 %s9, 1
      // Predicated region
      $region13: #{fwd.5} parent=11 // pred_check
        %p118 = pneg %p56
      $region14: #{fwd.5} parent=11 // pred_check_branch
        %120 = sbr.rel (%p118) target = $region16
      $region15: #{fwd.5} parent=11 // pred_region
        _
      $region16: #{fwd.5} parent=11 // pred_fallthru
        _
      // Predicated region
      $region17: #{fwd.5} parent=11 // pred_check
        %p121 = pneg %p77
      $region18: #{fwd.5} parent=11 // pred_check_branch
        %123 = sbr.rel (%p121) target = $region20
      $region19: #{fwd.5} parent=11 // pred_region
        _
      $region20: #{fwd.5} parent=11 // pred_fallthru
        _
    $region12: #{fwd.5} parent=5 // pred_fallthru
      _
    %p124 = scmp.lt.s32.totalorder %s9, 2
    // Predicated region
    $region21: #{fwd.5} parent=5 // pred_check
      %p125 = pneg %p124
    $region22: #{fwd.5} parent=5 // pred_check_branch
      %127 = sbr.rel (%p125) target = $region24
    $region23: #{fwd.5} parent=5 // pred_region
      // Predicated region
      $region25: #{fwd.5} parent=23 // pred_check
        %p128 = pneg %p29
      $region26: #{fwd.5} parent=23 // pred_check_branch
        %130 = sbr.rel (%p128) target = $region28
      $region27: #{fwd.5} parent=23 // pred_region
        %p131 = scmp.lt.s32.totalorder %s9, 1
        %s132 = scalar_select %p131, %s9, 1
        %s133 = smul.addr %s132, 17
        %s134 = smul.addr %s133, 4
        %s135 = scalar_lea.vmem %s0, %s134
      $region28: #{fwd.5} parent=23 // pred_fallthru
        _
    $region24: #{fwd.5} parent=5 // pred_fallthru
      _
    %p136 = scmp.le.s32.totalorder 1, %s9
    %p137 = scmp.lt.s32.totalorder %s9, 3
    %p138 = pnand %p136, %p137
    %p139 = pneg %p138
    // Predicated region
    $region29: #{fwd.5} parent=5 // pred_check
      _
    $region30: #{fwd.5} parent=5 // pred_check_branch
      %141 = sbr.rel (%p138) target = $region32
    $region31: #{fwd.5} parent=5 // pred_region
      %s142 = ssub.s32 %s9, 1
      %p143 = scmp.lt.s32.totalorder %s14, 1
      %s144 = scalar_select %p143, %s14, 1
      %s145 = smul.addr %s144, 17
      %s146 = smul.addr %s145, 4
      %s147 = scalar_lea.vmem %s0, %s146
      %p148 = pneg %p35
      %p149 = pneg %p32
      %p150 = pneg %p56
      %p151 = pneg %p53
      %p152 = pneg %p77
      %p153 = pneg %p74
      %p154 = pneg %p103
      %p155 = pneg %p100
      %p156 = scmp.lt.s32.totalorder %s14, 1
      %s157 = scalar_select %p156, %s14, 1
      %s158 = smul.addr %s157, 16
      %s159 = smul.addr %s158, 4
      %s160 = scalar_lea.vmem %s3, %s159
      %p161 = scmp.lt.s32.totalorder %s14, 1
      %s162 = scalar_select %p161, %s14, 1
      %s163 = smul.addr %s162, 17
      %s164 = smul.addr %s163, 4
      %s165 = scalar_lea.vmem %s0, %s164
      %p166 = scmp.lt.s32.totalorder %s14, 1
      %s167 = scalar_select %p166, %s14, 1
      %s168 = smul.addr %s167, 16
      %s169 = smul.addr %s168, 4
      %s170 = scalar_lea.vmem %s3, %s169
      %v172 = vld [vmem:[%s2] sm:$0x1]
      %v173 = vld [vmem:[%s1] sm:$0x7]
      %v174 = vunpack.c.l.bf16 %v173
      %v175 = vld [vmem:[%s165] sm:$0xf]
      %v176 = vld [vmem:[%s165 + $0x4] sm:$0xf]
      %v177 = vld [vmem:[%s165 + $0x8] sm:$0xf]
      %v178 = vld [vmem:[%s165 + $0xc] sm:$0xf]
      %v179 = vld [vmem:[%s165 + $0x10] sm:$0xf]
      %v180 = vld [vmem:[%s165 + $0x14] sm:$0xf]
      %v181 = vld [vmem:[%s165 + $0x18] sm:$0xf]
      %v182 = vld [vmem:[%s165 + $0x1c] sm:$0xf]
      %v183 = vld [vmem:[%s165 + $0x20] sm:$0xf]
      %v184 = vld [vmem:[%s165 + $0x24] sm:$0xf]
      %v185 = vld [vmem:[%s165 + $0x28] sm:$0xf]
      %v186 = vld [vmem:[%s165 + $0x2c] sm:$0xf]
      %v187 = vld [vmem:[%s165 + $0x30] sm:$0xf]
      %v188 = vld [vmem:[%s165 + $0x34] sm:$0xf]
      %v189 = vld [vmem:[%s165 + $0x38] sm:$0xf]
      %v190 = vld [vmem:[%s165 + $0x3c] sm:$0xf]
      %v191 = vunpack.c.l.bf16 %v175
      %v192 = vunpack.c.l.bf16 %v176
      %v193 = vunpack.c.l.bf16 %v177
      %v194 = vunpack.c.l.bf16 %v178
      %v195 = vunpack.c.l.bf16 %v179
      %v196 = vunpack.c.l.bf16 %v180
      %v197 = vunpack.c.l.bf16 %v181
      %v198 = vunpack.c.l.bf16 %v182
      %v199 = vunpack.c.l.bf16 %v183
      %v200 = vunpack.c.l.bf16 %v184
      %v201 = vunpack.c.l.bf16 %v185
      %v202 = vunpack.c.l.bf16 %v186
      %v203 = vunpack.c.l.bf16 %v187
      %v204 = vunpack.c.l.bf16 %v188
      %v205 = vunpack.c.l.bf16 %v189
      %v206 = vunpack.c.l.bf16 %v190
      %208 = vset.pattern.permute.xlu0 0
      %209 = vperm.xlu0 %208, %v191
      %v210 = vpop.permute.xlu0 %209
      %213 = vset.pattern.permute.xlu0 0
      %214 = vperm.xlu0 %213, %v192
      %v215 = vpop.permute.xlu0 %214
      %218 = vset.pattern.permute.xlu0 0
      %219 = vperm.xlu0 %218, %v193
      %v220 = vpop.permute.xlu0 %219
      %223 = vset.pattern.permute.xlu0 0
      %224 = vperm.xlu0 %223, %v194
      %v225 = vpop.permute.xlu0 %224
      %228 = vset.pattern.permute.xlu0 0
      %229 = vperm.xlu0 %228, %v195
      %v230 = vpop.permute.xlu0 %229
      %233 = vset.pattern.permute.xlu0 0
      %234 = vperm.xlu0 %233, %v196
      %v235 = vpop.permute.xlu0 %234
      %238 = vset.pattern.permute.xlu0 0
      %239 = vperm.xlu0 %238, %v197
      %v240 = vpop.permute.xlu0 %239
      %243 = vset.pattern.permute.xlu0 0
      %244 = vperm.xlu0 %243, %v198
      %v245 = vpop.permute.xlu0 %244
      %248 = vset.pattern.permute.xlu0 0
      %249 = vperm.xlu0 %248, %v199
      %v250 = vpop.permute.xlu0 %249
      %253 = vset.pattern.permute.xlu0 0
      %254 = vperm.xlu0 %253, %v200
      %v255 = vpop.permute.xlu0 %254
      %258 = vset.pattern.permute.xlu0 0
      %259 = vperm.xlu0 %258, %v201
      %v260 = vpop.permute.xlu0 %259
      %263 = vset.pattern.permute.xlu0 0
      %264 = vperm.xlu0 %263, %v202
      %v265 = vpop.permute.xlu0 %264
      %268 = vset.pattern.permute.xlu0 0
      %269 = vperm.xlu0 %268, %v203
      %v270 = vpop.permute.xlu0 %269
      %273 = vset.pattern.permute.xlu0 0
      %274 = vperm.xlu0 %273, %v204
      %v275 = vpop.permute.xlu0 %274
      %278 = vset.pattern.permute.xlu0 0
      %279 = vperm.xlu0 %278, %v205
      %v280 = vpop.permute.xlu0 %279
      %283 = vset.pattern.permute.xlu0 0
      %284 = vperm.xlu0 %283, %v206
      %v285 = vpop.permute.xlu0 %284
      %v287 = vlaneseq
      %v288 = vshrl.u32 %v287, 7
      %v289 = vsub.s32 0, %v288
      %v290 = vrot.slane %v174, %v289
      %v291 = vmul.f32 %v210, %v290
      %v292 = vmul.f32 %v215, %v290
      %v293 = vmul.f32 %v220, %v290
      %v294 = vmul.f32 %v225, %v290
      %v295 = vmul.f32 %v230, %v290
      %v296 = vmul.f32 %v235, %v290
      %v297 = vmul.f32 %v240, %v290
      %v298 = vmul.f32 %v245, %v290
      %v299 = vmul.f32 %v250, %v290
      %v300 = vmul.f32 %v255, %v290
      %v301 = vmul.f32 %v260, %v290
      %v302 = vmul.f32 %v265, %v290
      %v303 = vmul.f32 %v270, %v290
      %v304 = vmul.f32 %v275, %v290
      %v305 = vmul.f32 %v280, %v290
      %v306 = vmul.f32 %v285, %v290
      %v307 = vadd.f32 %v291, 0.0
      %v308 = vadd.f32 %v292, 0.0
      %v309 = vadd.f32 %v293, 0.0
      %v310 = vadd.f32 %v294, 0.0
      %v311 = vadd.f32 %v295, 0.0
      %v312 = vadd.f32 %v296, 0.0
      %v313 = vadd.f32 %v297, 0.0
      %v314 = vadd.f32 %v298, 0.0
      %v315 = vadd.f32 %v299, 0.0
      %v316 = vadd.f32 %v300, 0.0
      %v317 = vadd.f32 %v301, 0.0
      %v318 = vadd.f32 %v302, 0.0
      %v319 = vadd.f32 %v303, 0.0
      %v320 = vadd.f32 %v304, 0.0
      %v321 = vadd.f32 %v305, 0.0
      %v322 = vadd.f32 %v306, 0.0
      %v323 = vld [vmem:[%s165] sm:$0xf]
      %v324 = vld [vmem:[%s165 + $0x4] sm:$0xf]
      %v325 = vld [vmem:[%s165 + $0x8] sm:$0xf]
      %v326 = vld [vmem:[%s165 + $0xc] sm:$0xf]
      %v327 = vld [vmem:[%s165 + $0x10] sm:$0xf]
      %v328 = vld [vmem:[%s165 + $0x14] sm:$0xf]
      %v329 = vld [vmem:[%s165 + $0x18] sm:$0xf]
      %v330 = vld [vmem:[%s165 + $0x1c] sm:$0xf]
      %v331 = vld [vmem:[%s165 + $0x20] sm:$0xf]
      %v332 = vld [vmem:[%s165 + $0x24] sm:$0xf]
      %v333 = vld [vmem:[%s165 + $0x28] sm:$0xf]
      %v334 = vld [vmem:[%s165 + $0x2c] sm:$0xf]
      %v335 = vld [vmem:[%s165 + $0x30] sm:$0xf]
      %v336 = vld [vmem:[%s165 + $0x34] sm:$0xf]
      %v337 = vld [vmem:[%s165 + $0x38] sm:$0xf]
      %v338 = vld [vmem:[%s165 + $0x3c] sm:$0xf]
      %v339 = vld [vmem:[%s165 + $0x40] sm:$0x1]
      %v340 = vunpack.c.l.bf16 %v323
      %v341 = vunpack.c.l.bf16 %v324
      %v342 = vunpack.c.l.bf16 %v325
      %v343 = vunpack.c.l.bf16 %v326
      %v344 = vunpack.c.l.bf16 %v327
      %v345 = vunpack.c.l.bf16 %v328
      %v346 = vunpack.c.l.bf16 %v329
      %v347 = vunpack.c.l.bf16 %v330
      %v348 = vunpack.c.l.bf16 %v331
      %v349 = vunpack.c.l.bf16 %v332
      %v350 = vunpack.c.l.bf16 %v333
      %v351 = vunpack.c.l.bf16 %v334
      %v352 = vunpack.c.l.bf16 %v335
      %v353 = vunpack.c.l.bf16 %v336
      %v354 = vunpack.c.l.bf16 %v337
      %v355 = vunpack.c.l.bf16 %v338
      %v356 = vunpack.c.l.bf16 %v339
      %358 = vset.pattern.permute.xlu0 0
      %359 = vperm.xlu0 %358, %v340
      %v360 = vpop.permute.xlu0 %359
      %363 = vset.pattern.permute.xlu0 0
      %364 = vperm.xlu0 %363, %v341
      %v365 = vpop.permute.xlu0 %364
      %368 = vset.pattern.permute.xlu0 0
      %369 = vperm.xlu0 %368, %v342
      %v370 = vpop.permute.xlu0 %369
      %373 = vset.pattern.permute.xlu0 0
      %374 = vperm.xlu0 %373, %v343
      %v375 = vpop.permute.xlu0 %374
      %378 = vset.pattern.permute.xlu0 0
      %379 = vperm.xlu0 %378, %v344
      %v380 = vpop.permute.xlu0 %379
      %383 = vset.pattern.permute.xlu0 0
      %384 = vperm.xlu0 %383, %v345
      %v385 = vpop.permute.xlu0 %384
      %388 = vset.pattern.permute.xlu0 0
      %389 = vperm.xlu0 %388, %v346
      %v390 = vpop.permute.xlu0 %389
      %393 = vset.pattern.permute.xlu0 0
      %394 = vperm.xlu0 %393, %v347
      %v395 = vpop.permute.xlu0 %394
      %398 = vset.pattern.permute.xlu0 0
      %399 = vperm.xlu0 %398, %v348
      %v400 = vpop.permute.xlu0 %399
      %403 = vset.pattern.permute.xlu0 0
      %404 = vperm.xlu0 %403, %v349
      %v405 = vpop.permute.xlu0 %404
      %408 = vset.pattern.permute.xlu0 0
      %409 = vperm.xlu0 %408, %v350
      %v410 = vpop.permute.xlu0 %409
      %413 = vset.pattern.permute.xlu0 0
      %414 = vperm.xlu0 %413, %v351
      %v415 = vpop.permute.xlu0 %414
      %418 = vset.pattern.permute.xlu0 0
      %419 = vperm.xlu0 %418, %v352
      %v420 = vpop.permute.xlu0 %419
      %423 = vset.pattern.permute.xlu0 0
      %424 = vperm.xlu0 %423, %v353
      %v425 = vpop.permute.xlu0 %424
      %428 = vset.pattern.permute.xlu0 0
      %429 = vperm.xlu0 %428, %v354
      %v430 = vpop.permute.xlu0 %429
      %433 = vset.pattern.permute.xlu0 0
      %434 = vperm.xlu0 %433, %v355
      %v435 = vpop.permute.xlu0 %434
      %438 = vset.pattern.permute.xlu0 0
      %439 = vperm.xlu0 %438, %v356
      %v440 = vpop.permute.xlu0 %439
      %v442 = vlaneseq
      %v443 = vshrl.u32 %v442, 7
      %v444 = vsub.s32 1, %v443
      %v445 = vrot.slane %v174, %v444
      %v446 = vmul.f32 %v360, %v445
      %v447 = vmul.f32 %v365, %v445
      %v448 = vmul.f32 %v370, %v445
      %v449 = vmul.f32 %v375, %v445
      %v450 = vmul.f32 %v380, %v445
      %v451 = vmul.f32 %v385, %v445
      %v452 = vmul.f32 %v390, %v445
      %v453 = vmul.f32 %v395, %v445
      %v454 = vmul.f32 %v400, %v445
      %v455 = vmul.f32 %v405, %v445
      %v456 = vmul.f32 %v410, %v445
      %v457 = vmul.f32 %v415, %v445
      %v458 = vmul.f32 %v420, %v445
      %v459 = vmul.f32 %v425, %v445
      %v460 = vmul.f32 %v430, %v445
      %v461 = vmul.f32 %v435, %v445
      %v462 = vmul.f32 %v440, %v445
      %vm480 = vcmask 1046528
      %v481 = vrot.slane %v446, 1
      %v482 = vrot.slane %v447, 1
      %v483 = vsel %vm480, %v481, %v482
      %v484 = vrot.slane %v448, 1
      %v485 = vsel %vm480, %v482, %v484
      %v486 = vrot.slane %v449, 1
      %v487 = vsel %vm480, %v484, %v486
      %v488 = vrot.slane %v450, 1
      %v489 = vsel %vm480, %v486, %v488
      %v490 = vrot.slane %v451, 1
      %v491 = vsel %vm480, %v488, %v490
      %v492 = vrot.slane %v452, 1
      %v493 = vsel %vm480, %v490, %v492
      %v494 = vrot.slane %v453, 1
      %v495 = vsel %vm480, %v492, %v494
      %v496 = vrot.slane %v454, 1
      %v497 = vsel %vm480, %v494, %v496
      %v498 = vrot.slane %v455, 1
      %v499 = vsel %vm480, %v496, %v498
      %v500 = vrot.slane %v456, 1
      %v501 = vsel %vm480, %v498, %v500
      %v502 = vrot.slane %v457, 1
      %v503 = vsel %vm480, %v500, %v502
      %v504 = vrot.slane %v458, 1
      %v505 = vsel %vm480, %v502, %v504
      %v506 = vrot.slane %v459, 1
      %v507 = vsel %vm480, %v504, %v506
      %v508 = vrot.slane %v460, 1
      %v509 = vsel %vm480, %v506, %v508
      %v510 = vrot.slane %v461, 1
      %v511 = vsel %vm480, %v508, %v510
      %v512 = vrot.slane %v462, 1
      %v513 = vsel %vm480, %v510, %v512
      %v530 = vadd.f32 %v307, %v483
      %v531 = vadd.f32 %v308, %v485
      %v532 = vadd.f32 %v309, %v487
      %v533 = vadd.f32 %v310, %v489
      %v534 = vadd.f32 %v311, %v491
      %v535 = vadd.f32 %v312, %v493
      %v536 = vadd.f32 %v313, %v495
      %v537 = vadd.f32 %v314, %v497
      %v538 = vadd.f32 %v315, %v499
      %v539 = vadd.f32 %v316, %v501
      %v540 = vadd.f32 %v317, %v503
      %v541 = vadd.f32 %v318, %v505
      %v542 = vadd.f32 %v319, %v507
      %v543 = vadd.f32 %v320, %v509
      %v544 = vadd.f32 %v321, %v511
      %v545 = vadd.f32 %v322, %v513
      %v546 = vld [vmem:[%s165] sm:$0xe]
      %v547 = vunpack.c.l.bf16 %v546
      %549 = vset.pattern.permute.xlu0 0
      %550 = vperm.xlu0 %549, %v547
      %v551 = vpop.permute.xlu0 %550
      %v553 = vlaneseq
      %v554 = vshrl.u32 %v553, 7
      %v555 = vsub.s32 2, %v554
      %v556 = vrot.slane %v174, %v555
      %v557 = vmul.f32 %v551, %v556
      %v558 = vmul.f32 %v365, %v556
      %v559 = vmul.f32 %v370, %v556
      %v560 = vmul.f32 %v375, %v556
      %v561 = vmul.f32 %v380, %v556
      %v562 = vmul.f32 %v385, %v556
      %v563 = vmul.f32 %v390, %v556
      %v564 = vmul.f32 %v395, %v556
      %v565 = vmul.f32 %v400, %v556
      %v566 = vmul.f32 %v405, %v556
      %v567 = vmul.f32 %v410, %v556
      %v568 = vmul.f32 %v415, %v556
      %v569 = vmul.f32 %v420, %v556
      %v570 = vmul.f32 %v425, %v556
      %v571 = vmul.f32 %v430, %v556
      %v572 = vmul.f32 %v435, %v556
      %v573 = vmul.f32 %v440, %v556
      %vm591 = vcmask 1045504
      %v592 = vrot.slane %v557, 2
      %v593 = vrot.slane %v558, 2
      %v594 = vsel %vm591, %v592, %v593
      %v595 = vrot.slane %v559, 2
      %v596 = vsel %vm591, %v593, %v595
      %v597 = vrot.slane %v560, 2
      %v598 = vsel %vm591, %v595, %v597
      %v599 = vrot.slane %v561, 2
      %v600 = vsel %vm591, %v597, %v599
      %v601 = vrot.slane %v562, 2
      %v602 = vsel %vm591, %v599, %v601
      %v603 = vrot.slane %v563, 2
      %v604 = vsel %vm591, %v601, %v603
      %v605 = vrot.slane %v564, 2
      %v606 = vsel %vm591, %v603, %v605
      %v607 = vrot.slane %v565, 2
      %v608 = vsel %vm591, %v605, %v607
      %v609 = vrot.slane %v566, 2
      %v610 = vsel %vm591, %v607, %v609
      %v611 = vrot.slane %v567, 2
      %v612 = vsel %vm591, %v609, %v611
      %v613 = vrot.slane %v568, 2
      %v614 = vsel %vm591, %v611, %v613
      %v615 = vrot.slane %v569, 2
      %v616 = vsel %vm591, %v613, %v615
      %v617 = vrot.slane %v570, 2
      %v618 = vsel %vm591, %v615, %v617
      %v619 = vrot.slane %v571, 2
      %v620 = vsel %vm591, %v617, %v619
      %v621 = vrot.slane %v572, 2
      %v622 = vsel %vm591, %v619, %v621
      %v623 = vrot.slane %v573, 2
      %v624 = vsel %vm591, %v621, %v623
      %v641 = vadd.f32 %v530, %v594
      %v642 = vadd.f32 %v531, %v596
      %v643 = vadd.f32 %v532, %v598
      %v644 = vadd.f32 %v533, %v600
      %v645 = vadd.f32 %v534, %v602
      %v646 = vadd.f32 %v535, %v604
      %v647 = vadd.f32 %v536, %v606
      %v648 = vadd.f32 %v537, %v608
      %v649 = vadd.f32 %v538, %v610
      %v650 = vadd.f32 %v539, %v612
      %v651 = vadd.f32 %v540, %v614
      %v652 = vadd.f32 %v541, %v616
      %v653 = vadd.f32 %v542, %v618
      %v654 = vadd.f32 %v543, %v620
      %v655 = vadd.f32 %v544, %v622
      %v656 = vadd.f32 %v545, %v624
      %v657 = vld [vmem:[%s165 + $0x40] sm:$0x3]
      %v658 = vunpack.c.l.bf16 %v657
      %660 = vset.pattern.permute.xlu0 0
      %661 = vperm.xlu0 %660, %v658
      %v662 = vpop.permute.xlu0 %661
      %v664 = vlaneseq
      %v665 = vshrl.u32 %v664, 7
      %v666 = vsub.s32 3, %v665
      %v667 = vrot.slane %v174, %v666
      %v668 = vmul.f32 %v551, %v667
      %v669 = vmul.f32 %v365, %v667
      %v670 = vmul.f32 %v370, %v667
      %v671 = vmul.f32 %v375, %v667
      %v672 = vmul.f32 %v380, %v667
      %v673 = vmul.f32 %v385, %v667
      %v674 = vmul.f32 %v390, %v667
      %v675 = vmul.f32 %v395, %v667
      %v676 = vmul.f32 %v400, %v667
      %v677 = vmul.f32 %v405, %v667
      %v678 = vmul.f32 %v410, %v667
      %v679 = vmul.f32 %v415, %v667
      %v680 = vmul.f32 %v420, %v667
      %v681 = vmul.f32 %v425, %v667
      %v682 = vmul.f32 %v430, %v667
      %v683 = vmul.f32 %v435, %v667
      %v684 = vmul.f32 %v662, %v667
      %vm702 = vcmask 1044480
      %v703 = vrot.slane %v668, 3
      %v704 = vrot.slane %v669, 3
      %v705 = vsel %vm702, %v703, %v704
      %v706 = vrot.slane %v670, 3
      %v707 = vsel %vm702, %v704, %v706
      %v708 = vrot.slane %v671, 3
      %v709 = vsel %vm702, %v706, %v708
      %v710 = vrot.slane %v672, 3
      %v711 = vsel %vm702, %v708, %v710
      %v712 = vrot.slane %v673, 3
      %v713 = vsel %vm702, %v710, %v712
      %v714 = vrot.slane %v674, 3
      %v715 = vsel %vm702, %v712, %v714
      %v716 = vrot.slane %v675, 3
      %v717 = vsel %vm702, %v714, %v716
      %v718 = vrot.slane %v676, 3
      %v719 = vsel %vm702, %v716, %v718
      %v720 = vrot.slane %v677, 3
      %v721 = vsel %vm702, %v718, %v720
      %v722 = vrot.slane %v678, 3
      %v723 = vsel %vm702, %v720, %v722
      %v724 = vrot.slane %v679, 3
      %v725 = vsel %vm702, %v722, %v724
      %v726 = vrot.slane %v680, 3
      %v727 = vsel %vm702, %v724, %v726
      %v728 = vrot.slane %v681, 3
      %v729 = vsel %vm702, %v726, %v728
      %v730 = vrot.slane %v682, 3
      %v731 = vsel %vm702, %v728, %v730
      %v732 = vrot.slane %v683, 3
      %v733 = vsel %vm702, %v730, %v732
      %v734 = vrot.slane %v684, 3
      %v735 = vsel %vm702, %v732, %v734
      %v752 = vadd.f32 %v641, %v705
      %v753 = vadd.f32 %v642, %v707
      %v754 = vadd.f32 %v643, %v709
      %v755 = vadd.f32 %v644, %v711
      %v756 = vadd.f32 %v645, %v713
      %v757 = vadd.f32 %v646, %v715
      %v758 = vadd.f32 %v647, %v717
      %v759 = vadd.f32 %v648, %v719
      %v760 = vadd.f32 %v649, %v721
      %v761 = vadd.f32 %v650, %v723
      %v762 = vadd.f32 %v651, %v725
      %v763 = vadd.f32 %v652, %v727
      %v764 = vadd.f32 %v653, %v729
      %v765 = vadd.f32 %v654, %v731
      %v766 = vadd.f32 %v655, %v733
      %v767 = vadd.f32 %v656, %v735
      %v768 = vld [vmem:[%s165] sm:$0xc]
      %v769 = vunpack.c.l.bf16 %v768
      %771 = vset.pattern.permute.xlu0 0
      %772 = vperm.xlu0 %771, %v769
      %v773 = vpop.permute.xlu0 %772
      %v775 = vlaneseq
      %v776 = vshrl.u32 %v775, 7
      %v777 = vsub.s32 4, %v776
      %v778 = vrot.slane %v174, %v777
      %v779 = vmul.f32 %v773, %v778
      %v780 = vmul.f32 %v365, %v778
      %v781 = vmul.f32 %v370, %v778
      %v782 = vmul.f32 %v375, %v778
      %v783 = vmul.f32 %v380, %v778
      %v784 = vmul.f32 %v385, %v778
      %v785 = vmul.f32 %v390, %v778
      %v786 = vmul.f32 %v395, %v778
      %v787 = vmul.f32 %v400, %v778
      %v788 = vmul.f32 %v405, %v778
      %v789 = vmul.f32 %v410, %v778
      %v790 = vmul.f32 %v415, %v778
      %v791 = vmul.f32 %v420, %v778
      %v792 = vmul.f32 %v425, %v778
      %v793 = vmul.f32 %v430, %v778
      %v794 = vmul.f32 %v435, %v778
      %v795 = vmul.f32 %v662, %v778
      %vm813 = vcmask 1043456
      %v814 = vrot.slane %v779, 4
      %v815 = vrot.slane %v780, 4
      %v816 = vsel %vm813, %v814, %v815
      %v817 = vrot.slane %v781, 4
      %v818 = vsel %vm813, %v815, %v817
      %v819 = vrot.slane %v782, 4
      %v820 = vsel %vm813, %v817, %v819
      %v821 = vrot.slane %v783, 4
      %v822 = vsel %vm813, %v819, %v821
      %v823 = vrot.slane %v784, 4
      %v824 = vsel %vm813, %v821, %v823
      %v825 = vrot.slane %v785, 4
      %v826 = vsel %vm813, %v823, %v825
      %v827 = vrot.slane %v786, 4
      %v828 = vsel %vm813, %v825, %v827
      %v829 = vrot.slane %v787, 4
      %v830 = vsel %vm813, %v827, %v829
      %v831 = vrot.slane %v788, 4
      %v832 = vsel %vm813, %v829, %v831
      %v833 = vrot.slane %v789, 4
      %v834 = vsel %vm813, %v831, %v833
      %v835 = vrot.slane %v790, 4
      %v836 = vsel %vm813, %v833, %v835
      %v837 = vrot.slane %v791, 4
      %v838 = vsel %vm813, %v835, %v837
      %v839 = vrot.slane %v792, 4
      %v840 = vsel %vm813, %v837, %v839
      %v841 = vrot.slane %v793, 4
      %v842 = vsel %vm813, %v839, %v841
      %v843 = vrot.slane %v794, 4
      %v844 = vsel %vm813, %v841, %v843
      %v845 = vrot.slane %v795, 4
      %v846 = vsel %vm813, %v843, %v845
      %v863 = vadd.f32 %v752, %v816
      %v864 = vadd.f32 %v753, %v818
      %v865 = vadd.f32 %v754, %v820
      %v866 = vadd.f32 %v755, %v822
      %v867 = vadd.f32 %v756, %v824
      %v868 = vadd.f32 %v757, %v826
      %v869 = vadd.f32 %v758, %v828
      %v870 = vadd.f32 %v759, %v830
      %v871 = vadd.f32 %v760, %v832
      %v872 = vadd.f32 %v761, %v834
      %v873 = vadd.f32 %v762, %v836
      %v874 = vadd.f32 %v763, %v838
      %v875 = vadd.f32 %v764, %v840
      %v876 = vadd.f32 %v765, %v842
      %v877 = vadd.f32 %v766, %v844
      %v878 = vadd.f32 %v767, %v846
      %v880 = vlaneseq
      %v881 = vshrl.u32 %v880, 7
      %v882 = vsub.s32 0, %v881
      %v883 = vrot.slane %v172, %v882
      %v885 = vadd.f32 %v863, %v883
      %v886 = vadd.f32 %v864, %v883
      %v887 = vadd.f32 %v865, %v883
      %v888 = vadd.f32 %v866, %v883
      %v889 = vadd.f32 %v867, %v883
      %v890 = vadd.f32 %v868, %v883
      %v891 = vadd.f32 %v869, %v883
      %v892 = vadd.f32 %v870, %v883
      %v893 = vadd.f32 %v871, %v883
      %v894 = vadd.f32 %v872, %v883
      %v895 = vadd.f32 %v873, %v883
      %v896 = vadd.f32 %v874, %v883
      %v897 = vadd.f32 %v875, %v883
      %v898 = vadd.f32 %v876, %v883
      %v899 = vadd.f32 %v877, %v883
      %v900 = vadd.f32 %v878, %v883
      %v901 = vpack.c.bf16 %v886, %v885
      %v902 = vpack.c.bf16 %v888, %v887
      %v903 = vpack.c.bf16 %v890, %v889
      %v904 = vpack.c.bf16 %v892, %v891
      %v905 = vpack.c.bf16 %v894, %v893
      %v906 = vpack.c.bf16 %v896, %v895
      %v907 = vpack.c.bf16 %v898, %v897
      %v908 = vpack.c.bf16 %v900, %v899
      %v917 = vunpack.c.l.b16 %v901
      %v918 = vunpack.c.h.b16 %v901
      %v919 = vunpack.c.l.b16 %v902
      %v920 = vunpack.c.h.b16 %v902
      %v921 = vunpack.c.l.b16 %v903
      %v922 = vunpack.c.h.b16 %v903
      %v923 = vunpack.c.l.b16 %v904
      %v924 = vunpack.c.h.b16 %v904
      %v925 = vunpack.c.l.b16 %v905
      %v926 = vunpack.c.h.b16 %v905
      %v927 = vunpack.c.l.b16 %v906
      %v928 = vunpack.c.h.b16 %v906
      %v929 = vunpack.c.l.b16 %v907
      %v930 = vunpack.c.h.b16 %v907
      %v931 = vunpack.c.l.b16 %v908
      %v932 = vunpack.c.h.b16 %v908
      %v933 = vpack.c.b16 %v917, %v917
      %v934 = vpack.c.b16 %v918, %v918
      %v935 = vpack.c.b16 %v919, %v919
      %v936 = vpack.c.b16 %v920, %v920
      %v937 = vpack.c.b16 %v921, %v921
      %v938 = vpack.c.b16 %v922, %v922
      %v939 = vpack.c.b16 %v923, %v923
      %v940 = vpack.c.b16 %v924, %v924
      %v941 = vpack.c.b16 %v925, %v925
      %v942 = vpack.c.b16 %v926, %v926
      %v943 = vpack.c.b16 %v927, %v927
      %v944 = vpack.c.b16 %v928, %v928
      %v945 = vpack.c.b16 %v929, %v929
      %v946 = vpack.c.b16 %v930, %v930
      %v947 = vpack.c.b16 %v931, %v931
      %v948 = vpack.c.b16 %v932, %v932
      %vm965 = vcmask 125952
      %966 = vst.msk [vmem:[%s170] sm:$0xf] %vm965, %v933
      %967 = vst.msk [vmem:[%s170 + $0x4] sm:$0xf] %vm965, %v934
      %968 = vst.msk [vmem:[%s170 + $0x8] sm:$0xf] %vm965, %v935
      %969 = vst.msk [vmem:[%s170 + $0xc] sm:$0xf] %vm965, %v936
      %970 = vst.msk [vmem:[%s170 + $0x10] sm:$0xf] %vm965, %v937
      %971 = vst.msk [vmem:[%s170 + $0x14] sm:$0xf] %vm965, %v938
      %972 = vst.msk [vmem:[%s170 + $0x18] sm:$0xf] %vm965, %v939
      %973 = vst.msk [vmem:[%s170 + $0x1c] sm:$0xf] %vm965, %v940
      %974 = vst.msk [vmem:[%s170 + $0x20] sm:$0xf] %vm965, %v941
      %975 = vst.msk [vmem:[%s170 + $0x24] sm:$0xf] %vm965, %v942
      %976 = vst.msk [vmem:[%s170 + $0x28] sm:$0xf] %vm965, %v943
      %977 = vst.msk [vmem:[%s170 + $0x2c] sm:$0xf] %vm965, %v944
      %978 = vst.msk [vmem:[%s170 + $0x30] sm:$0xf] %vm965, %v945
      %979 = vst.msk [vmem:[%s170 + $0x34] sm:$0xf] %vm965, %v946
      %980 = vst.msk [vmem:[%s170 + $0x38] sm:$0xf] %vm965, %v947
      %981 = vst.msk [vmem:[%s170 + $0x3c] sm:$0xf] %vm965, %v948
      %vm982 = vcmask 1043584
      %983 = vst.msk [vmem:[%s170] sm:$0xf] %vm982, 0
      %984 = vst.msk [vmem:[%s170 + $0x4] sm:$0xf] %vm982, 0
      %985 = vst.msk [vmem:[%s170 + $0x8] sm:$0xf] %vm982, 0
      %986 = vst.msk [vmem:[%s170 + $0xc] sm:$0xf] %vm982, 0
      %987 = vst.msk [vmem:[%s170 + $0x10] sm:$0xf] %vm982, 0
      %988 = vst.msk [vmem:[%s170 + $0x14] sm:$0xf] %vm982, 0
      %989 = vst.msk [vmem:[%s170 + $0x18] sm:$0xf] %vm982, 0
      %990 = vst.msk [vmem:[%s170 + $0x1c] sm:$0xf] %vm982, 0
      %991 = vst.msk [vmem:[%s170 + $0x20] sm:$0xf] %vm982, 0
      %992 = vst.msk [vmem:[%s170 + $0x24] sm:$0xf] %vm982, 0
      %993 = vst.msk [vmem:[%s170 + $0x28] sm:$0xf] %vm982, 0
      %994 = vst.msk [vmem:[%s170 + $0x2c] sm:$0xf] %vm982, 0
      %995 = vst.msk [vmem:[%s170 + $0x30] sm:$0xf] %vm982, 0
      %996 = vst.msk [vmem:[%s170 + $0x34] sm:$0xf] %vm982, 0
      %997 = vst.msk [vmem:[%s170 + $0x38] sm:$0xf] %vm982, 0
      %998 = vst.msk [vmem:[%s170 + $0x3c] sm:$0xf] %vm982, 0
      %p999 = scmp.lt.s32.totalorder %s14, 1
      %s1000 = scalar_select %p999, %s14, 1
      %s1001 = smul.addr %s1000, 16
      %s1002 = smul.addr %s1001, 4
      %s1003 = scalar_lea.vmem %s3, %s1002
      // Predicated region
      $region33: #{fwd.5} parent=31 // pred_check
        %p1004 = pneg %p100
      $region34: #{fwd.5} parent=31 // pred_check_branch
        %1006 = sbr.rel (%p1004) target = $region36
      $region35: #{fwd.5} parent=31 // pred_region
        _
      $region36: #{fwd.5} parent=31 // pred_fallthru
        _
    $region32: #{fwd.5} parent=5 // pred_fallthru
      _
    %p1007 = scmp.le.s32.totalorder 2, %s9
    // Predicated region
    $region37: #{fwd.5} parent=5 // pred_check
      %p1008 = pneg %p1007
    $region38: #{fwd.5} parent=5 // pred_check_branch
      %1010 = sbr.rel (%p1008) target = $region40
    $region39: #{fwd.5} parent=5 // pred_region
      %s1011 = ssub.s32 %s9, 2
      // Predicated region
      $region41: #{fwd.5} parent=39 // pred_check
        %p1012 = pneg %p106
      $region42: #{fwd.5} parent=39 // pred_check_branch
        %1014 = sbr.rel (%p1012) target = $region44
      $region43: #{fwd.5} parent=39 // pred_region
        %p1015 = scmp.lt.s32.totalorder %s15, 1
        %s1016 = scalar_select %p1015, %s15, 1
        %s1017 = smul.addr %s1016, 16
        %s1018 = smul.addr %s1017, 4
        %s1019 = scalar_lea.vmem %s3, %s1018
      $region44: #{fwd.5} parent=39 // pred_fallthru
        _
    $region40: #{fwd.5} parent=5 // pred_fallthru
      _
  $region6: #{fwd.5} parent=0 // loop_footer
    %s13 = sadd.s32 1, %s9
  $region7: #{fwd.5} parent=0 // loop_footer_branch
    %8 = sbr.rel target = $region3
  $region8: #{fwd.5} parent=0 // loop_exit
    _

// kernel: fwd.6
$region0: #{fwd.6}
  #allocation0 [shape = 'u32[]', space=smem, size = 0x4, offset = 0x4, fixed_abs, tag = 'smem constant byte address 0x4 - core index']
  #allocation1 [shape = 'u32[144,128]{1,0:T(1,128)}', space=vmem, size = 0x12000, scoped, tag = 'internal scratch']
  #allocation2 [shape = 'bf16[64,64]{1,0:T(16,128)(2,1)}', space=vmem, size = 0x4000, scoped, tag = 'scratch operand']
  %s0 = inlined_call_operand.vmem [shape: bf16[2,67,256], index: 0, kind: input, shape index: {}]
  %s1 = inlined_call_operand.vmem [shape: bf16[2,64,16], index: 1, kind: input, shape index: {}]
  %s2 = inlined_call_operand.vmem [shape: f32[1,128], index: 2, kind: input, shape index: {}]
  %s3 = inlined_call_operand.vmem [shape: bf16[2,64,128], index: 3, kind: output, shape index: {}]
  %s4 = sld [smem:[#allocation0]]
  $region45: #{fwd.6} parent=0
    _
  %s6 = ssub.s32 1, %s4
  %s7 = scalar_select 0, %s6, %s4
  loop: start=0, step=1, limit=4
  $region2: #{fwd.6} parent=0 // loop_pre_header
    _
  $region3: #{fwd.6} parent=0 // loop_header
    %s9 = sphi 0, %s13
    %p10 = scmp.ge.s32.totalorder %s9, 4
    %s19 = sphi 0, %s21
    %s22 = sphi 0, %s19
    %s23 = sphi 0, %s22
    %s39 = sphi 0, %s23
    %s43 = sphi 0, %s43
    %s45 = sphi 0, %s43
    %s46 = sphi 0, %s45
    %s60 = sphi 0, %s46
    %s64 = sphi 0, %s64
    %s66 = sphi 0, %s64
    %s67 = sphi 0, %s66
    %s81 = sphi 0, %s67
    %s87 = sphi 0, %s89
    %s90 = sphi 0, %s87
    %s91 = sphi 0, %s90
    %s107 = sphi 0, %s91
  $region4: #{fwd.6} parent=0 // loop_header_branch
    %12 = sbr.rel (%p10) target = $region8
  $region5: #{fwd.6} parent=0 // loop_body
    %s14 = ssub.s32 %s9, 1
    %s15 = ssub.s32 %s9, 2
    %s16 = sadd.s32 %s9, 1
    %s17 = ssub.s32 %s9, %s16
    %p18 = scmp.eq.s32.totalorder %s17, 0
    %s20 = sadd.s32 %s19, 1
    %s21 = scalar_select %p18, %s19, %s20
    %p24 = pneg %p18
    %p25 = scmp.eq.s32.totalorder %s9, 1
    %p26 = por %p24, %p25
    %p27 = scmp.ne.s32.totalorder %s19, %s22
    %p28 = scmp.eq.s32.totalorder %s9, 0
    %p29 = por %p27, %p28
    %p30 = scmp.ne.s32.totalorder %s19, %s22
    %p31 = scmp.eq.s32.totalorder %s14, 1
    %p32 = por %p30, %p31
    %p33 = scmp.ne.s32.totalorder %s22, %s23
    %p34 = scmp.eq.s32.totalorder %s14, 0
    %p35 = por %p33, %p34
    %p36 = scmp.ne.s32.totalorder %s22, %s23
    %p37 = scmp.eq.s32.totalorder %s15, 1
    %p38 = por %p36, %p37
    %p40 = scmp.ne.s32.totalorder %s23, %s39
    %p41 = scmp.eq.s32.totalorder %s15, 0
    %p42 = por %p40, %p41
    %s44 = sadd.s32 %s43, 1
    %p47 = scmp.eq.s32.totalorder %s9, 1
    %p48 = scmp.ne.s32.totalorder %s43, %s45
    %p49 = scmp.eq.s32.totalorder %s9, 0
    %p50 = por %p48, %p49
    %p51 = scmp.ne.s32.totalorder %s43, %s45
    %p52 = scmp.eq.s32.totalorder %s14, 1
    %p53 = por %p51, %p52
    %p54 = scmp.ne.s32.totalorder %s45, %s46
    %p55 = scmp.eq.s32.totalorder %s14, 0
    %p56 = por %p54, %p55
    %p57 = scmp.ne.s32.totalorder %s45, %s46
    %p58 = scmp.eq.s32.totalorder %s15, 1
    %p59 = por %p57, %p58
    %p61 = scmp.ne.s32.totalorder %s46, %s60
    %p62 = scmp.eq.s32.totalorder %s15, 0
    %p63 = por %p61, %p62
    %s65 = sadd.s32 %s64, 1
    %p68 = scmp.eq.s32.totalorder %s9, 1
    %p69 = scmp.ne.s32.totalorder %s64, %s66
    %p70 = scmp.eq.s32.totalorder %s9, 0
    %p71 = por %p69, %p70
    %p72 = scmp.ne.s32.totalorder %s64, %s66
    %p73 = scmp.eq.s32.totalorder %s14, 1
    %p74 = por %p72, %p73
    %p75 = scmp.ne.s32.totalorder %s66, %s67
    %p76 = scmp.eq.s32.totalorder %s14, 0
    %p77 = por %p75, %p76
    %p78 = scmp.ne.s32.totalorder %s66, %s67
    %p79 = scmp.eq.s32.totalorder %s15, 1
    %p80 = por %p78, %p79
    %p82 = scmp.ne.s32.totalorder %s67, %s81
    %p83 = scmp.eq.s32.totalorder %s15, 0
    %p84 = por %p82, %p83
    %s85 = ssub.s32 %s9, %s16
    %p86 = scmp.eq.s32.totalorder %s85, 0
    %s88 = sadd.s32 %s87, 1
    %s89 = scalar_select %p86, %s87, %s88
    %p92 = pneg %p86
    %p93 = scmp.eq.s32.totalorder %s9, 1
    %p94 = por %p92, %p93
    %p95 = scmp.ne.s32.totalorder %s87, %s90
    %p96 = scmp.eq.s32.totalorder %s9, 0
    %p97 = por %p95, %p96
    %p98 = scmp.ne.s32.totalorder %s87, %s90
    %p99 = scmp.eq.s32.totalorder %s14, 1
    %p100 = por %p98, %p99
    %p101 = scmp.ne.s32.totalorder %s90, %s91
    %p102 = scmp.eq.s32.totalorder %s14, 0
    %p103 = por %p101, %p102
    %p104 = scmp.ne.s32.totalorder %s90, %s91
    %p105 = scmp.eq.s32.totalorder %s15, 1
    %p106 = por %p104, %p105
    %p108 = scmp.ne.s32.totalorder %s91, %s107
    %p109 = scmp.eq.s32.totalorder %s15, 0
    %p110 = por %p108, %p109
    %p111 = scmp.le.s32.totalorder 1, %s9
    %p112 = scmp.lt.s32.totalorder %s9, 3
    %p113 = pnand %p111, %p112
    %p114 = pneg %p113
    // Predicated region
    $region9: #{fwd.6} parent=5 // pred_check
      _
    $region10: #{fwd.6} parent=5 // pred_check_branch
      %116 = sbr.rel (%p113) target = $region12
    $region11: #{fwd.6} parent=5 // pred_region
      %s117 = ssub.s32 %s9, 1
      // Predicated region
      $region13: #{fwd.6} parent=11 // pred_check
        %p118 = pneg %p56
      $region14: #{fwd.6} parent=11 // pred_check_branch
        %120 = sbr.rel (%p118) target = $region16
      $region15: #{fwd.6} parent=11 // pred_region
        _
      $region16: #{fwd.6} parent=11 // pred_fallthru
        _
      // Predicated region
      $region17: #{fwd.6} parent=11 // pred_check
        %p121 = pneg %p77
      $region18: #{fwd.6} parent=11 // pred_check_branch
        %123 = sbr.rel (%p121) target = $region20
      $region19: #{fwd.6} parent=11 // pred_region
        _
      $region20: #{fwd.6} parent=11 // pred_fallthru
        _
    $region12: #{fwd.6} parent=5 // pred_fallthru
      _
    %p124 = scmp.lt.s32.totalorder %s9, 2
    // Predicated region
    $region21: #{fwd.6} parent=5 // pred_check
      %p125 = pneg %p124
    $region22: #{fwd.6} parent=5 // pred_check_branch
      %127 = sbr.rel (%p125) target = $region24
    $region23: #{fwd.6} parent=5 // pred_region
      // Predicated region
      $region25: #{fwd.6} parent=23 // pred_check
        %p128 = pneg %p29
      $region26: #{fwd.6} parent=23 // pred_check_branch
        %130 = sbr.rel (%p128) target = $region28
      $region27: #{fwd.6} parent=23 // pred_region
        %p131 = scmp.lt.s32.totalorder %s9, 1
        %s132 = scalar_select %p131, %s9, 1
        %s133 = smul.addr %s132, 18
        %s134 = smul.addr %s133, 4
        %s135 = scalar_lea.vmem %s0, %s134
      $region28: #{fwd.6} parent=23 // pred_fallthru
        _
    $region24: #{fwd.6} parent=5 // pred_fallthru
      _
    %p136 = scmp.le.s32.totalorder 1, %s9
    %p137 = scmp.lt.s32.totalorder %s9, 3
    %p138 = pnand %p136, %p137
    %p139 = pneg %p138
    // Predicated region
    $region29: #{fwd.6} parent=5 // pred_check
      _
    $region30: #{fwd.6} parent=5 // pred_check_branch
      %141 = sbr.rel (%p138) target = $region32
    $region31: #{fwd.6} parent=5 // pred_region
      %s142 = ssub.s32 %s9, 1
      %p143 = scmp.lt.s32.totalorder %s14, 1
      %s144 = scalar_select %p143, %s14, 1
      %s145 = smul.addr %s144, 18
      %s146 = smul.addr %s145, 4
      %s147 = scalar_lea.vmem %s0, %s146
      %p148 = pneg %p35
      %p149 = pneg %p32
      %p150 = pneg %p56
      %p151 = pneg %p53
      %p152 = pneg %p77
      %p153 = pneg %p74
      %p154 = pneg %p103
      %p155 = pneg %p100
      %p156 = scmp.lt.s32.totalorder %s14, 1
      %s157 = scalar_select %p156, %s14, 1
      %s158 = smul.addr %s157, 8
      %s159 = smul.addr %s158, 4
      %s160 = scalar_lea.vmem %s3, %s159
      %p161 = scmp.lt.s32.totalorder %s14, 1
      %s162 = scalar_select %p161, %s14, 1
      %s163 = smul.addr %s162, 18
      %s164 = smul.addr %s163, 4
      %s165 = scalar_lea.vmem %s0, %s164
      %p166 = scmp.lt.s32.totalorder %s14, 1
      %s167 = scalar_select %p166, %s14, 1
      %s168 = smul.addr %s167, 8
      %s169 = smul.addr %s168, 4
      %s170 = scalar_lea.vmem %s3, %s169
      %v172 = vld [vmem:[%s2] sm:$0x1]
      %v173 = vld [vmem:[%s165] sm:$0xf]
      %v174 = vld [vmem:[%s165 + $0x8] sm:$0xf]
      %v175 = vld [vmem:[%s165 + $0x10] sm:$0xf]
      %v176 = vld [vmem:[%s165 + $0x18] sm:$0xf]
      %v177 = vld [vmem:[%s165 + $0x20] sm:$0xf]
      %v178 = vld [vmem:[%s165 + $0x28] sm:$0xf]
      %v179 = vld [vmem:[%s165 + $0x30] sm:$0xf]
      %v180 = vld [vmem:[%s165 + $0x38] sm:$0xf]
      %v189 = vunpack.c.l.b16 %v173
      %v190 = vunpack.c.l.b16 %v174
      %v191 = vunpack.c.l.b16 %v175
      %v192 = vunpack.c.l.b16 %v176
      %v193 = vunpack.c.l.b16 %v177
      %v194 = vunpack.c.l.b16 %v178
      %v195 = vunpack.c.l.b16 %v179
      %v196 = vunpack.c.l.b16 %v180
      %v197 = vpack.c.b16 %v190, %v189
      %v198 = vpack.c.b16 %v192, %v191
      %v199 = vpack.c.b16 %v194, %v193
      %v200 = vpack.c.b16 %v196, %v195
      %vm205 = vcmask 130048
      %206 = vst.msk [vmem:[#allocation2] sm:$0xff] %vm205, %v197
      %207 = vst.msk [vmem:[#allocation2 + $0x8] sm:$0xff] %vm205, %v198
      %208 = vst.msk [vmem:[#allocation2 + $0x10] sm:$0xff] %vm205, %v199
      %209 = vst.msk [vmem:[#allocation2 + $0x18] sm:$0xff] %vm205, %v200
      %v210 = vld [vmem:[%s165] sm:$0xf]
      %v211 = vld [vmem:[%s165 + $0x8] sm:$0xf]
      %v212 = vld [vmem:[%s165 + $0x10] sm:$0xf]
      %v213 = vld [vmem:[%s165 + $0x18] sm:$0xf]
      %v214 = vld [vmem:[%s165 + $0x20] sm:$0xf]
      %v215 = vld [vmem:[%s165 + $0x28] sm:$0xf]
      %v216 = vld [vmem:[%s165 + $0x30] sm:$0xf]
      %v217 = vld [vmem:[%s165 + $0x38] sm:$0xf]
      %v218 = vld [vmem:[%s165 + $0x40] sm:$0x1]
      %v228 = vunpack.c.l.b16 %v210
      %v229 = vunpack.c.l.b16 %v211
      %v230 = vunpack.c.l.b16 %v212
      %v231 = vunpack.c.l.b16 %v213
      %v232 = vunpack.c.l.b16 %v214
      %v233 = vunpack.c.l.b16 %v215
      %v234 = vunpack.c.l.b16 %v216
      %v235 = vunpack.c.l.b16 %v217
      %v236 = vunpack.c.l.b16 %v218
      %v237 = vpack.c.b16 %v229, %v228
      %v238 = vpack.c.b16 %v231, %v230
      %v239 = vpack.c.b16 %v233, %v232
      %v240 = vpack.c.b16 %v235, %v234
      %v241 = vpack.c.b16 %v236, %v236
      %vm242 = vsmask.f32 7424
      %v244 = vshrl.u32 %v237, 16
      %v246 = vshll.u32 %v237, 16
      %v248 = vrot.slane %v246, 1
      %v249 = vor.u32 %v244, %v248
      %v251 = vshll.u32 %v238, 16
      %v253 = vrot.slane %v251, 1
      %v254 = vsel %vm242, %v249, %v253
      %v255 = vshrl.u32 %v238, 16
      %v257 = vor.u32 %v255, %v253
      %v259 = vshll.u32 %v239, 16
      %v261 = vrot.slane %v259, 1
      %v262 = vsel %vm242, %v257, %v261
      %v263 = vshrl.u32 %v239, 16
      %v265 = vor.u32 %v263, %v261
      %v267 = vshll.u32 %v240, 16
      %v269 = vrot.slane %v267, 1
      %v270 = vsel %vm242, %v265, %v269
      %v271 = vshrl.u32 %v240, 16
      %v273 = vor.u32 %v271, %v269
      %v275 = vshll.u32 %v241, 16
      %v277 = vrot.slane %v275, 1
      %v278 = vsel %vm242, %v273, %v277
      %279 = vrot.lane.b32.xlu0 %v254, 16
      %v280 = vpop.permute.xlu0 %279
      %281 = vrot.lane.b32.xlu0 %v262, 16
      %v282 = vpop.permute.xlu0 %281
      %283 = vrot.lane.b32.xlu0 %v270, 16
      %v284 = vpop.permute.xlu0 %283
      %285 = vrot.lane.b32.xlu0 %v278, 16
      %v286 = vpop.permute.xlu0 %285
      %vm291 = vcmask 261248
      %292 = vst.msk [vmem:[#allocation2] sm:$0xff] %vm291, %v280
      %293 = vst.msk [vmem:[#allocation2 + $0x8] sm:$0xff] %vm291, %v282
      %294 = vst.msk [vmem:[#allocation2 + $0x10] sm:$0xff] %vm291, %v284
      %295 = vst.msk [vmem:[#allocation2 + $0x18] sm:$0xff] %vm291, %v286
      %v296 = vld [vmem:[%s165] sm:$0xe]
      %v297 = vld [vmem:[%s165 + $0x8] sm:$0xf]
      %v298 = vld [vmem:[%s165 + $0x10] sm:$0xf]
      %v299 = vld [vmem:[%s165 + $0x18] sm:$0xf]
      %v300 = vld [vmem:[%s165 + $0x20] sm:$0xf]
      %v301 = vld [vmem:[%s165 + $0x28] sm:$0xf]
      %v302 = vld [vmem:[%s165 + $0x30] sm:$0xf]
      %v303 = vld [vmem:[%s165 + $0x38] sm:$0xf]
      %v304 = vld [vmem:[%s165 + $0x40] sm:$0x1]
      %v314 = vunpack.c.l.b16 %v296
      %v315 = vunpack.c.l.b16 %v297
      %v316 = vunpack.c.l.b16 %v298
      %v317 = vunpack.c.l.b16 %v299
      %v318 = vunpack.c.l.b16 %v300
      %v319 = vunpack.c.l.b16 %v301
      %v320 = vunpack.c.l.b16 %v302
      %v321 = vunpack.c.l.b16 %v303
      %v322 = vunpack.c.l.b16 %v304
      %v323 = vpack.c.b16 %v315, %v314
      %v324 = vpack.c.b16 %v317, %v316
      %v325 = vpack.c.b16 %v319, %v318
      %v326 = vpack.c.b16 %v321, %v320
      %v327 = vpack.c.b16 %v322, %v322
      %vm328 = vcmask 1046528
      %v329 = vrot.slane %v323, 1
      %v330 = vrot.slane %v324, 1
      %v331 = vsel %vm328, %v329, %v330
      %v332 = vrot.slane %v325, 1
      %v333 = vsel %vm328, %v330, %v332
      %v334 = vrot.slane %v326, 1
      %v335 = vsel %vm328, %v332, %v334
      %v336 = vrot.slane %v327, 1
      %v337 = vsel %vm328, %v334, %v336
      %338 = vrot.lane.b32.xlu0 %v331, 32
      %v339 = vpop.permute.xlu0 %338
      %340 = vrot.lane.b32.xlu0 %v333, 32
      %v341 = vpop.permute.xlu0 %340
      %342 = vrot.lane.b32.xlu0 %v335, 32
      %v343 = vpop.permute.xlu0 %342
      %344 = vrot.lane.b32.xlu0 %v337, 32
      %v345 = vpop.permute.xlu0 %344
      %vm350 = vcmask 392448
      %351 = vst.msk [vmem:[#allocation2] sm:$0xff] %vm350, %v339
      %352 = vst.msk [vmem:[#allocation2 + $0x8] sm:$0xff] %vm350, %v341
      %353 = vst.msk [vmem:[#allocation2 + $0x10] sm:$0xff] %vm350, %v343
      %354 = vst.msk [vmem:[#allocation2 + $0x18] sm:$0xff] %vm350, %v345
      %v355 = vld [vmem:[%s165] sm:$0xe]
      %v356 = vld [vmem:[%s165 + $0x8] sm:$0xf]
      %v357 = vld [vmem:[%s165 + $0x10] sm:$0xf]
      %v358 = vld [vmem:[%s165 + $0x18] sm:$0xf]
      %v359 = vld [vmem:[%s165 + $0x20] sm:$0xf]
      %v360 = vld [vmem:[%s165 + $0x28] sm:$0xf]
      %v361 = vld [vmem:[%s165 + $0x30] sm:$0xf]
      %v362 = vld [vmem:[%s165 + $0x38] sm:$0xf]
      %v363 = vld [vmem:[%s165 + $0x40] sm:$0x3]
      %v373 = vunpack.c.l.b16 %v355
      %v374 = vunpack.c.l.b16 %v356
      %v375 = vunpack.c.l.b16 %v357
      %v376 = vunpack.c.l.b16 %v358
      %v377 = vunpack.c.l.b16 %v359
      %v378 = vunpack.c.l.b16 %v360
      %v379 = vunpack.c.l.b16 %v361
      %v380 = vunpack.c.l.b16 %v362
      %v381 = vunpack.c.l.b16 %v363
      %v382 = vpack.c.b16 %v374, %v373
      %v383 = vpack.c.b16 %v376, %v375
      %v384 = vpack.c.b16 %v378, %v377
      %v385 = vpack.c.b16 %v380, %v379
      %v386 = vpack.c.b16 %v381, %v381
      %vm387 = vsmask.f32 6400
      %v389 = vshrl.u32 %v382, 16
      %v391 = vrot.slane %v389, 1
      %v392 = vshll.u32 %v382, 16
      %v394 = vrot.slane %v392, 2
      %v395 = vor.u32 %v391, %v394
      %v397 = vshrl.u32 %v383, 16
      %v399 = vrot.slane %v397, 1
      %v400 = vshll.u32 %v383, 16
      %v402 = vrot.slane %v400, 2
      %v403 = vor.u32 %v399, %v402
      %v404 = vsel %vm387, %v395, %v403
      %v406 = vshrl.u32 %v384, 16
      %v408 = vrot.slane %v406, 1
      %v409 = vshll.u32 %v384, 16
      %v411 = vrot.slane %v409, 2
      %v412 = vor.u32 %v408, %v411
      %v413 = vsel %vm387, %v403, %v412
      %v415 = vshrl.u32 %v385, 16
      %v417 = vrot.slane %v415, 1
      %v418 = vshll.u32 %v385, 16
      %v420 = vrot.slane %v418, 2
      %v421 = vor.u32 %v417, %v420
      %v422 = vsel %vm387, %v412, %v421
      %v424 = vshrl.u32 %v386, 16
      %v426 = vrot.slane %v424, 1
      %v427 = vshll.u32 %v386, 16
      %v429 = vrot.slane %v427, 2
      %v430 = vor.u32 %v426, %v429
      %v431 = vsel %vm387, %v421, %v430
      %432 = vrot.lane.b32.xlu0 %v404, 48
      %v433 = vpop.permute.xlu0 %432
      %434 = vrot.lane.b32.xlu0 %v413, 48
      %v435 = vpop.permute.xlu0 %434
      %436 = vrot.lane.b32.xlu0 %v422, 48
      %v437 = vpop.permute.xlu0 %436
      %438 = vrot.lane.b32.xlu0 %v431, 48
      %v439 = vpop.permute.xlu0 %438
      %vm444 = vcmask 523648
      %445 = vst.msk [vmem:[#allocation2] sm:$0xff] %vm444, %v433
      %446 = vst.msk [vmem:[#allocation2 + $0x8] sm:$0xff] %vm444, %v435
      %447 = vst.msk [vmem:[#allocation2 + $0x10] sm:$0xff] %vm444, %v437
      %448 = vst.msk [vmem:[#allocation2 + $0x18] sm:$0xff] %vm444, %v439
      %v449 = vld [vmem:[#allocation2] sm:$0xff]
      %v450 = vld [vmem:[#allocation2 + $0x8] sm:$0xff]
      %v451 = vld [vmem:[#allocation2 + $0x10] sm:$0xff]
      %v452 = vld [vmem:[#allocation2 + $0x18] sm:$0xff]
      %v453 = vld [vmem:[%s1] sm:$0xf]
      %v454 = vld [vmem:[%s1 + $0x4] sm:$0xf]
      %v455 = vld [vmem:[%s1 + $0x8] sm:$0xf]
      %v456 = vld [vmem:[%s1 + $0xc] sm:$0xf]
      %v457 = vld [vmem:[%s1 + $0x10] sm:$0xf]
      %v458 = vld [vmem:[%s1 + $0x14] sm:$0xf]
      %v459 = vld [vmem:[%s1 + $0x18] sm:$0xf]
      %v460 = vld [vmem:[%s1 + $0x1c] sm:$0xf]
      %v462 = vlaneseq
      %v463 = vshrl.u32 %v462, 7
      %v464 = vsub.s32 0, %v463
      %v465 = vrot.slane %v172, %v464
      %v475 = vunpack.c.l.b16 %v453
      %v476 = vunpack.c.l.b16 %v454
      %v477 = vunpack.c.l.b16 %v455
      %v478 = vunpack.c.l.b16 %v456
      %v479 = vunpack.c.l.b16 %v457
      %v480 = vunpack.c.l.b16 %v458
      %v481 = vunpack.c.l.b16 %v459
      %v482 = vunpack.c.l.b16 %v460
      %v483 = vpack.c.b16 %v476, %v475
      %v484 = vpack.c.b16 %v478, %v477
      %v485 = vpack.c.b16 %v480, %v479
      %v486 = vpack.c.b16 %v482, %v481
      %vm491 = vcmask 523264
      %v493 = vsel %vm491, %v449, 0
      %v496 = vsel %vm491, %v450, 0
      %v499 = vsel %vm491, %v451, 0
      %v502 = vsel %vm491, %v452, 0
      %504 = vmatprep.subr.bf16.mxu0 0
      %505 = vmatpush1.bf16.msra.mxu0 %v483
      %506 = vmatprep.subr.bf16.mxu0 0
      %507 = vmatpush1.bf16.msra.mxu0 %v484
      %508 = vmatprep.subr.bf16.mxu0 0
      %509 = vmatpush1.bf16.msra.mxu0 %v485
      %510 = vmatprep.subr.bf16.mxu0 0
      %511 = vmatpush1.bf16.msra.mxu0 %v486
      %512 = vmatprep.subr.bf16.mxu0 0
      %513 = vmatpush1.bf16.msra.mxu0 0
      %514 = vmatprep.subr.bf16.mxu0 0
      %515 = vmatpush1.bf16.msra.mxu0 0
      %516 = vmatprep.subr.bf16.mxu0 0
      %517 = vmatpush1.bf16.msra.mxu0 0
      %518 = vmatprep.subr.bf16.mxu0 0
      %519 = vmatpush1.bf16.msra.mxu0 0
      %520 = vmatprep.subr.bf16.mxu0 0
      %521 = vmatpush1.bf16.msra.mxu0 0
      %522 = vmatprep.subr.bf16.mxu0 0
      %523 = vmatpush1.bf16.msra.mxu0 0
      %524 = vmatprep.subr.bf16.mxu0 0
      %525 = vmatpush1.bf16.msra.mxu0 0
      %526 = vmatprep.subr.bf16.mxu0 0
      %527 = vmatpush1.bf16.msra.mxu0 0
      %528 = vmatprep.subr.bf16.mxu0 0
      %529 = vmatpush1.bf16.msra.mxu0 0
      %530 = vmatprep.subr.bf16.mxu0 0
      %531 = vmatpush1.bf16.msra.mxu0 0
      %532 = vmatprep.subr.bf16.mxu0 0
      %533 = vmatpush1.bf16.msra.mxu0 0
      %534 = vmatprep.subr.bf16.mxu0 0
      %535 = vmatpush1.bf16.msra.mxu0 0
      %536 = vmatprep.mubr.bf16.mxu0 0
      %537 = vmatmul.mubr.bf16.gmra.mrb[0].mxu0 %v493
      %v538 = vpop.f32.mrb[0].mxu0
      %v539 = vadd.f32 %v465, %v538
      %v540 = vpop.f32.mrb[0].mxu0
      %v541 = vpop.f32.mrb[0].mxu0
      %v542 = vadd.f32 %v465, %v541
      %v543 = vpop.f32.mrb[0].mxu0
      %544 = vmatprep.mubr.bf16.mxu0 0
      %545 = vmatmul.mubr.bf16.gmra.mrb[0].mxu0 %v496
      %v546 = vpop.f32.mrb[0].mxu0
      %v547 = vadd.f32 %v465, %v546
      %v548 = vpop.f32.mrb[0].mxu0
      %v549 = vpop.f32.mrb[0].mxu0
      %v550 = vadd.f32 %v465, %v549
      %v551 = vpop.f32.mrb[0].mxu0
      %552 = vmatprep.mubr.bf16.mxu0 0
      %553 = vmatmul.mubr.bf16.gmra.mrb[0].mxu0 %v499
      %v554 = vpop.f32.mrb[0].mxu0
      %v555 = vadd.f32 %v465, %v554
      %v556 = vpop.f32.mrb[0].mxu0
      %v557 = vpop.f32.mrb[0].mxu0
      %v558 = vadd.f32 %v465, %v557
      %v559 = vpop.f32.mrb[0].mxu0
      %560 = vmatprep.mubr.bf16.mxu0 0
      %561 = vmatmul.mubr.bf16.gmra.mrb[0].mxu0 %v502
      %v562 = vpop.f32.mrb[0].mxu0
      %v563 = vadd.f32 %v465, %v562
      %v564 = vpop.f32.mrb[0].mxu0
      %v565 = vpop.f32.mrb[0].mxu0
      %v566 = vadd.f32 %v465, %v565
      %v567 = vpop.f32.mrb[0].mxu0
      %568 = vdwg.mxu0
      %vm569 = vcmp.ge.f32.partialorder %v539, 0.0
      %vm570 = vcmp.ge.f32.partialorder %v542, 0.0
      %vm571 = vcmp.ge.f32.partialorder %v547, 0.0
      %vm572 = vcmp.ge.f32.partialorder %v550, 0.0
      %vm573 = vcmp.ge.f32.partialorder %v555, 0.0
      %vm574 = vcmp.ge.f32.partialorder %v558, 0.0
      %vm575 = vcmp.ge.f32.partialorder %v563, 0.0
      %vm576 = vcmp.ge.f32.partialorder %v566, 0.0
      %v577 = vmul.f32 %v539, 0.1
      %v578 = vmul.f32 %v542, 0.1
      %v579 = vmul.f32 %v547, 0.1
      %v580 = vmul.f32 %v550, 0.1
      %v581 = vmul.f32 %v555, 0.1
      %v582 = vmul.f32 %v558, 0.1
      %v583 = vmul.f32 %v563, 0.1
      %v584 = vmul.f32 %v566, 0.1
      %v585 = vsel %vm569, %v539, %v577
      %v586 = vsel %vm570, %v542, %v578
      %v587 = vsel %vm571, %v547, %v579
      %v588 = vsel %vm572, %v550, %v580
      %v589 = vsel %vm573, %v555, %v581
      %v590 = vsel %vm574, %v558, %v582
      %v591 = vsel %vm575, %v563, %v583
      %v592 = vsel %vm576, %v566, %v584
      %v593 = vpack.c.bf16 %v586, %v585
      %v594 = vpack.c.bf16 %v588, %v587
      %v595 = vpack.c.bf16 %v590, %v589
      %v596 = vpack.c.bf16 %v592, %v591
      %v601 = vunpack.c.l.b16 %v593
      %v602 = vunpack.c.h.b16 %v593
      %v603 = vunpack.c.l.b16 %v594
      %v604 = vunpack.c.h.b16 %v594
      %v605 = vunpack.c.l.b16 %v595
      %v606 = vunpack.c.h.b16 %v595
      %v607 = vunpack.c.l.b16 %v596
      %v608 = vunpack.c.h.b16 %v596
      %v609 = vpack.c.b16 %v601, %v601
      %v610 = vpack.c.b16 %v602, %v602
      %v611 = vpack.c.b16 %v603, %v603
      %v612 = vpack.c.b16 %v604, %v604
      %v613 = vpack.c.b16 %v605, %v605
      %v614 = vpack.c.b16 %v606, %v606
      %v615 = vpack.c.b16 %v607, %v607
      %v616 = vpack.c.b16 %v608, %v608
      %vm625 = vcmask 125952
      %626 = vst.msk [vmem:[%s170] sm:$0xf] %vm625, %v609
      %627 = vst.msk [vmem:[%s170 + $0x4] sm:$0xf] %vm625, %v610
      %628 = vst.msk [vmem:[%s170 + $0x8] sm:$0xf] %vm625, %v611
      %629 = vst.msk [vmem:[%s170 + $0xc] sm:$0xf] %vm625, %v612
      %630 = vst.msk [vmem:[%s170 + $0x10] sm:$0xf] %vm625, %v613
      %631 = vst.msk [vmem:[%s170 + $0x14] sm:$0xf] %vm625, %v614
      %632 = vst.msk [vmem:[%s170 + $0x18] sm:$0xf] %vm625, %v615
      %633 = vst.msk [vmem:[%s170 + $0x1c] sm:$0xf] %vm625, %v616
      %v634 = vld [vmem:[%s165] sm:$0xf]
      %v635 = vld [vmem:[%s165 + $0x8] sm:$0xf]
      %v636 = vld [vmem:[%s165 + $0x10] sm:$0xf]
      %v637 = vld [vmem:[%s165 + $0x18] sm:$0xf]
      %v638 = vld [vmem:[%s165 + $0x20] sm:$0xf]
      %v639 = vld [vmem:[%s165 + $0x28] sm:$0xf]
      %v640 = vld [vmem:[%s165 + $0x30] sm:$0xf]
      %v641 = vld [vmem:[%s165 + $0x38] sm:$0xf]
      %v650 = vunpack.c.l.b16 %v634
      %v651 = vunpack.c.l.b16 %v635
      %v652 = vunpack.c.l.b16 %v636
      %v653 = vunpack.c.l.b16 %v637
      %v654 = vunpack.c.l.b16 %v638
      %v655 = vunpack.c.l.b16 %v639
      %v656 = vunpack.c.l.b16 %v640
      %v657 = vunpack.c.l.b16 %v641
      %v658 = vpack.c.b16 %v651, %v650
      %v659 = vpack.c.b16 %v653, %v652
      %v660 = vpack.c.b16 %v655, %v654
      %v661 = vpack.c.b16 %v657, %v656
      %662 = vrot.lane.b32.xlu0 %v658, 112
      %v663 = vpop.permute.xlu0 %662
      %664 = vrot.lane.b32.xlu0 %v659, 112
      %v665 = vpop.permute.xlu0 %664
      %666 = vrot.lane.b32.xlu0 %v660, 112
      %v667 = vpop.permute.xlu0 %666
      %668 = vrot.lane.b32.xlu0 %v661, 112
      %v669 = vpop.permute.xlu0 %668
      %674 = vst.msk [vmem:[#allocation2] sm:$0xff] %vm205, %v663
      %675 = vst.msk [vmem:[#allocation2 + $0x8] sm:$0xff] %vm205, %v665
      %676 = vst.msk [vmem:[#allocation2 + $0x10] sm:$0xff] %vm205, %v667
      %677 = vst.msk [vmem:[#allocation2 + $0x18] sm:$0xff] %vm205, %v669
      %v678 = vld [vmem:[%s165] sm:$0xf]
      %v679 = vld [vmem:[%s165 + $0x8] sm:$0xf]
      %v680 = vld [vmem:[%s165 + $0x10] sm:$0xf]
      %v681 = vld [vmem:[%s165 + $0x18] sm:$0xf]
      %v682 = vld [vmem:[%s165 + $0x20] sm:$0xf]
      %v683 = vld [vmem:[%s165 + $0x28] sm:$0xf]
      %v684 = vld [vmem:[%s165 + $0x30] sm:$0xf]
      %v685 = vld [vmem:[%s165 + $0x38] sm:$0xf]
      %v686 = vld [vmem:[%s165 + $0x40] sm:$0x1]
      %v696 = vunpack.c.l.b16 %v678
      %v697 = vunpack.c.l.b16 %v679
      %v698 = vunpack.c.l.b16 %v680
      %v699 = vunpack.c.l.b16 %v681
      %v700 = vunpack.c.l.b16 %v682
      %v701 = vunpack.c.l.b16 %v683
      %v702 = vunpack.c.l.b16 %v684
      %v703 = vunpack.c.l.b16 %v685
      %v704 = vunpack.c.l.b16 %v686
      %v705 = vpack.c.b16 %v697, %v696
      %v706 = vpack.c.b16 %v699, %v698
      %v707 = vpack.c.b16 %v701, %v700
      %v708 = vpack.c.b16 %v703, %v702
      %v709 = vpack.c.b16 %v704, %v704
      %v711 = vshrl.u32 %v705, 16
      %v713 = vshll.u32 %v705, 16
      %v715 = vrot.slane %v713, 1
      %v716 = vor.u32 %v711, %v715
      %v718 = vshll.u32 %v706, 16
      %v720 = vrot.slane %v718, 1
      %v721 = vsel %vm242, %v716, %v720
      %v722 = vshrl.u32 %v706, 16
      %v724 = vor.u32 %v722, %v720
      %v726 = vshll.u32 %v707, 16
      %v728 = vrot.slane %v726, 1
      %v729 = vsel %vm242, %v724, %v728
      %v730 = vshrl.u32 %v707, 16
      %v732 = vor.u32 %v730, %v728
      %v734 = vshll.u32 %v708, 16
      %v736 = vrot.slane %v734, 1
      %v737 = vsel %vm242, %v732, %v736
      %v738 = vshrl.u32 %v708, 16
      %v740 = vor.u32 %v738, %v736
      %v742 = vshll.u32 %v709, 16
      %v744 = vrot.slane %v742, 1
      %v745 = vsel %vm242, %v740, %v744
      %750 = vst.msk [vmem:[#allocation2] sm:$0xff] %vm291, %v721
      %751 = vst.msk [vmem:[#allocation2 + $0x8] sm:$0xff] %vm291, %v729
      %752 = vst.msk [vmem:[#allocation2 + $0x10] sm:$0xff] %vm291, %v737
      %753 = vst.msk [vmem:[#allocation2 + $0x18] sm:$0xff] %vm291, %v745
      %v754 = vld [vmem:[%s165] sm:$0xe]
      %v755 = vld [vmem:[%s165 + $0x8] sm:$0xf]
      %v756 = vld [vmem:[%s165 + $0x10] sm:$0xf]
      %v757 = vld [vmem:[%s165 + $0x18] sm:$0xf]
      %v758 = vld [vmem:[%s165 + $0x20] sm:$0xf]
      %v759 = vld [vmem:[%s165 + $0x28] sm:$0xf]
      %v760 = vld [vmem:[%s165 + $0x30] sm:$0xf]
      %v761 = vld [vmem:[%s165 + $0x38] sm:$0xf]
      %v762 = vld [vmem:[%s165 + $0x40] sm:$0x1]
      %v772 = vunpack.c.l.b16 %v754
      %v773 = vunpack.c.l.b16 %v755
      %v774 = vunpack.c.l.b16 %v756
      %v775 = vunpack.c.l.b16 %v757
      %v776 = vunpack.c.l.b16 %v758
      %v777 = vunpack.c.l.b16 %v759
      %v778 = vunpack.c.l.b16 %v760
      %v779 = vunpack.c.l.b16 %v761
      %v780 = vunpack.c.l.b16 %v762
      %v781 = vpack.c.b16 %v773, %v772
      %v782 = vpack.c.b16 %v775, %v774
      %v783 = vpack.c.b16 %v777, %v776
      %v784 = vpack.c.b16 %v779, %v778
      %v785 = vpack.c.b16 %v780, %v780
      %v786 = vrot.slane %v781, 1
      %v787 = vrot.slane %v782, 1
      %v788 = vsel %vm328, %v786, %v787
      %v789 = vrot.slane %v783, 1
      %v790 = vsel %vm328, %v787, %v789
      %v791 = vrot.slane %v784, 1
      %v792 = vsel %vm328, %v789, %v791
      %v793 = vrot.slane %v785, 1
      %v794 = vsel %vm328, %v791, %v793
      %795 = vrot.lane.b32.xlu0 %v788, 16
      %v796 = vpop.permute.xlu0 %795
      %797 = vrot.lane.b32.xlu0 %v790, 16
      %v798 = vpop.permute.xlu0 %797
      %799 = vrot.lane.b32.xlu0 %v792, 16
      %v800 = vpop.permute.xlu0 %799
      %801 = vrot.lane.b32.xlu0 %v794, 16
      %v802 = vpop.permute.xlu0 %801
      %807 = vst.msk [vmem:[#allocation2] sm:$0xff] %vm350, %v796
      %808 = vst.msk [vmem:[#allocation2 + $0x8] sm:$0xff] %vm350, %v798
      %809 = vst.msk [vmem:[#allocation2 + $0x10] sm:$0xff] %vm350, %v800
      %810 = vst.msk [vmem:[#allocation2 + $0x18] sm:$0xff] %vm350, %v802
      %v811 = vld [vmem:[%s165] sm:$0xe]
      %v812 = vld [vmem:[%s165 + $0x8] sm:$0xf]
      %v813 = vld [vmem:[%s165 + $0x10] sm:$0xf]
      %v814 = vld [vmem:[%s165 + $0x18] sm:$0xf]
      %v815 = vld [vmem:[%s165 + $0x20] sm:$0xf]
      %v816 = vld [vmem:[%s165 + $0x28] sm:$0xf]
      %v817 = vld [vmem:[%s165 + $0x30] sm:$0xf]
      %v818 = vld [vmem:[%s165 + $0x38] sm:$0xf]
      %v819 = vld [vmem:[%s165 + $0x40] sm:$0x3]
      %v829 = vunpack.c.l.b16 %v811
      %v830 = vunpack.c.l.b16 %v812
      %v831 = vunpack.c.l.b16 %v813
      %v832 = vunpack.c.l.b16 %v814
      %v833 = vunpack.c.l.b16 %v815
      %v834 = vunpack.c.l.b16 %v816
      %v835 = vunpack.c.l.b16 %v817
      %v836 = vunpack.c.l.b16 %v818
      %v837 = vunpack.c.l.b16 %v819
      %v838 = vpack.c.b16 %v830, %v829
      %v839 = vpack.c.b16 %v832, %v831
      %v840 = vpack.c.b16 %v834, %v833
      %v841 = vpack.c.b16 %v836, %v835
      %v842 = vpack.c.b16 %v837, %v837
      %v844 = vshrl.u32 %v838, 16
      %v846 = vrot.slane %v844, 1
      %v847 = vshll.u32 %v838, 16
      %v849 = vrot.slane %v847, 2
      %v850 = vor.u32 %v846, %v849
      %v852 = vshrl.u32 %v839, 16
      %v854 = vrot.slane %v852, 1
      %v855 = vshll.u32 %v839, 16
      %v857 = vrot.slane %v855, 2
      %v858 = vor.u32 %v854, %v857
      %v859 = vsel %vm387, %v850, %v858
      %v861 = vshrl.u32 %v840, 16
      %v863 = vrot.slane %v861, 1
      %v864 = vshll.u32 %v840, 16
      %v866 = vrot.slane %v864, 2
      %v867 = vor.u32 %v863, %v866
      %v868 = vsel %vm387, %v858, %v867
      %v870 = vshrl.u32 %v841, 16
      %v872 = vrot.slane %v870, 1
      %v873 = vshll.u32 %v841, 16
      %v875 = vrot.slane %v873, 2
      %v876 = vor.u32 %v872, %v875
      %v877 = vsel %vm387, %v867, %v876
      %v879 = vshrl.u32 %v842, 16
      %v881 = vrot.slane %v879, 1
      %v882 = vshll.u32 %v842, 16
      %v884 = vrot.slane %v882, 2
      %v885 = vor.u32 %v881, %v884
      %v886 = vsel %vm387, %v876, %v885
      %887 = vrot.lane.b32.xlu0 %v859, 32
      %v888 = vpop.permute.xlu0 %887
      %889 = vrot.lane.b32.xlu0 %v868, 32
      %v890 = vpop.permute.xlu0 %889
      %891 = vrot.lane.b32.xlu0 %v877, 32
      %v892 = vpop.permute.xlu0 %891
      %893 = vrot.lane.b32.xlu0 %v886, 32
      %v894 = vpop.permute.xlu0 %893
      %899 = vst.msk [vmem:[#allocation2] sm:$0xff] %vm444, %v888
      %900 = vst.msk [vmem:[#allocation2 + $0x8] sm:$0xff] %vm444, %v890
      %901 = vst.msk [vmem:[#allocation2 + $0x10] sm:$0xff] %vm444, %v892
      %902 = vst.msk [vmem:[#allocation2 + $0x18] sm:$0xff] %vm444, %v894
      %v903 = vld [vmem:[#allocation2] sm:$0xff]
      %v904 = vld [vmem:[#allocation2 + $0x8] sm:$0xff]
      %v905 = vld [vmem:[#allocation2 + $0x10] sm:$0xff]
      %v906 = vld [vmem:[#allocation2 + $0x18] sm:$0xff]
      %s907 = scalar_lea.vmem %s1, 32
      %v908 = vld [vmem:[%s907] sm:$0xf]
      %v909 = vld [vmem:[%s907 + $0x4] sm:$0xf]
      %v910 = vld [vmem:[%s907 + $0x8] sm:$0xf]
      %v911 = vld [vmem:[%s907 + $0xc] sm:$0xf]
      %v912 = vld [vmem:[%s907 + $0x10] sm:$0xf]
      %v913 = vld [vmem:[%s907 + $0x14] sm:$0xf]
      %v914 = vld [vmem:[%s907 + $0x18] sm:$0xf]
      %v915 = vld [vmem:[%s907 + $0x1c] sm:$0xf]
      %v924 = vunpack.c.l.b16 %v908
      %v925 = vunpack.c.l.b16 %v909
      %v926 = vunpack.c.l.b16 %v910
      %v927 = vunpack.c.l.b16 %v911
      %v928 = vunpack.c.l.b16 %v912
      %v929 = vunpack.c.l.b16 %v913
      %v930 = vunpack.c.l.b16 %v914
      %v931 = vunpack.c.l.b16 %v915
      %v932 = vpack.c.b16 %v925, %v924
      %v933 = vpack.c.b16 %v927, %v926
      %v934 = vpack.c.b16 %v929, %v928
      %v935 = vpack.c.b16 %v931, %v930
      %940 = vrot.lane.b32.xlu0 %v465, 112
      %v941 = vpop.permute.xlu0 %940
      %v944 = vsel %vm491, %v903, 0
      %v947 = vsel %vm491, %v904, 0
      %v950 = vsel %vm491, %v905, 0
      %v953 = vsel %vm491, %v906, 0
      %955 = vmatprep.subr.bf16.mxu0 0
      %956 = vmatpush1.bf16.msra.mxu0 %v932
      %957 = vmatprep.subr.bf16.mxu0 0
      %958 = vmatpush1.bf16.msra.mxu0 %v933
      %959 = vmatprep.subr.bf16.mxu0 0
      %960 = vmatpush1.bf16.msra.mxu0 %v934
      %961 = vmatprep.subr.bf16.mxu0 0
      %962 = vmatpush1.bf16.msra.mxu0 %v935
      %963 = vmatprep.subr.bf16.mxu0 0
      %964 = vmatpush1.bf16.msra.mxu0 0
      %965 = vmatprep.subr.bf16.mxu0 0
      %966 = vmatpush1.bf16.msra.mxu0 0
      %967 = vmatprep.subr.bf16.mxu0 0
      %968 = vmatpush1.bf16.msra.mxu0 0
      %969 = vmatprep.subr.bf16.mxu0 0
      %970 = vmatpush1.bf16.msra.mxu0 0
      %971 = vmatprep.subr.bf16.mxu0 0
      %972 = vmatpush1.bf16.msra.mxu0 0
      %973 = vmatprep.subr.bf16.mxu0 0
      %974 = vmatpush1.bf16.msra.mxu0 0
      %975 = vmatprep.subr.bf16.mxu0 0
      %976 = vmatpush1.bf16.msra.mxu0 0
      %977 = vmatprep.subr.bf16.mxu0 0
      %978 = vmatpush1.bf16.msra.mxu0 0
      %979 = vmatprep.subr.bf16.mxu0 0
      %980 = vmatpush1.bf16.msra.mxu0 0
      %981 = vmatprep.subr.bf16.mxu0 0
      %982 = vmatpush1.bf16.msra.mxu0 0
      %983 = vmatprep.subr.bf16.mxu0 0
      %984 = vmatpush1.bf16.msra.mxu0 0
      %985 = vmatprep.subr.bf16.mxu0 0
      %986 = vmatpush1.bf16.msra.mxu0 0
      %987 = vmatprep.mubr.bf16.mxu0 0
      %988 = vmatmul.mubr.bf16.gmra.mrb[0].mxu0 %v944
      %v989 = vpop.f32.mrb[0].mxu0
      %v990 = vadd.f32 %v941, %v989
      %v991 = vpop.f32.mrb[0].mxu0
      %v992 = vpop.f32.mrb[0].mxu0
      %v993 = vadd.f32 %v941, %v992
      %v994 = vpop.f32.mrb[0].mxu0
      %995 = vmatprep.mubr.bf16.mxu0 0
      %996 = vmatmul.mubr.bf16.gmra.mrb[0].mxu0 %v947
      %v997 = vpop.f32.mrb[0].mxu0
      %v998 = vadd.f32 %v941, %v997
      %v999 = vpop.f32.mrb[0].mxu0
      %v1000 = vpop.f32.mrb[0].mxu0
      %v1001 = vadd.f32 %v941, %v1000
      %v1002 = vpop.f32.mrb[0].mxu0
      %1003 = vmatprep.mubr.bf16.mxu0 0
      %1004 = vmatmul.mubr.bf16.gmra.mrb[0].mxu0 %v950
      %v1005 = vpop.f32.mrb[0].mxu0
      %v1006 = vadd.f32 %v941, %v1005
      %v1007 = vpop.f32.mrb[0].mxu0
      %v1008 = vpop.f32.mrb[0].mxu0
      %v1009 = vadd.f32 %v941, %v1008
      %v1010 = vpop.f32.mrb[0].mxu0
      %1011 = vmatprep.mubr.bf16.mxu0 0
      %1012 = vmatmul.mubr.bf16.gmra.mrb[0].mxu0 %v953
      %v1013 = vpop.f32.mrb[0].mxu0
      %v1014 = vadd.f32 %v941, %v1013
      %v1015 = vpop.f32.mrb[0].mxu0
      %v1016 = vpop.f32.mrb[0].mxu0
      %v1017 = vadd.f32 %v941, %v1016
      %v1018 = vpop.f32.mrb[0].mxu0
      %1019 = vdwg.mxu0
      %vm1020 = vcmp.ge.f32.partialorder %v990, 0.0
      %vm1021 = vcmp.ge.f32.partialorder %v993, 0.0
      %vm1022 = vcmp.ge.f32.partialorder %v998, 0.0
      %vm1023 = vcmp.ge.f32.partialorder %v1001, 0.0
      %vm1024 = vcmp.ge.f32.partialorder %v1006, 0.0
      %vm1025 = vcmp.ge.f32.partialorder %v1009, 0.0
      %vm1026 = vcmp.ge.f32.partialorder %v1014, 0.0
      %vm1027 = vcmp.ge.f32.partialorder %v1017, 0.0
      %v1028 = vmul.f32 %v990, 0.1
      %v1029 = vmul.f32 %v993, 0.1
      %v1030 = vmul.f32 %v998, 0.1
      %v1031 = vmul.f32 %v1001, 0.1
      %v1032 = vmul.f32 %v1006, 0.1
      %v1033 = vmul.f32 %v1009, 0.1
      %v1034 = vmul.f32 %v1014, 0.1
      %v1035 = vmul.f32 %v1017, 0.1
      %v1036 = vsel %vm1020, %v990, %v1028
      %v1037 = vsel %vm1021, %v993, %v1029
      %v1038 = vsel %vm1022, %v998, %v1030
      %v1039 = vsel %vm1023, %v1001, %v1031
      %v1040 = vsel %vm1024, %v1006, %v1032
      %v1041 = vsel %vm1025, %v1009, %v1033
      %v1042 = vsel %vm1026, %v1014, %v1034
      %v1043 = vsel %vm1027, %v1017, %v1035
      %v1044 = vpack.c.bf16 %v1037, %v1036
      %v1045 = vpack.c.bf16 %v1039, %v1038
      %v1046 = vpack.c.bf16 %v1041, %v1040
      %v1047 = vpack.c.bf16 %v1043, %v1042
      %v1052 = vunpack.c.l.b16 %v1044
      %v1053 = vunpack.c.h.b16 %v1044
      %v1054 = vunpack.c.l.b16 %v1045
      %v1055 = vunpack.c.h.b16 %v1045
      %v1056 = vunpack.c.l.b16 %v1046
      %v1057 = vunpack.c.h.b16 %v1046
      %v1058 = vunpack.c.l.b16 %v1047
      %v1059 = vunpack.c.h.b16 %v1047
      %v1060 = vpack.c.b16 %v1052, %v1052
      %v1061 = vpack.c.b16 %v1053, %v1053
      %v1062 = vpack.c.b16 %v1054, %v1054
      %v1063 = vpack.c.b16 %v1055, %v1055
      %v1064 = vpack.c.b16 %v1056, %v1056
      %v1065 = vpack.c.b16 %v1057, %v1057
      %v1066 = vpack.c.b16 %v1058, %v1058
      %v1067 = vpack.c.b16 %v1059, %v1059
      %1068 = vrot.lane.b32.xlu0 %v1060, 16
      %v1069 = vpop.permute.xlu0 %1068
      %1070 = vrot.lane.b32.xlu0 %v1061, 16
      %v1071 = vpop.permute.xlu0 %1070
      %1072 = vrot.lane.b32.xlu0 %v1062, 16
      %v1073 = vpop.permute.xlu0 %1072
      %1074 = vrot.lane.b32.xlu0 %v1063, 16
      %v1075 = vpop.permute.xlu0 %1074
      %1076 = vrot.lane.b32.xlu0 %v1064, 16
      %v1077 = vpop.permute.xlu0 %1076
      %1078 = vrot.lane.b32.xlu0 %v1065, 16
      %v1079 = vpop.permute.xlu0 %1078
      %1080 = vrot.lane.b32.xlu0 %v1066, 16
      %v1081 = vpop.permute.xlu0 %1080
      %1082 = vrot.lane.b32.xlu0 %v1067, 16
      %v1083 = vpop.permute.xlu0 %1082
      %vm1092 = vcmask 257152
      %1093 = vst.msk [vmem:[%s170] sm:$0xf] %vm1092, %v1069
      %1094 = vst.msk [vmem:[%s170 + $0x4] sm:$0xf] %vm1092, %v1071
      %1095 = vst.msk [vmem:[%s170 + $0x8] sm:$0xf] %vm1092, %v1073
      %1096 = vst.msk [vmem:[%s170 + $0xc] sm:$0xf] %vm1092, %v1075
      %1097 = vst.msk [vmem:[%s170 + $0x10] sm:$0xf] %vm1092, %v1077
      %1098 = vst.msk [vmem:[%s170 + $0x14] sm:$0xf] %vm1092, %v1079
      %1099 = vst.msk [vmem:[%s170 + $0x18] sm:$0xf] %vm1092, %v1081
      %1100 = vst.msk [vmem:[%s170 + $0x1c] sm:$0xf] %vm1092, %v1083
      %vm1101 = vcmask 1043712
      %1102 = vst.msk [vmem:[%s170] sm:$0xf] %vm1101, 0
      %1103 = vst.msk [vmem:[%s170 + $0x4] sm:$0xf] %vm1101, 0
      %1104 = vst.msk [vmem:[%s170 + $0x8] sm:$0xf] %vm1101, 0
      %1105 = vst.msk [vmem:[%s170 + $0xc] sm:$0xf] %vm1101, 0
      %1106 = vst.msk [vmem:[%s170 + $0x10] sm:$0xf] %vm1101, 0
      %1107 = vst.msk [vmem:[%s170 + $0x14] sm:$0xf] %vm1101, 0
      %1108 = vst.msk [vmem:[%s170 + $0x18] sm:$0xf] %vm1101, 0
      %1109 = vst.msk [vmem:[%s170 + $0x1c] sm:$0xf] %vm1101, 0
      %p1110 = scmp.lt.s32.totalorder %s14, 1
      %s1111 = scalar_select %p1110, %s14, 1
      %s1112 = smul.addr %s1111, 8
      %s1113 = smul.addr %s1112, 4
      %s1114 = scalar_lea.vmem %s3, %s1113
      // Predicated region
      $region33: #{fwd.6} parent=31 // pred_check
        %p1115 = pneg %p100
      $region34: #{fwd.6} parent=31 // pred_check_branch
        %1117 = sbr.rel (%p1115) target = $region36
      $region35: #{fwd.6} parent=31 // pred_region
        _
      $region36: #{fwd.6} parent=31 // pred_fallthru
        _
    $region32: #{fwd.6} parent=5 // pred_fallthru
      _
    %p1118 = scmp.le.s32.totalorder 2, %s9
    // Predicated region
    $region37: #{fwd.6} parent=5 // pred_check
      %p1119 = pneg %p1118
    $region38: #{fwd.6} parent=5 // pred_check_branch
      %1121 = sbr.rel (%p1119) target = $region40
    $region39: #{fwd.6} parent=5 // pred_region
      %s1122 = ssub.s32 %s9, 2
      // Predicated region
      $region41: #{fwd.6} parent=39 // pred_check
        %p1123 = pneg %p106
      $region42: #{fwd.6} parent=39 // pred_check_branch
        %1125 = sbr.rel (%p1123) target = $region44
      $region43: #{fwd.6} parent=39 // pred_region
        %p1126 = scmp.lt.s32.totalorder %s15, 1
        %s1127 = scalar_select %p1126, %s15, 1
        %s1128 = smul.addr %s1127, 8
        %s1129 = smul.addr %s1128, 4
        %s1130 = scalar_lea.vmem %s3, %s1129
      $region44: #{fwd.6} parent=39 // pred_fallthru
        _
    $region40: #{fwd.6} parent=5 // pred_fallthru
      _
  $region6: #{fwd.6} parent=0 // loop_footer
    %s13 = sadd.s32 1, %s9
  $region7: #{fwd.6} parent=0 // loop_footer_branch
    %8 = sbr.rel target = $region3
  $region8: #{fwd.6} parent=0 // loop_exit
    _

// kernel: fwd.8
$region0: #{fwd.8}
  #allocation0 [shape = 'u32[]', space=smem, size = 0x4, offset = 0x4, fixed_abs, tag = 'smem constant byte address 0x4 - core index']
  #allocation1 [shape = 'u32[144,128]{1,0:T(1,128)}', space=vmem, size = 0x12000, scoped, tag = 'internal scratch']
  #allocation2 [shape = 'bf16[32,320]{1,0:T(16,128)(2,1)}', space=vmem, size = 0x6000, scoped, tag = 'scratch operand']
  %s0 = inlined_call_operand.vmem [shape: bf16[2,36,128], index: 0, kind: input, shape index: {}]
  %s1 = inlined_call_operand.vmem [shape: bf16[1,320,64], index: 1, kind: input, shape index: {}]
  %s2 = inlined_call_operand.vmem [shape: f32[1,128], index: 2, kind: input, shape index: {}]
  %s3 = inlined_call_operand.vmem [shape: bf16[2,32,128], index: 3, kind: output, shape index: {}]
  %s4 = sld [smem:[#allocation0]]
  $region45: #{fwd.8} parent=0
    _
  %s6 = ssub.s32 1, %s4
  %s7 = scalar_select 0, %s6, %s4
  loop: start=0, step=1, limit=4
  $region2: #{fwd.8} parent=0 // loop_pre_header
    _
  $region3: #{fwd.8} parent=0 // loop_header
    %s9 = sphi 0, %s13
    %p10 = scmp.ge.s32.totalorder %s9, 4
    %s19 = sphi 0, %s21
    %s22 = sphi 0, %s19
    %s23 = sphi 0, %s22
    %s39 = sphi 0, %s23
    %s43 = sphi 0, %s43
    %s45 = sphi 0, %s43
    %s46 = sphi 0, %s45
    %s60 = sphi 0, %s46
    %s64 = sphi 0, %s64
    %s66 = sphi 0, %s64
    %s67 = sphi 0, %s66
    %s81 = sphi 0, %s67
    %s87 = sphi 0, %s89
    %s90 = sphi 0, %s87
    %s91 = sphi 0, %s90
    %s107 = sphi 0, %s91
  $region4: #{fwd.8} parent=0 // loop_header_branch
    %12 = sbr.rel (%p10) target = $region8
  $region5: #{fwd.8} parent=0 // loop_body
    %s14 = ssub.s32 %s9, 1
    %s15 = ssub.s32 %s9, 2
    %s16 = sadd.s32 %s9, 1
    %s17 = ssub.s32 %s9, %s16
    %p18 = scmp.eq.s32.totalorder %s17, 0
    %s20 = sadd.s32 %s19, 1
    %s21 = scalar_select %p18, %s19, %s20
    %p24 = pneg %p18
    %p25 = scmp.eq.s32.totalorder %s9, 1
    %p26 = por %p24, %p25
    %p27 = scmp.ne.s32.totalorder %s19, %s22
    %p28 = scmp.eq.s32.totalorder %s9, 0
    %p29 = por %p27, %p28
    %p30 = scmp.ne.s32.totalorder %s19, %s22
    %p31 = scmp.eq.s32.totalorder %s14, 1
    %p32 = por %p30, %p31
    %p33 = scmp.ne.s32.totalorder %s22, %s23
    %p34 = scmp.eq.s32.totalorder %s14, 0
    %p35 = por %p33, %p34
    %p36 = scmp.ne.s32.totalorder %s22, %s23
    %p37 = scmp.eq.s32.totalorder %s15, 1
    %p38 = por %p36, %p37
    %p40 = scmp.ne.s32.totalorder %s23, %s39
    %p41 = scmp.eq.s32.totalorder %s15, 0
    %p42 = por %p40, %p41
    %s44 = sadd.s32 %s43, 1
    %p47 = scmp.eq.s32.totalorder %s9, 1
    %p48 = scmp.ne.s32.totalorder %s43, %s45
    %p49 = scmp.eq.s32.totalorder %s9, 0
    %p50 = por %p48, %p49
    %p51 = scmp.ne.s32.totalorder %s43, %s45
    %p52 = scmp.eq.s32.totalorder %s14, 1
    %p53 = por %p51, %p52
    %p54 = scmp.ne.s32.totalorder %s45, %s46
    %p55 = scmp.eq.s32.totalorder %s14, 0
    %p56 = por %p54, %p55
    %p57 = scmp.ne.s32.totalorder %s45, %s46
    %p58 = scmp.eq.s32.totalorder %s15, 1
    %p59 = por %p57, %p58
    %p61 = scmp.ne.s32.totalorder %s46, %s60
    %p62 = scmp.eq.s32.totalorder %s15, 0
    %p63 = por %p61, %p62
    %s65 = sadd.s32 %s64, 1
    %p68 = scmp.eq.s32.totalorder %s9, 1
    %p69 = scmp.ne.s32.totalorder %s64, %s66
    %p70 = scmp.eq.s32.totalorder %s9, 0
    %p71 = por %p69, %p70
    %p72 = scmp.ne.s32.totalorder %s64, %s66
    %p73 = scmp.eq.s32.totalorder %s14, 1
    %p74 = por %p72, %p73
    %p75 = scmp.ne.s32.totalorder %s66, %s67
    %p76 = scmp.eq.s32.totalorder %s14, 0
    %p77 = por %p75, %p76
    %p78 = scmp.ne.s32.totalorder %s66, %s67
    %p79 = scmp.eq.s32.totalorder %s15, 1
    %p80 = por %p78, %p79
    %p82 = scmp.ne.s32.totalorder %s67, %s81
    %p83 = scmp.eq.s32.totalorder %s15, 0
    %p84 = por %p82, %p83
    %s85 = ssub.s32 %s9, %s16
    %p86 = scmp.eq.s32.totalorder %s85, 0
    %s88 = sadd.s32 %s87, 1
    %s89 = scalar_select %p86, %s87, %s88
    %p92 = pneg %p86
    %p93 = scmp.eq.s32.totalorder %s9, 1
    %p94 = por %p92, %p93
    %p95 = scmp.ne.s32.totalorder %s87, %s90
    %p96 = scmp.eq.s32.totalorder %s9, 0
    %p97 = por %p95, %p96
    %p98 = scmp.ne.s32.totalorder %s87, %s90
    %p99 = scmp.eq.s32.totalorder %s14, 1
    %p100 = por %p98, %p99
    %p101 = scmp.ne.s32.totalorder %s90, %s91
    %p102 = scmp.eq.s32.totalorder %s14, 0
    %p103 = por %p101, %p102
    %p104 = scmp.ne.s32.totalorder %s90, %s91
    %p105 = scmp.eq.s32.totalorder %s15, 1
    %p106 = por %p104, %p105
    %p108 = scmp.ne.s32.totalorder %s91, %s107
    %p109 = scmp.eq.s32.totalorder %s15, 0
    %p110 = por %p108, %p109
    %p111 = scmp.le.s32.totalorder 1, %s9
    %p112 = scmp.lt.s32.totalorder %s9, 3
    %p113 = pnand %p111, %p112
    %p114 = pneg %p113
    // Predicated region
    $region9: #{fwd.8} parent=5 // pred_check
      _
    $region10: #{fwd.8} parent=5 // pred_check_branch
      %116 = sbr.rel (%p113) target = $region12
    $region11: #{fwd.8} parent=5 // pred_region
      %s117 = ssub.s32 %s9, 1
      // Predicated region
      $region13: #{fwd.8} parent=11 // pred_check
        %p118 = pneg %p56
      $region14: #{fwd.8} parent=11 // pred_check_branch
        %120 = sbr.rel (%p118) target = $region16
      $region15: #{fwd.8} parent=11 // pred_region
        _
      $region16: #{fwd.8} parent=11 // pred_fallthru
        _
      // Predicated region
      $region17: #{fwd.8} parent=11 // pred_check
        %p121 = pneg %p77
      $region18: #{fwd.8} parent=11 // pred_check_branch
        %123 = sbr.rel (%p121) target = $region20
      $region19: #{fwd.8} parent=11 // pred_region
        _
      $region20: #{fwd.8} parent=11 // pred_fallthru
        _
    $region12: #{fwd.8} parent=5 // pred_fallthru
      _
    %p124 = scmp.lt.s32.totalorder %s9, 2
    // Predicated region
    $region21: #{fwd.8} parent=5 // pred_check
      %p125 = pneg %p124
    $region22: #{fwd.8} parent=5 // pred_check_branch
      %127 = sbr.rel (%p125) target = $region24
    $region23: #{fwd.8} parent=5 // pred_region
      // Predicated region
      $region25: #{fwd.8} parent=23 // pred_check
        %p128 = pneg %p29
      $region26: #{fwd.8} parent=23 // pred_check_branch
        %130 = sbr.rel (%p128) target = $region28
      $region27: #{fwd.8} parent=23 // pred_region
        %p131 = scmp.lt.s32.totalorder %s9, 1
        %s132 = scalar_select %p131, %s9, 1
        %s133 = smul.addr %s132, 5
        %s134 = smul.addr %s133, 4
        %s135 = scalar_lea.vmem %s0, %s134
      $region28: #{fwd.8} parent=23 // pred_fallthru
        _
    $region24: #{fwd.8} parent=5 // pred_fallthru
      _
    %p136 = scmp.le.s32.totalorder 1, %s9
    %p137 = scmp.lt.s32.totalorder %s9, 3
    %p138 = pnand %p136, %p137
    %p139 = pneg %p138
    // Predicated region
    $region29: #{fwd.8} parent=5 // pred_check
      _
    $region30: #{fwd.8} parent=5 // pred_check_branch
      %141 = sbr.rel (%p138) target = $region32
    $region31: #{fwd.8} parent=5 // pred_region
      %s142 = ssub.s32 %s9, 1
      %p143 = scmp.lt.s32.totalorder %s14, 1
      %s144 = scalar_select %p143, %s14, 1
      %s145 = smul.addr %s144, 5
      %s146 = smul.addr %s145, 4
      %s147 = scalar_lea.vmem %s0, %s146
      %p148 = pneg %p35
      %p149 = pneg %p32
      %p150 = pneg %p56
      %p151 = pneg %p53
      %p152 = pneg %p77
      %p153 = pneg %p74
      %p154 = pneg %p103
      %p155 = pneg %p100
      %p156 = scmp.lt.s32.totalorder %s14, 1
      %s157 = scalar_select %p156, %s14, 1
      %s158 = smul.addr %s157, 4
      %s159 = smul.addr %s158, 4
      %s160 = scalar_lea.vmem %s3, %s159
      %p161 = scmp.lt.s32.totalorder %s14, 1
      %s162 = scalar_select %p161, %s14, 1
      %s163 = smul.addr %s162, 5
      %s164 = smul.addr %s163, 4
      %s165 = scalar_lea.vmem %s0, %s164
      %p166 = scmp.lt.s32.totalorder %s14, 1
      %s167 = scalar_select %p166, %s14, 1
      %s168 = smul.addr %s167, 4
      %s169 = smul.addr %s168, 4
      %s170 = scalar_lea.vmem %s3, %s169
      %v172 = vld [vmem:[%s2] sm:$0x1]
      %v173 = vld [vmem:[%s165] sm:$0xf]
      %v174 = vld [vmem:[%s165 + $0x4] sm:$0xf]
      %v175 = vld [vmem:[%s165 + $0x8] sm:$0xf]
      %v176 = vld [vmem:[%s165 + $0xc] sm:$0xf]
      %v181 = vunpack.c.l.b16 %v173
      %v182 = vunpack.c.l.b16 %v174
      %v183 = vunpack.c.l.b16 %v175
      %v184 = vunpack.c.l.b16 %v176
      %v185 = vpack.c.b16 %v182, %v181
      %v186 = vpack.c.b16 %v184, %v183
      %vm189 = vcmask 523264
      %190 = vst.msk [vmem:[#allocation2] sm:$0xff] %vm189, %v185
      %191 = vst.msk [vmem:[#allocation2 + $0x18] sm:$0xff] %vm189, %v186
      %v192 = vld [vmem:[%s165] sm:$0xf]
      %v193 = vld [vmem:[%s165 + $0x4] sm:$0xf]
      %v194 = vld [vmem:[%s165 + $0x8] sm:$0xf]
      %v195 = vld [vmem:[%s165 + $0xc] sm:$0xf]
      %v196 = vld [vmem:[%s165 + $0x10] sm:$0x1]
      %v202 = vunpack.c.l.b16 %v192
      %v203 = vunpack.c.l.b16 %v193
      %v204 = vunpack.c.l.b16 %v194
      %v205 = vunpack.c.l.b16 %v195
      %v206 = vunpack.c.l.b16 %v196
      %v207 = vpack.c.b16 %v203, %v202
      %v208 = vpack.c.b16 %v205, %v204
      %v209 = vpack.c.b16 %v206, %v206
      %vm210 = vsmask.f32 7424
      %v212 = vshrl.u32 %v207, 16
      %v214 = vshll.u32 %v207, 16
      %v216 = vrot.slane %v214, 1
      %v217 = vor.u32 %v212, %v216
      %v219 = vshll.u32 %v208, 16
      %v221 = vrot.slane %v219, 1
      %v222 = vsel %vm210, %v217, %v221
      %v223 = vshrl.u32 %v208, 16
      %v225 = vor.u32 %v223, %v221
      %v227 = vshll.u32 %v209, 16
      %v229 = vrot.slane %v227, 1
      %v230 = vsel %vm210, %v225, %v229
      %231 = vrot.lane.b32.xlu0 %v222, 64
      %v232 = vpop.permute.xlu0 %231
      %233 = vrot.lane.b32.xlu0 %v230, 64
      %v234 = vpop.permute.xlu0 %233
      %vm237 = vcmask 1048064
      %238 = vst.msk [vmem:[#allocation2] sm:$0xff] %vm237, %v232
      %239 = vst.msk [vmem:[#allocation2 + $0x18] sm:$0xff] %vm237, %v234
      %v240 = vld [vmem:[%s165] sm:$0xe]
      %v241 = vld [vmem:[%s165 + $0x4] sm:$0xf]
      %v242 = vld [vmem:[%s165 + $0x8] sm:$0xf]
      %v243 = vld [vmem:[%s165 + $0xc] sm:$0xf]
      %v244 = vld [vmem:[%s165 + $0x10] sm:$0x1]
      %v250 = vunpack.c.l.b16 %v240
      %v251 = vunpack.c.l.b16 %v241
      %v252 = vunpack.c.l.b16 %v242
      %v253 = vunpack.c.l.b16 %v243
      %v254 = vunpack.c.l.b16 %v244
      %v255 = vpack.c.b16 %v251, %v250
      %v256 = vpack.c.b16 %v253, %v252
      %v257 = vpack.c.b16 %v254, %v254
      %vm258 = vcmask 1046528
      %v259 = vrot.slane %v255, 1
      %v260 = vrot.slane %v256, 1
      %v261 = vsel %vm258, %v259, %v260
      %v262 = vrot.slane %v257, 1
      %v263 = vsel %vm258, %v260, %v262
      %266 = vst.msk [vmem:[#allocation2 + $0x8] sm:$0xff] %vm189, %v261
      %267 = vst.msk [vmem:[#allocation2 + $0x20] sm:$0xff] %vm189, %v263
      %v268 = vld [vmem:[%s165] sm:$0xe]
      %v269 = vld [vmem:[%s165 + $0x4] sm:$0xf]
      %v270 = vld [vmem:[%s165 + $0x8] sm:$0xf]
      %v271 = vld [vmem:[%s165 + $0xc] sm:$0xf]
      %v272 = vld [vmem:[%s165 + $0x10] sm:$0x3]
      %v278 = vunpack.c.l.b16 %v268
      %v279 = vunpack.c.l.b16 %v269
      %v280 = vunpack.c.l.b16 %v270
      %v281 = vunpack.c.l.b16 %v271
      %v282 = vunpack.c.l.b16 %v272
      %v283 = vpack.c.b16 %v279, %v278
      %v284 = vpack.c.b16 %v281, %v280
      %v285 = vpack.c.b16 %v282, %v282
      %vm286 = vsmask.f32 6400
      %v288 = vshrl.u32 %v283, 16
      %v290 = vrot.slane %v288, 1
      %v291 = vshll.u32 %v283, 16
      %v293 = vrot.slane %v291, 2
      %v294 = vor.u32 %v290, %v293
      %v296 = vshrl.u32 %v284, 16
      %v298 = vrot.slane %v296, 1
      %v299 = vshll.u32 %v284, 16
      %v301 = vrot.slane %v299, 2
      %v302 = vor.u32 %v298, %v301
      %v303 = vsel %vm286, %v294, %v302
      %v305 = vshrl.u32 %v285, 16
      %v307 = vrot.slane %v305, 1
      %v308 = vshll.u32 %v285, 16
      %v310 = vrot.slane %v308, 2
      %v311 = vor.u32 %v307, %v310
      %v312 = vsel %vm286, %v302, %v311
      %313 = vrot.lane.b32.xlu0 %v303, 64
      %v314 = vpop.permute.xlu0 %313
      %315 = vrot.lane.b32.xlu0 %v312, 64
      %v316 = vpop.permute.xlu0 %315
      %319 = vst.msk [vmem:[#allocation2 + $0x8] sm:$0xff] %vm237, %v314
      %320 = vst.msk [vmem:[#allocation2 + $0x20] sm:$0xff] %vm237, %v316
      %v321 = vld [vmem:[%s165] sm:$0xc]
      %v322 = vld [vmem:[%s165 + $0x4] sm:$0xf]
      %v323 = vld [vmem:[%s165 + $0x8] sm:$0xf]
      %v324 = vld [vmem:[%s165 + $0xc] sm:$0xf]
      %v325 = vld [vmem:[%s165 + $0x10] sm:$0x3]
      %v331 = vunpack.c.l.b16 %v321
      %v332 = vunpack.c.l.b16 %v322
      %v333 = vunpack.c.l.b16 %v323
      %v334 = vunpack.c.l.b16 %v324
      %v335 = vunpack.c.l.b16 %v325
      %v336 = vpack.c.b16 %v332, %v331
      %v337 = vpack.c.b16 %v334, %v333
      %v338 = vpack.c.b16 %v335, %v335
      %vm339 = vcmask 1045504
      %v340 = vrot.slane %v336, 2
      %v341 = vrot.slane %v337, 2
      %v342 = vsel %vm339, %v340, %v341
      %v343 = vrot.slane %v338, 2
      %v344 = vsel %vm339, %v341, %v343
      %347 = vst.msk [vmem:[#allocation2 + $0x10] sm:$0xff] %vm189, %v342
      %348 = vst.msk [vmem:[#allocation2 + $0x28] sm:$0xff] %vm189, %v344
      %v349 = vld [vmem:[#allocation2] sm:$0xff]
      %v350 = vld [vmem:[#allocation2 + $0x8] sm:$0xff]
      %v351 = vld [vmem:[#allocation2 + $0x10] sm:$0xff]
      %v352 = vld [vmem:[#allocation2 + $0x18] sm:$0xff]
      %v353 = vld [vmem:[#allocation2 + $0x20] sm:$0xff]
      %v354 = vld [vmem:[#allocation2 + $0x28] sm:$0xff]
      %v355 = vld [vmem:[%s1] sm:$0xf]
      %v356 = vld [vmem:[%s1 + $0x4] sm:$0xf]
      %v357 = vld [vmem:[%s1 + $0x8] sm:$0xf]
      %v358 = vld [vmem:[%s1 + $0xc] sm:$0xf]
      %v359 = vld [vmem:[%s1 + $0x10] sm:$0xf]
      %v360 = vld [vmem:[%s1 + $0x14] sm:$0xf]
      %v361 = vld [vmem:[%s1 + $0x18] sm:$0xf]
      %v362 = vld [vmem:[%s1 + $0x1c] sm:$0xf]
      %v363 = vld [vmem:[%s1 + $0x20] sm:$0xf]
      %v364 = vld [vmem:[%s1 + $0x24] sm:$0xf]
      %v365 = vld [vmem:[%s1 + $0x28] sm:$0xf]
      %v366 = vld [vmem:[%s1 + $0x2c] sm:$0xf]
      %v367 = vld [vmem:[%s1 + $0x30] sm:$0xf]
      %v368 = vld [vmem:[%s1 + $0x34] sm:$0xf]
      %v369 = vld [vmem:[%s1 + $0x38] sm:$0xf]
      %v370 = vld [vmem:[%s1 + $0x3c] sm:$0xf]
      %v371 = vld [vmem:[%s1 + $0x40] sm:$0xf]
      %v372 = vld [vmem:[%s1 + $0x44] sm:$0xf]
      %v373 = vld [vmem:[%s1 + $0x48] sm:$0xf]
      %v374 = vld [vmem:[%s1 + $0x4c] sm:$0xf]
      %v375 = vld [vmem:[%s1 + $0x50] sm:$0xf]
      %v376 = vld [vmem:[%s1 + $0x54] sm:$0xf]
      %v377 = vld [vmem:[%s1 + $0x58] sm:$0xf]
      %v378 = vld [vmem:[%s1 + $0x5c] sm:$0xf]
      %v379 = vld [vmem:[%s1 + $0x60] sm:$0xf]
      %v380 = vld [vmem:[%s1 + $0x64] sm:$0xf]
      %v381 = vld [vmem:[%s1 + $0x68] sm:$0xf]
      %v382 = vld [vmem:[%s1 + $0x6c] sm:$0xf]
      %v383 = vld [vmem:[%s1 + $0x70] sm:$0xf]
      %v384 = vld [vmem:[%s1 + $0x74] sm:$0xf]
      %v385 = vld [vmem:[%s1 + $0x78] sm:$0xf]
      %v386 = vld [vmem:[%s1 + $0x7c] sm:$0xf]
      %v387 = vld [vmem:[%s1 + $0x80] sm:$0xf]
      %v388 = vld [vmem:[%s1 + $0x84] sm:$0xf]
      %v389 = vld [vmem:[%s1 + $0x88] sm:$0xf]
      %v390 = vld [vmem:[%s1 + $0x8c] sm:$0xf]
      %v391 = vld [vmem:[%s1 + $0x90] sm:$0xf]
      %v392 = vld [vmem:[%s1 + $0x94] sm:$0xf]
      %v393 = vld [vmem:[%s1 + $0x98] sm:$0xf]
      %v394 = vld [vmem:[%s1 + $0x9c] sm:$0xf]
      %v396 = vlaneseq
      %v397 = vshrl.u32 %v396, 7
      %v398 = vsub.s32 0, %v397
      %v399 = vrot.slane %v172, %v398
      %v441 = vunpack.c.l.b16 %v355
      %v442 = vunpack.c.l.b16 %v356
      %v443 = vunpack.c.l.b16 %v357
      %v444 = vunpack.c.l.b16 %v358
      %v445 = vunpack.c.l.b16 %v359
      %v446 = vunpack.c.l.b16 %v360
      %v447 = vunpack.c.l.b16 %v361
      %v448 = vunpack.c.l.b16 %v362
      %v449 = vunpack.c.l.b16 %v363
      %v450 = vunpack.c.l.b16 %v364
      %v451 = vunpack.c.l.b16 %v365
      %v452 = vunpack.c.l.b16 %v366
      %v453 = vunpack.c.l.b16 %v367
      %v454 = vunpack.c.l.b16 %v368
      %v455 = vunpack.c.l.b16 %v369
      %v456 = vunpack.c.l.b16 %v370
      %v457 = vunpack.c.l.b16 %v371
      %v458 = vunpack.c.l.b16 %v372
      %v459 = vunpack.c.l.b16 %v373
      %v460 = vunpack.c.l.b16 %v374
      %v461 = vunpack.c.l.b16 %v375
      %v462 = vunpack.c.l.b16 %v376
      %v463 = vunpack.c.l.b16 %v377
      %v464 = vunpack.c.l.b16 %v378
      %v465 = vunpack.c.l.b16 %v379
      %v466 = vunpack.c.l.b16 %v380
      %v467 = vunpack.c.l.b16 %v381
      %v468 = vunpack.c.l.b16 %v382
      %v469 = vunpack.c.l.b16 %v383
      %v470 = vunpack.c.l.b16 %v384
      %v471 = vunpack.c.l.b16 %v385
      %v472 = vunpack.c.l.b16 %v386
      %v473 = vunpack.c.l.b16 %v387
      %v474 = vunpack.c.l.b16 %v388
      %v475 = vunpack.c.l.b16 %v389
      %v476 = vunpack.c.l.b16 %v390
      %v477 = vunpack.c.l.b16 %v391
      %v478 = vunpack.c.l.b16 %v392
      %v479 = vunpack.c.l.b16 %v393
      %v480 = vunpack.c.l.b16 %v394
      %v481 = vpack.c.b16 %v442, %v441
      %v482 = vpack.c.b16 %v444, %v443
      %v483 = vpack.c.b16 %v446, %v445
      %v484 = vpack.c.b16 %v448, %v447
      %v485 = vpack.c.b16 %v450, %v449
      %v486 = vpack.c.b16 %v452, %v451
      %v487 = vpack.c.b16 %v454, %v453
      %v488 = vpack.c.b16 %v456, %v455
      %v489 = vpack.c.b16 %v458, %v457
      %v490 = vpack.c.b16 %v460, %v459
      %v491 = vpack.c.b16 %v462, %v461
      %v492 = vpack.c.b16 %v464, %v463
      %v493 = vpack.c.b16 %v466, %v465
      %v494 = vpack.c.b16 %v468, %v467
      %v495 = vpack.c.b16 %v470, %v469
      %v496 = vpack.c.b16 %v472, %v471
      %v497 = vpack.c.b16 %v474, %v473
      %v498 = vpack.c.b16 %v476, %v475
      %v499 = vpack.c.b16 %v478, %v477
      %v500 = vpack.c.b16 %v480, %v479
      %v522 = vsel %vm189, %v351, 0
      %v525 = vsel %vm189, %v354, 0
      %527 = vmatprep.subr.bf16.mxu0 0
      %528 = vmatpush1.bf16.msra.mxu0 %v481
      %529 = vmatprep.subr.bf16.mxu0 0
      %530 = vmatpush1.bf16.msra.mxu0 %v482
      %531 = vmatprep.subr.bf16.mxu0 0
      %532 = vmatpush1.bf16.msra.mxu0 %v483
      %533 = vmatprep.subr.bf16.mxu0 0
      %534 = vmatpush1.bf16.msra.mxu0 %v484
      %535 = vmatprep.subr.bf16.mxu0 0
      %536 = vmatpush1.bf16.msra.mxu0 %v485
      %537 = vmatprep.subr.bf16.mxu0 0
      %538 = vmatpush1.bf16.msra.mxu0 %v486
      %539 = vmatprep.subr.bf16.mxu0 0
      %540 = vmatpush1.bf16.msra.mxu0 %v487
      %541 = vmatprep.subr.bf16.mxu0 0
      %542 = vmatpush1.bf16.msra.mxu0 %v488
      %543 = vmatprep.subr.bf16.mxu0 0
      %544 = vmatpush1.bf16.msra.mxu0 %v489
      %545 = vmatprep.subr.bf16.mxu0 0
      %546 = vmatpush1.bf16.msra.mxu0 %v490
      %547 = vmatprep.subr.bf16.mxu0 0
      %548 = vmatpush1.bf16.msra.mxu0 %v491
      %549 = vmatprep.subr.bf16.mxu0 0
      %550 = vmatpush1.bf16.msra.mxu0 %v492
      %551 = vmatprep.subr.bf16.mxu0 0
      %552 = vmatpush1.bf16.msra.mxu0 %v493
      %553 = vmatprep.subr.bf16.mxu0 0
      %554 = vmatpush1.bf16.msra.mxu0 %v494
      %555 = vmatprep.subr.bf16.mxu0 0
      %556 = vmatpush1.bf16.msra.mxu0 %v495
      %557 = vmatprep.subr.bf16.mxu0 0
      %558 = vmatpush1.bf16.msra.mxu0 %v496
      %559 = vmatprep.mubr.bf16.mxu0 %v350
      %560 = vmatmul.mubr.bf16.gmra.mrb[0].mxu0 %v349
      %v561 = vpop.f32.mrb[0].mxu0
      %v562 = vadd.f32 %v399, %v561
      %v563 = vpop.f32.mrb[0].mxu0
      %v564 = vpop.f32.mrb[0].mxu0
      %v565 = vadd.f32 %v399, %v564
      %v566 = vpop.f32.mrb[0].mxu0
      %567 = vmatprep.mubr.bf16.mxu0 %v353
      %568 = vmatmul.mubr.bf16.gmra.mrb[0].mxu0 %v352
      %v569 = vpop.f32.mrb[0].mxu0
      %v570 = vadd.f32 %v399, %v569
      %v571 = vpop.f32.mrb[0].mxu0
      %v572 = vpop.f32.mrb[0].mxu0
      %v573 = vadd.f32 %v399, %v572
      %v574 = vpop.f32.mrb[0].mxu0
      %575 = vdwg.mxu0
      %576 = vmatprep.subr.bf16.mxu0 0
      %577 = vmatpush1.bf16.msra.mxu0 %v497
      %578 = vmatprep.subr.bf16.mxu0 0
      %579 = vmatpush1.bf16.msra.mxu0 %v498
      %580 = vmatprep.subr.bf16.mxu0 0
      %581 = vmatpush1.bf16.msra.mxu0 %v499
      %582 = vmatprep.subr.bf16.mxu0 0
      %583 = vmatpush1.bf16.msra.mxu0 %v500
      %584 = vmatprep.subr.bf16.mxu0 0
      %585 = vmatpush1.bf16.msra.mxu0 0
      %586 = vmatprep.subr.bf16.mxu0 0
      %587 = vmatpush1.bf16.msra.mxu0 0
      %588 = vmatprep.subr.bf16.mxu0 0
      %589 = vmatpush1.bf16.msra.mxu0 0
      %590 = vmatprep.subr.bf16.mxu0 0
      %591 = vmatpush1.bf16.msra.mxu0 0
      %592 = vmatprep.subr.bf16.mxu0 0
      %593 = vmatpush1.bf16.msra.mxu0 0
      %594 = vmatprep.subr.bf16.mxu0 0
      %595 = vmatpush1.bf16.msra.mxu0 0
      %596 = vmatprep.subr.bf16.mxu0 0
      %597 = vmatpush1.bf16.msra.mxu0 0
      %598 = vmatprep.subr.bf16.mxu0 0
      %599 = vmatpush1.bf16.msra.mxu0 0
      %600 = vmatprep.subr.bf16.mxu0 0
      %601 = vmatpush1.bf16.msra.mxu0 0
      %602 = vmatprep.subr.bf16.mxu0 0
      %603 = vmatpush1.bf16.msra.mxu0 0
      %604 = vmatprep.subr.bf16.mxu0 0
      %605 = vmatpush1.bf16.msra.mxu0 0
      %606 = vmatprep.subr.bf16.mxu0 0
      %607 = vmatpush1.bf16.msra.mxu0 0
      %608 = vmatprep.mubr.bf16.mxu0 0
      %609 = vmatmul.mubr.bf16.gmra.mrb[0].mxu0 %v522
      %v610 = vpop.f32.mrb[0].mxu0
      %v611 = vadd.f32 %v562, %v610
      %v612 = vpop.f32.mrb[0].mxu0
      %v613 = vpop.f32.mrb[0].mxu0
      %v614 = vadd.f32 %v565, %v613
      %v615 = vpop.f32.mrb[0].mxu0
      %616 = vmatprep.mubr.bf16.mxu0 0
      %617 = vmatmul.mubr.bf16.gmra.mrb[0].mxu0 %v525
      %v618 = vpop.f32.mrb[0].mxu0
      %v619 = vadd.f32 %v570, %v618
      %v620 = vpop.f32.mrb[0].mxu0
      %v621 = vpop.f32.mrb[0].mxu0
      %v622 = vadd.f32 %v573, %v621
      %v623 = vpop.f32.mrb[0].mxu0
      %624 = vdwg.mxu0
      %vm625 = vcmp.ge.f32.partialorder %v611, 0.0
      %vm626 = vcmp.ge.f32.partialorder %v614, 0.0
      %vm627 = vcmp.ge.f32.partialorder %v619, 0.0
      %vm628 = vcmp.ge.f32.partialorder %v622, 0.0
      %v629 = vmul.f32 %v611, 0.1
      %v630 = vmul.f32 %v614, 0.1
      %v631 = vmul.f32 %v619, 0.1
      %v632 = vmul.f32 %v622, 0.1
      %v633 = vsel %vm625, %v611, %v629
      %v634 = vsel %vm626, %v614, %v630
      %v635 = vsel %vm627, %v619, %v631
      %v636 = vsel %vm628, %v622, %v632
      %v637 = vpack.c.bf16 %v634, %v633
      %v638 = vpack.c.bf16 %v636, %v635
      %v641 = vunpack.c.l.b16 %v637
      %v642 = vunpack.c.h.b16 %v637
      %v643 = vunpack.c.l.b16 %v638
      %v644 = vunpack.c.h.b16 %v638
      %v645 = vpack.c.b16 %v641, %v641
      %v646 = vpack.c.b16 %v642, %v642
      %v647 = vpack.c.b16 %v643, %v643
      %v648 = vpack.c.b16 %v644, %v644
      %vm653 = vcmask 519168
      %654 = vst.msk [vmem:[%s170] sm:$0xf] %vm653, %v645
      %655 = vst.msk [vmem:[%s170 + $0x4] sm:$0xf] %vm653, %v646
      %656 = vst.msk [vmem:[%s170 + $0x8] sm:$0xf] %vm653, %v647
      %657 = vst.msk [vmem:[%s170 + $0xc] sm:$0xf] %vm653, %v648
      %vm658 = vcmask 1043968
      %659 = vst.msk [vmem:[%s170] sm:$0xf] %vm658, 0
      %660 = vst.msk [vmem:[%s170 + $0x4] sm:$0xf] %vm658, 0
      %661 = vst.msk [vmem:[%s170 + $0x8] sm:$0xf] %vm658, 0
      %662 = vst.msk [vmem:[%s170 + $0xc] sm:$0xf] %vm658, 0
      %p663 = scmp.lt.s32.totalorder %s14, 1
      %s664 = scalar_select %p663, %s14, 1
      %s665 = smul.addr %s664, 4
      %s666 = smul.addr %s665, 4
      %s667 = scalar_lea.vmem %s3, %s666
      // Predicated region
      $region33: #{fwd.8} parent=31 // pred_check
        %p668 = pneg %p100
      $region34: #{fwd.8} parent=31 // pred_check_branch
        %670 = sbr.rel (%p668) target = $region36
      $region35: #{fwd.8} parent=31 // pred_region
        _
      $region36: #{fwd.8} parent=31 // pred_fallthru
        _
    $region32: #{fwd.8} parent=5 // pred_fallthru
      _
    %p671 = scmp.le.s32.totalorder 2, %s9
    // Predicated region
    $region37: #{fwd.8} parent=5 // pred_check
      %p672 = pneg %p671
    $region38: #{fwd.8} parent=5 // pred_check_branch
      %674 = sbr.rel (%p672) target = $region40
    $region39: #{fwd.8} parent=5 // pred_region
      %s675 = ssub.s32 %s9, 2
      // Predicated region
      $region41: #{fwd.8} parent=39 // pred_check
        %p676 = pneg %p106
      $region42: #{fwd.8} parent=39 // pred_check_branch
        %678 = sbr.rel (%p676) target = $region44
      $region43: #{fwd.8} parent=39 // pred_region
        %p679 = scmp.lt.s32.totalorder %s15, 1
        %s680 = scalar_select %p679, %s15, 1
        %s681 = smul.addr %s680, 4
        %s682 = smul.addr %s681, 4
        %s683 = scalar_lea.vmem %s3, %s682
      $region44: #{fwd.8} parent=39 // pred_fallthru
        _
    $region40: #{fwd.8} parent=5 // pred_fallthru
      _
  $region6: #{fwd.8} parent=0 // loop_footer
    %s13 = sadd.s32 1, %s9
  $region7: #{fwd.8} parent=0 // loop_footer_branch
    %8 = sbr.rel target = $region3
  $region8: #{fwd.8} parent=0 // loop_exit
    _

// kernel: fwd.9
$region0: #{fwd.9}
  #allocation0 [shape = 'u32[]', space=smem, size = 0x4, offset = 0x4, fixed_abs, tag = 'smem constant byte address 0x4 - core index']
  #allocation1 [shape = 'u32[144,128]{1,0:T(1,128)}', space=vmem, size = 0x12000, scoped, tag = 'internal scratch']
  #allocation2 [shape = 'bf16[32,192]{1,0:T(16,128)(2,1)}', space=vmem, size = 0x4000, scoped, tag = 'scratch operand']
  %s0 = inlined_call_operand.vmem [shape: bf16[2,34,128], index: 0, kind: input, shape index: {}]
  %s1 = inlined_call_operand.vmem [shape: bf16[1,192,1], index: 1, kind: input, shape index: {}]
  %s2 = inlined_call_operand.vmem [shape: f32[1,128], index: 2, kind: input, shape index: {}]
  %s3 = inlined_call_operand.vmem [shape: f32[2,32,128], index: 3, kind: output, shape index: {}]
  %s4 = sld [smem:[#allocation0]]
  $region45: #{fwd.9} parent=0
    _
  %s6 = ssub.s32 1, %s4
  %s7 = scalar_select 0, %s6, %s4
  loop: start=0, step=1, limit=4
  $region2: #{fwd.9} parent=0 // loop_pre_header
    _
  $region3: #{fwd.9} parent=0 // loop_header
    %s9 = sphi 0, %s13
    %p10 = scmp.ge.s32.totalorder %s9, 4
    %s19 = sphi 0, %s21
    %s22 = sphi 0, %s19
    %s23 = sphi 0, %s22
    %s39 = sphi 0, %s23
    %s43 = sphi 0, %s43
    %s45 = sphi 0, %s43
    %s46 = sphi 0, %s45
    %s60 = sphi 0, %s46
    %s64 = sphi 0, %s64
    %s66 = sphi 0, %s64
    %s67 = sphi 0, %s66
    %s81 = sphi 0, %s67
    %s87 = sphi 0, %s89
    %s90 = sphi 0, %s87
    %s91 = sphi 0, %s90
    %s107 = sphi 0, %s91
  $region4: #{fwd.9} parent=0 // loop_header_branch
    %12 = sbr.rel (%p10) target = $region8
  $region5: #{fwd.9} parent=0 // loop_body
    %s14 = ssub.s32 %s9, 1
    %s15 = ssub.s32 %s9, 2
    %s16 = sadd.s32 %s9, 1
    %s17 = ssub.s32 %s9, %s16
    %p18 = scmp.eq.s32.totalorder %s17, 0
    %s20 = sadd.s32 %s19, 1
    %s21 = scalar_select %p18, %s19, %s20
    %p24 = pneg %p18
    %p25 = scmp.eq.s32.totalorder %s9, 1
    %p26 = por %p24, %p25
    %p27 = scmp.ne.s32.totalorder %s19, %s22
    %p28 = scmp.eq.s32.totalorder %s9, 0
    %p29 = por %p27, %p28
    %p30 = scmp.ne.s32.totalorder %s19, %s22
    %p31 = scmp.eq.s32.totalorder %s14, 1
    %p32 = por %p30, %p31
    %p33 = scmp.ne.s32.totalorder %s22, %s23
    %p34 = scmp.eq.s32.totalorder %s14, 0
    %p35 = por %p33, %p34
    %p36 = scmp.ne.s32.totalorder %s22, %s23
    %p37 = scmp.eq.s32.totalorder %s15, 1
    %p38 = por %p36, %p37
    %p40 = scmp.ne.s32.totalorder %s23, %s39
    %p41 = scmp.eq.s32.totalorder %s15, 0
    %p42 = por %p40, %p41
    %s44 = sadd.s32 %s43, 1
    %p47 = scmp.eq.s32.totalorder %s9, 1
    %p48 = scmp.ne.s32.totalorder %s43, %s45
    %p49 = scmp.eq.s32.totalorder %s9, 0
    %p50 = por %p48, %p49
    %p51 = scmp.ne.s32.totalorder %s43, %s45
    %p52 = scmp.eq.s32.totalorder %s14, 1
    %p53 = por %p51, %p52
    %p54 = scmp.ne.s32.totalorder %s45, %s46
    %p55 = scmp.eq.s32.totalorder %s14, 0
    %p56 = por %p54, %p55
    %p57 = scmp.ne.s32.totalorder %s45, %s46
    %p58 = scmp.eq.s32.totalorder %s15, 1
    %p59 = por %p57, %p58
    %p61 = scmp.ne.s32.totalorder %s46, %s60
    %p62 = scmp.eq.s32.totalorder %s15, 0
    %p63 = por %p61, %p62
    %s65 = sadd.s32 %s64, 1
    %p68 = scmp.eq.s32.totalorder %s9, 1
    %p69 = scmp.ne.s32.totalorder %s64, %s66
    %p70 = scmp.eq.s32.totalorder %s9, 0
    %p71 = por %p69, %p70
    %p72 = scmp.ne.s32.totalorder %s64, %s66
    %p73 = scmp.eq.s32.totalorder %s14, 1
    %p74 = por %p72, %p73
    %p75 = scmp.ne.s32.totalorder %s66, %s67
    %p76 = scmp.eq.s32.totalorder %s14, 0
    %p77 = por %p75, %p76
    %p78 = scmp.ne.s32.totalorder %s66, %s67
    %p79 = scmp.eq.s32.totalorder %s15, 1
    %p80 = por %p78, %p79
    %p82 = scmp.ne.s32.totalorder %s67, %s81
    %p83 = scmp.eq.s32.totalorder %s15, 0
    %p84 = por %p82, %p83
    %s85 = ssub.s32 %s9, %s16
    %p86 = scmp.eq.s32.totalorder %s85, 0
    %s88 = sadd.s32 %s87, 1
    %s89 = scalar_select %p86, %s87, %s88
    %p92 = pneg %p86
    %p93 = scmp.eq.s32.totalorder %s9, 1
    %p94 = por %p92, %p93
    %p95 = scmp.ne.s32.totalorder %s87, %s90
    %p96 = scmp.eq.s32.totalorder %s9, 0
    %p97 = por %p95, %p96
    %p98 = scmp.ne.s32.totalorder %s87, %s90
    %p99 = scmp.eq.s32.totalorder %s14, 1
    %p100 = por %p98, %p99
    %p101 = scmp.ne.s32.totalorder %s90, %s91
    %p102 = scmp.eq.s32.totalorder %s14, 0
    %p103 = por %p101, %p102
    %p104 = scmp.ne.s32.totalorder %s90, %s91
    %p105 = scmp.eq.s32.totalorder %s15, 1
    %p106 = por %p104, %p105
    %p108 = scmp.ne.s32.totalorder %s91, %s107
    %p109 = scmp.eq.s32.totalorder %s15, 0
    %p110 = por %p108, %p109
    %p111 = scmp.le.s32.totalorder 1, %s9
    %p112 = scmp.lt.s32.totalorder %s9, 3
    %p113 = pnand %p111, %p112
    %p114 = pneg %p113
    // Predicated region
    $region9: #{fwd.9} parent=5 // pred_check
      _
    $region10: #{fwd.9} parent=5 // pred_check_branch
      %116 = sbr.rel (%p113) target = $region12
    $region11: #{fwd.9} parent=5 // pred_region
      %s117 = ssub.s32 %s9, 1
      // Predicated region
      $region13: #{fwd.9} parent=11 // pred_check
        %p118 = pneg %p56
      $region14: #{fwd.9} parent=11 // pred_check_branch
        %120 = sbr.rel (%p118) target = $region16
      $region15: #{fwd.9} parent=11 // pred_region
        _
      $region16: #{fwd.9} parent=11 // pred_fallthru
        _
      // Predicated region
      $region17: #{fwd.9} parent=11 // pred_check
        %p121 = pneg %p77
      $region18: #{fwd.9} parent=11 // pred_check_branch
        %123 = sbr.rel (%p121) target = $region20
      $region19: #{fwd.9} parent=11 // pred_region
        _
      $region20: #{fwd.9} parent=11 // pred_fallthru
        _
    $region12: #{fwd.9} parent=5 // pred_fallthru
      _
    %p124 = scmp.lt.s32.totalorder %s9, 2
    // Predicated region
    $region21: #{fwd.9} parent=5 // pred_check
      %p125 = pneg %p124
    $region22: #{fwd.9} parent=5 // pred_check_branch
      %127 = sbr.rel (%p125) target = $region24
    $region23: #{fwd.9} parent=5 // pred_region
      // Predicated region
      $region25: #{fwd.9} parent=23 // pred_check
        %p128 = pneg %p29
      $region26: #{fwd.9} parent=23 // pred_check_branch
        %130 = sbr.rel (%p128) target = $region28
      $region27: #{fwd.9} parent=23 // pred_region
        %p131 = scmp.lt.s32.totalorder %s9, 1
        %s132 = scalar_select %p131, %s9, 1
        %s133 = smul.addr %s132, 5
        %s134 = smul.addr %s133, 4
        %s135 = scalar_lea.vmem %s0, %s134
      $region28: #{fwd.9} parent=23 // pred_fallthru
        _
    $region24: #{fwd.9} parent=5 // pred_fallthru
      _
    %p136 = scmp.le.s32.totalorder 1, %s9
    %p137 = scmp.lt.s32.totalorder %s9, 3
    %p138 = pnand %p136, %p137
    %p139 = pneg %p138
    // Predicated region
    $region29: #{fwd.9} parent=5 // pred_check
      _
    $region30: #{fwd.9} parent=5 // pred_check_branch
      %141 = sbr.rel (%p138) target = $region32
    $region31: #{fwd.9} parent=5 // pred_region
      %s142 = ssub.s32 %s9, 1
      %p143 = scmp.lt.s32.totalorder %s14, 1
      %s144 = scalar_select %p143, %s14, 1
      %s145 = smul.addr %s144, 5
      %s146 = smul.addr %s145, 4
      %s147 = scalar_lea.vmem %s0, %s146
      %p148 = pneg %p35
      %p149 = pneg %p32
      %p150 = pneg %p56
      %p151 = pneg %p53
      %p152 = pneg %p77
      %p153 = pneg %p74
      %p154 = pneg %p103
      %p155 = pneg %p100
      %p156 = scmp.lt.s32.totalorder %s14, 1
      %s157 = scalar_select %p156, %s14, 1
      %s158 = smul.addr %s157, 4
      %s159 = smul.addr %s158, 8
      %s160 = scalar_lea.vmem %s3, %s159
      %p161 = scmp.lt.s32.totalorder %s14, 1
      %s162 = scalar_select %p161, %s14, 1
      %s163 = smul.addr %s162, 5
      %s164 = smul.addr %s163, 4
      %s165 = scalar_lea.vmem %s0, %s164
      %p166 = scmp.lt.s32.totalorder %s14, 1
      %s167 = scalar_select %p166, %s14, 1
      %s168 = smul.addr %s167, 4
      %s169 = smul.addr %s168, 8
      %s170 = scalar_lea.vmem %s3, %s169
      %v172 = vld [vmem:[%s2] sm:$0x1]
      %v173 = vld [vmem:[%s165] sm:$0xf]
      %v174 = vld [vmem:[%s165 + $0x4] sm:$0xf]
      %v175 = vld [vmem:[%s165 + $0x8] sm:$0xf]
      %v176 = vld [vmem:[%s165 + $0xc] sm:$0xf]
      %v181 = vunpack.c.l.b16 %v173
      %v182 = vunpack.c.l.b16 %v174
      %v183 = vunpack.c.l.b16 %v175
      %v184 = vunpack.c.l.b16 %v176
      %v185 = vpack.c.b16 %v182, %v181
      %v186 = vpack.c.b16 %v184, %v183
      %vm189 = vcmask 523264
      %190 = vst.msk [vmem:[#allocation2] sm:$0xff] %vm189, %v185
      %191 = vst.msk [vmem:[#allocation2 + $0x10] sm:$0xff] %vm189, %v186
      %v192 = vld [vmem:[%s165] sm:$0xf]
      %v193 = vld [vmem:[%s165 + $0x4] sm:$0xf]
      %v194 = vld [vmem:[%s165 + $0x8] sm:$0xf]
      %v195 = vld [vmem:[%s165 + $0xc] sm:$0xf]
      %v196 = vld [vmem:[%s165 + $0x10] sm:$0x1]
      %v202 = vunpack.c.l.b16 %v192
      %v203 = vunpack.c.l.b16 %v193
      %v204 = vunpack.c.l.b16 %v194
      %v205 = vunpack.c.l.b16 %v195
      %v206 = vunpack.c.l.b16 %v196
      %v207 = vpack.c.b16 %v203, %v202
      %v208 = vpack.c.b16 %v205, %v204
      %v209 = vpack.c.b16 %v206, %v206
      %vm210 = vsmask.f32 7424
      %v212 = vshrl.u32 %v207, 16
      %v214 = vshll.u32 %v207, 16
      %v216 = vrot.slane %v214, 1
      %v217 = vor.u32 %v212, %v216
      %v219 = vshll.u32 %v208, 16
      %v221 = vrot.slane %v219, 1
      %v222 = vsel %vm210, %v217, %v221
      %v223 = vshrl.u32 %v208, 16
      %v225 = vor.u32 %v223, %v221
      %v227 = vshll.u32 %v209, 16
      %v229 = vrot.slane %v227, 1
      %v230 = vsel %vm210, %v225, %v229
      %231 = vrot.lane.b32.xlu0 %v222, 64
      %v232 = vpop.permute.xlu0 %231
      %233 = vrot.lane.b32.xlu0 %v230, 64
      %v234 = vpop.permute.xlu0 %233
      %vm237 = vcmask 1048064
      %238 = vst.msk [vmem:[#allocation2] sm:$0xff] %vm237, %v232
      %239 = vst.msk [vmem:[#allocation2 + $0x10] sm:$0xff] %vm237, %v234
      %v240 = vld [vmem:[%s165] sm:$0xe]
      %v241 = vld [vmem:[%s165 + $0x4] sm:$0xf]
      %v242 = vld [vmem:[%s165 + $0x8] sm:$0xf]
      %v243 = vld [vmem:[%s165 + $0xc] sm:$0xf]
      %v244 = vld [vmem:[%s165 + $0x10] sm:$0x1]
      %v250 = vunpack.c.l.b16 %v240
      %v251 = vunpack.c.l.b16 %v241
      %v252 = vunpack.c.l.b16 %v242
      %v253 = vunpack.c.l.b16 %v243
      %v254 = vunpack.c.l.b16 %v244
      %v255 = vpack.c.b16 %v251, %v250
      %v256 = vpack.c.b16 %v253, %v252
      %v257 = vpack.c.b16 %v254, %v254
      %vm258 = vcmask 1046528
      %v259 = vrot.slane %v255, 1
      %v260 = vrot.slane %v256, 1
      %v261 = vsel %vm258, %v259, %v260
      %v262 = vrot.slane %v257, 1
      %v263 = vsel %vm258, %v260, %v262
      %266 = vst.msk [vmem:[#allocation2 + $0x8] sm:$0xff] %vm189, %v261
      %267 = vst.msk [vmem:[#allocation2 + $0x18] sm:$0xff] %vm189, %v263
      %v268 = vld [vmem:[#allocation2] sm:$0xff]
      %v269 = vld [vmem:[#allocation2 + $0x8] sm:$0xff]
      %v270 = vld [vmem:[#allocation2 + $0x10] sm:$0xff]
      %v271 = vld [vmem:[#allocation2 + $0x18] sm:$0xff]
      %v272 = vld [vmem:[%s1] sm:$0xf]
      %v273 = vld [vmem:[%s1 + $0x4] sm:$0xf]
      %v274 = vld [vmem:[%s1 + $0x8] sm:$0xf]
      %v275 = vld [vmem:[%s1 + $0xc] sm:$0xf]
      %v276 = vld [vmem:[%s1 + $0x10] sm:$0xf]
      %v277 = vld [vmem:[%s1 + $0x14] sm:$0xf]
      %v278 = vld [vmem:[%s1 + $0x18] sm:$0xf]
      %v279 = vld [vmem:[%s1 + $0x1c] sm:$0xf]
      %v280 = vld [vmem:[%s1 + $0x20] sm:$0xf]
      %v281 = vld [vmem:[%s1 + $0x24] sm:$0xf]
      %v282 = vld [vmem:[%s1 + $0x28] sm:$0xf]
      %v283 = vld [vmem:[%s1 + $0x2c] sm:$0xf]
      %v284 = vld [vmem:[%s1 + $0x30] sm:$0xf]
      %v285 = vld [vmem:[%s1 + $0x34] sm:$0xf]
      %v286 = vld [vmem:[%s1 + $0x38] sm:$0xf]
      %v287 = vld [vmem:[%s1 + $0x3c] sm:$0xf]
      %v288 = vld [vmem:[%s1 + $0x40] sm:$0xf]
      %v289 = vld [vmem:[%s1 + $0x44] sm:$0xf]
      %v290 = vld [vmem:[%s1 + $0x48] sm:$0xf]
      %v291 = vld [vmem:[%s1 + $0x4c] sm:$0xf]
      %v292 = vld [vmem:[%s1 + $0x50] sm:$0xf]
      %v293 = vld [vmem:[%s1 + $0x54] sm:$0xf]
      %v294 = vld [vmem:[%s1 + $0x58] sm:$0xf]
      %v295 = vld [vmem:[%s1 + $0x5c] sm:$0xf]
      %v297 = vlaneseq
      %v298 = vshrl.u32 %v297, 7
      %v299 = vsub.s32 0, %v298
      %v300 = vrot.slane %v172, %v299
      %v326 = vunpack.c.l.b16 %v272
      %v327 = vunpack.c.l.b16 %v273
      %v328 = vunpack.c.l.b16 %v274
      %v329 = vunpack.c.l.b16 %v275
      %v330 = vunpack.c.l.b16 %v276
      %v331 = vunpack.c.l.b16 %v277
      %v332 = vunpack.c.l.b16 %v278
      %v333 = vunpack.c.l.b16 %v279
      %v334 = vunpack.c.l.b16 %v280
      %v335 = vunpack.c.l.b16 %v281
      %v336 = vunpack.c.l.b16 %v282
      %v337 = vunpack.c.l.b16 %v283
      %v338 = vunpack.c.l.b16 %v284
      %v339 = vunpack.c.l.b16 %v285
      %v340 = vunpack.c.l.b16 %v286
      %v341 = vunpack.c.l.b16 %v287
      %v342 = vunpack.c.l.b16 %v288
      %v343 = vunpack.c.l.b16 %v289
      %v344 = vunpack.c.l.b16 %v290
      %v345 = vunpack.c.l.b16 %v291
      %v346 = vunpack.c.l.b16 %v292
      %v347 = vunpack.c.l.b16 %v293
      %v348 = vunpack.c.l.b16 %v294
      %v349 = vunpack.c.l.b16 %v295
      %v350 = vpack.c.b16 %v327, %v326
      %v351 = vpack.c.b16 %v329, %v328
      %v352 = vpack.c.b16 %v331, %v330
      %v353 = vpack.c.b16 %v333, %v332
      %v354 = vpack.c.b16 %v335, %v334
      %v355 = vpack.c.b16 %v337, %v336
      %v356 = vpack.c.b16 %v339, %v338
      %v357 = vpack.c.b16 %v341, %v340
      %v358 = vpack.c.b16 %v343, %v342
      %v359 = vpack.c.b16 %v345, %v344
      %v360 = vpack.c.b16 %v347, %v346
      %v361 = vpack.c.b16 %v349, %v348
      %v375 = vsel %vm189, %v269, 0
      %v378 = vsel %vm189, %v271, 0
      %380 = vmatprep.subr.bf16.mxu0 0
      %381 = vmatpush1.bf16.msra.mxu0 %v350
      %382 = vmatprep.subr.bf16.mxu0 0
      %383 = vmatpush1.bf16.msra.mxu0 %v351
      %384 = vmatprep.subr.bf16.mxu0 0
      %385 = vmatpush1.bf16.msra.mxu0 %v352
      %386 = vmatprep.subr.bf16.mxu0 0
      %387 = vmatpush1.bf16.msra.mxu0 %v353
      %388 = vmatprep.subr.bf16.mxu0 0
      %389 = vmatpush1.bf16.msra.mxu0 %v354
      %390 = vmatprep.subr.bf16.mxu0 0
      %391 = vmatpush1.bf16.msra.mxu0 %v355
      %392 = vmatprep.subr.bf16.mxu0 0
      %393 = vmatpush1.bf16.msra.mxu0 %v356
      %394 = vmatprep.subr.bf16.mxu0 0
      %395 = vmatpush1.bf16.msra.mxu0 %v357
      %396 = vmatprep.subr.bf16.mxu0 0
      %397 = vmatpush1.bf16.msra.mxu0 %v358
      %398 = vmatprep.subr.bf16.mxu0 0
      %399 = vmatpush1.bf16.msra.mxu0 %v359
      %400 = vmatprep.subr.bf16.mxu0 0
      %401 = vmatpush1.bf16.msra.mxu0 %v360
      %402 = vmatprep.subr.bf16.mxu0 0
      %403 = vmatpush1.bf16.msra.mxu0 %v361
      %404 = vmatprep.subr.bf16.mxu0 0
      %405 = vmatpush1.bf16.msra.mxu0 0
      %406 = vmatprep.subr.bf16.mxu0 0
      %407 = vmatpush1.bf16.msra.mxu0 0
      %408 = vmatprep.subr.bf16.mxu0 0
      %409 = vmatpush1.bf16.msra.mxu0 0
      %410 = vmatprep.subr.bf16.mxu0 0
      %411 = vmatpush1.bf16.msra.mxu0 0
      %412 = vmatprep.mubr.bf16.mxu0 %v375
      %413 = vmatmul.mubr.bf16.gmra.mrb[0].mxu0 %v268
      %v414 = vpop.f32.mrb[0].mxu0
      %v415 = vadd.f32 %v300, %v414
      %v416 = vpop.f32.mrb[0].mxu0
      %v417 = vpop.f32.mrb[0].mxu0
      %v418 = vadd.f32 %v300, %v417
      %v419 = vpop.f32.mrb[0].mxu0
      %420 = vmatprep.mubr.bf16.mxu0 %v378
      %421 = vmatmul.mubr.bf16.gmra.mrb[0].mxu0 %v270
      %v422 = vpop.f32.mrb[0].mxu0
      %v423 = vadd.f32 %v300, %v422
      %v424 = vpop.f32.mrb[0].mxu0
      %v425 = vpop.f32.mrb[0].mxu0
      %v426 = vadd.f32 %v300, %v425
      %v427 = vpop.f32.mrb[0].mxu0
      %428 = vdwg.mxu0
      %vm429 = vcmask 7168
      %430 = vst.msk [vmem:[%s170] sm:$0xff] %vm429, %v415
      %431 = vst.msk [vmem:[%s170 + $0x8] sm:$0xff] %vm429, %v418
      %432 = vst.msk [vmem:[%s170 + $0x10] sm:$0xff] %vm429, %v423
      %433 = vst.msk [vmem:[%s170 + $0x18] sm:$0xff] %vm429, %v426
      %vm434 = vcmask 1047560
      %435 = vst.msk [vmem:[%s170] sm:$0xff] %vm434, 0.0
      %436 = vst.msk [vmem:[%s170 + $0x8] sm:$0xff] %vm434, 0.0
      %437 = vst.msk [vmem:[%s170 + $0x10] sm:$0xff] %vm434, 0.0
      %438 = vst.msk [vmem:[%s170 + $0x18] sm:$0xff] %vm434, 0.0
      %p439 = scmp.lt.s32.totalorder %s14, 1
      %s440 = scalar_select %p439, %s14, 1
      %s441 = smul.addr %s440, 4
      %s442 = smul.addr %s441, 8
      %s443 = scalar_lea.vmem %s3, %s442
      // Predicated region
      $region33: #{fwd.9} parent=31 // pred_check
        %p444 = pneg %p100
      $region34: #{fwd.9} parent=31 // pred_check_branch
        %446 = sbr.rel (%p444) target = $region36
      $region35: #{fwd.9} parent=31 // pred_region
        _
      $region36: #{fwd.9} parent=31 // pred_fallthru
        _
    $region32: #{fwd.9} parent=5 // pred_fallthru
      _
    %p447 = scmp.le.s32.totalorder 2, %s9
    // Predicated region
    $region37: #{fwd.9} parent=5 // pred_check
      %p448 = pneg %p447
    $region38: #{fwd.9} parent=5 // pred_check_branch
      %450 = sbr.rel (%p448) target = $region40
    $region39: #{fwd.9} parent=5 // pred_region
      %s451 = ssub.s32 %s9, 2
      // Predicated region
      $region41: #{fwd.9} parent=39 // pred_check
        %p452 = pneg %p106
      $region42: #{fwd.9} parent=39 // pred_check_branch
        %454 = sbr.rel (%p452) target = $region44
      $region43: #{fwd.9} parent=39 // pred_region
        %p455 = scmp.lt.s32.totalorder %s15, 1
        %s456 = scalar_select %p455, %s15, 1
        %s457 = smul.addr %s456, 4
        %s458 = smul.addr %s457, 8
        %s459 = scalar_lea.vmem %s3, %s458
      $region44: #{fwd.9} parent=39 // pred_fallthru
        _
    $region40: #{fwd.9} parent=5 // pred_fallthru
      _
  $region6: #{fwd.9} parent=0 // loop_footer
    %s13 = sadd.s32 1, %s9
  $region7: #{fwd.9} parent=0 // loop_footer_branch
    %8 = sbr.rel target = $region3
  $region8: #{fwd.9} parent=0 // loop_exit
    _

// kernel: fwd.7
$region0: #{fwd.7}
  #allocation0 [shape = 'u32[]', space=smem, size = 0x4, offset = 0x4, fixed_abs, tag = 'smem constant byte address 0x4 - core index']
  #allocation1 [shape = 'u32[144,128]{1,0:T(1,128)}', space=vmem, size = 0x12000, scoped, tag = 'internal scratch']
  #allocation2 [shape = 'bf16[32,64]{1,0:T(16,128)(2,1)}', space=vmem, size = 0x2000, scoped, tag = 'scratch operand']
  %s0 = inlined_call_operand.vmem [shape: bf16[2,35,256], index: 0, kind: input, shape index: {}]
  %s1 = inlined_call_operand.vmem [shape: bf16[4,64,16], index: 1, kind: input, shape index: {}]
  %s2 = inlined_call_operand.vmem [shape: f32[1,128], index: 2, kind: input, shape index: {}]
  %s3 = inlined_call_operand.vmem [shape: bf16[2,32,128], index: 3, kind: output, shape index: {}]
  %s4 = sld [smem:[#allocation0]]
  $region45: #{fwd.7} parent=0
    _
  %s6 = ssub.s32 1, %s4
  %s7 = scalar_select 0, %s6, %s4
  loop: start=0, step=1, limit=4
  $region2: #{fwd.7} parent=0 // loop_pre_header
    _
  $region3: #{fwd.7} parent=0 // loop_header
    %s9 = sphi 0, %s13
    %p10 = scmp.ge.s32.totalorder %s9, 4
    %s19 = sphi 0, %s21
    %s22 = sphi 0, %s19
    %s23 = sphi 0, %s22
    %s39 = sphi 0, %s23
    %s43 = sphi 0, %s43
    %s45 = sphi 0, %s43
    %s46 = sphi 0, %s45
    %s60 = sphi 0, %s46
    %s64 = sphi 0, %s64
    %s66 = sphi 0, %s64
    %s67 = sphi 0, %s66
    %s81 = sphi 0, %s67
    %s87 = sphi 0, %s89
    %s90 = sphi 0, %s87
    %s91 = sphi 0, %s90
    %s107 = sphi 0, %s91
  $region4: #{fwd.7} parent=0 // loop_header_branch
    %12 = sbr.rel (%p10) target = $region8
  $region5: #{fwd.7} parent=0 // loop_body
    %s14 = ssub.s32 %s9, 1
    %s15 = ssub.s32 %s9, 2
    %s16 = sadd.s32 %s9, 1
    %s17 = ssub.s32 %s9, %s16
    %p18 = scmp.eq.s32.totalorder %s17, 0
    %s20 = sadd.s32 %s19, 1
    %s21 = scalar_select %p18, %s19, %s20
    %p24 = pneg %p18
    %p25 = scmp.eq.s32.totalorder %s9, 1
    %p26 = por %p24, %p25
    %p27 = scmp.ne.s32.totalorder %s19, %s22
    %p28 = scmp.eq.s32.totalorder %s9, 0
    %p29 = por %p27, %p28
    %p30 = scmp.ne.s32.totalorder %s19, %s22
    %p31 = scmp.eq.s32.totalorder %s14, 1
    %p32 = por %p30, %p31
    %p33 = scmp.ne.s32.totalorder %s22, %s23
    %p34 = scmp.eq.s32.totalorder %s14, 0
    %p35 = por %p33, %p34
    %p36 = scmp.ne.s32.totalorder %s22, %s23
    %p37 = scmp.eq.s32.totalorder %s15, 1
    %p38 = por %p36, %p37
    %p40 = scmp.ne.s32.totalorder %s23, %s39
    %p41 = scmp.eq.s32.totalorder %s15, 0
    %p42 = por %p40, %p41
    %s44 = sadd.s32 %s43, 1
    %p47 = scmp.eq.s32.totalorder %s9, 1
    %p48 = scmp.ne.s32.totalorder %s43, %s45
    %p49 = scmp.eq.s32.totalorder %s9, 0
    %p50 = por %p48, %p49
    %p51 = scmp.ne.s32.totalorder %s43, %s45
    %p52 = scmp.eq.s32.totalorder %s14, 1
    %p53 = por %p51, %p52
    %p54 = scmp.ne.s32.totalorder %s45, %s46
    %p55 = scmp.eq.s32.totalorder %s14, 0
    %p56 = por %p54, %p55
    %p57 = scmp.ne.s32.totalorder %s45, %s46
    %p58 = scmp.eq.s32.totalorder %s15, 1
    %p59 = por %p57, %p58
    %p61 = scmp.ne.s32.totalorder %s46, %s60
    %p62 = scmp.eq.s32.totalorder %s15, 0
    %p63 = por %p61, %p62
    %s65 = sadd.s32 %s64, 1
    %p68 = scmp.eq.s32.totalorder %s9, 1
    %p69 = scmp.ne.s32.totalorder %s64, %s66
    %p70 = scmp.eq.s32.totalorder %s9, 0
    %p71 = por %p69, %p70
    %p72 = scmp.ne.s32.totalorder %s64, %s66
    %p73 = scmp.eq.s32.totalorder %s14, 1
    %p74 = por %p72, %p73
    %p75 = scmp.ne.s32.totalorder %s66, %s67
    %p76 = scmp.eq.s32.totalorder %s14, 0
    %p77 = por %p75, %p76
    %p78 = scmp.ne.s32.totalorder %s66, %s67
    %p79 = scmp.eq.s32.totalorder %s15, 1
    %p80 = por %p78, %p79
    %p82 = scmp.ne.s32.totalorder %s67, %s81
    %p83 = scmp.eq.s32.totalorder %s15, 0
    %p84 = por %p82, %p83
    %s85 = ssub.s32 %s9, %s16
    %p86 = scmp.eq.s32.totalorder %s85, 0
    %s88 = sadd.s32 %s87, 1
    %s89 = scalar_select %p86, %s87, %s88
    %p92 = pneg %p86
    %p93 = scmp.eq.s32.totalorder %s9, 1
    %p94 = por %p92, %p93
    %p95 = scmp.ne.s32.totalorder %s87, %s90
    %p96 = scmp.eq.s32.totalorder %s9, 0
    %p97 = por %p95, %p96
    %p98 = scmp.ne.s32.totalorder %s87, %s90
    %p99 = scmp.eq.s32.totalorder %s14, 1
    %p100 = por %p98, %p99
    %p101 = scmp.ne.s32.totalorder %s90, %s91
    %p102 = scmp.eq.s32.totalorder %s14, 0
    %p103 = por %p101, %p102
    %p104 = scmp.ne.s32.totalorder %s90, %s91
    %p105 = scmp.eq.s32.totalorder %s15, 1
    %p106 = por %p104, %p105
    %p108 = scmp.ne.s32.totalorder %s91, %s107
    %p109 = scmp.eq.s32.totalorder %s15, 0
    %p110 = por %p108, %p109
    %p111 = scmp.le.s32.totalorder 1, %s9
    %p112 = scmp.lt.s32.totalorder %s9, 3
    %p113 = pnand %p111, %p112
    %p114 = pneg %p113
    // Predicated region
    $region9: #{fwd.7} parent=5 // pred_check
      _
    $region10: #{fwd.7} parent=5 // pred_check_branch
      %116 = sbr.rel (%p113) target = $region12
    $region11: #{fwd.7} parent=5 // pred_region
      %s117 = ssub.s32 %s9, 1
      // Predicated region
      $region13: #{fwd.7} parent=11 // pred_check
        %p118 = pneg %p56
      $region14: #{fwd.7} parent=11 // pred_check_branch
        %120 = sbr.rel (%p118) target = $region16
      $region15: #{fwd.7} parent=11 // pred_region
        _
      $region16: #{fwd.7} parent=11 // pred_fallthru
        _
      // Predicated region
      $region17: #{fwd.7} parent=11 // pred_check
        %p121 = pneg %p77
      $region18: #{fwd.7} parent=11 // pred_check_branch
        %123 = sbr.rel (%p121) target = $region20
      $region19: #{fwd.7} parent=11 // pred_region
        _
      $region20: #{fwd.7} parent=11 // pred_fallthru
        _
    $region12: #{fwd.7} parent=5 // pred_fallthru
      _
    %p124 = scmp.lt.s32.totalorder %s9, 2
    // Predicated region
    $region21: #{fwd.7} parent=5 // pred_check
      %p125 = pneg %p124
    $region22: #{fwd.7} parent=5 // pred_check_branch
      %127 = sbr.rel (%p125) target = $region24
    $region23: #{fwd.7} parent=5 // pred_region
      // Predicated region
      $region25: #{fwd.7} parent=23 // pred_check
        %p128 = pneg %p29
      $region26: #{fwd.7} parent=23 // pred_check_branch
        %130 = sbr.rel (%p128) target = $region28
      $region27: #{fwd.7} parent=23 // pred_region
        %p131 = scmp.lt.s32.totalorder %s9, 1
        %s132 = scalar_select %p131, %s9, 1
        %s133 = smul.addr %s132, 10
        %s134 = smul.addr %s133, 4
        %s135 = scalar_lea.vmem %s0, %s134
      $region28: #{fwd.7} parent=23 // pred_fallthru
        _
    $region24: #{fwd.7} parent=5 // pred_fallthru
      _
    %p136 = scmp.le.s32.totalorder 1, %s9
    %p137 = scmp.lt.s32.totalorder %s9, 3
    %p138 = pnand %p136, %p137
    %p139 = pneg %p138
    // Predicated region
    $region29: #{fwd.7} parent=5 // pred_check
      _
    $region30: #{fwd.7} parent=5 // pred_check_branch
      %141 = sbr.rel (%p138) target = $region32
    $region31: #{fwd.7} parent=5 // pred_region
      %s142 = ssub.s32 %s9, 1
      %p143 = scmp.lt.s32.totalorder %s14, 1
      %s144 = scalar_select %p143, %s14, 1
      %s145 = smul.addr %s144, 10
      %s146 = smul.addr %s145, 4
      %s147 = scalar_lea.vmem %s0, %s146
      %p148 = pneg %p35
      %p149 = pneg %p32
      %p150 = pneg %p56
      %p151 = pneg %p53
      %p152 = pneg %p77
      %p153 = pneg %p74
      %p154 = pneg %p103
      %p155 = pneg %p100
      %p156 = scmp.lt.s32.totalorder %s14, 1
      %s157 = scalar_select %p156, %s14, 1
      %s158 = smul.addr %s157, 4
      %s159 = smul.addr %s158, 4
      %s160 = scalar_lea.vmem %s3, %s159
      %p161 = scmp.lt.s32.totalorder %s14, 1
      %s162 = scalar_select %p161, %s14, 1
      %s163 = smul.addr %s162, 10
      %s164 = smul.addr %s163, 4
      %s165 = scalar_lea.vmem %s0, %s164
      %p166 = scmp.lt.s32.totalorder %s14, 1
      %s167 = scalar_select %p166, %s14, 1
      %s168 = smul.addr %s167, 4
      %s169 = smul.addr %s168, 4
      %s170 = scalar_lea.vmem %s3, %s169
      %v172 = vld [vmem:[%s2] sm:$0x1]
      %v173 = vld [vmem:[%s165] sm:$0xf]
      %v174 = vld [vmem:[%s165 + $0x8] sm:$0xf]
      %v175 = vld [vmem:[%s165 + $0x10] sm:$0xf]
      %v176 = vld [vmem:[%s165 + $0x18] sm:$0xf]
      %v181 = vunpack.c.l.b16 %v173
      %v182 = vunpack.c.l.b16 %v174
      %v183 = vunpack.c.l.b16 %v175
      %v184 = vunpack.c.l.b16 %v176
      %v185 = vpack.c.b16 %v182, %v181
      %v186 = vpack.c.b16 %v184, %v183
      %vm189 = vcmask 130048
      %190 = vst.msk [vmem:[#allocation2] sm:$0xff] %vm189, %v185
      %191 = vst.msk [vmem:[#allocation2 + $0x8] sm:$0xff] %vm189, %v186
      %v192 = vld [vmem:[%s165] sm:$0xf]
      %v193 = vld [vmem:[%s165 + $0x8] sm:$0xf]
      %v194 = vld [vmem:[%s165 + $0x10] sm:$0xf]
      %v195 = vld [vmem:[%s165 + $0x18] sm:$0xf]
      %v196 = vld [vmem:[%s165 + $0x20] sm:$0x1]
      %v202 = vunpack.c.l.b16 %v192
      %v203 = vunpack.c.l.b16 %v193
      %v204 = vunpack.c.l.b16 %v194
      %v205 = vunpack.c.l.b16 %v195
      %v206 = vunpack.c.l.b16 %v196
      %v207 = vpack.c.b16 %v203, %v202
      %v208 = vpack.c.b16 %v205, %v204
      %v209 = vpack.c.b16 %v206, %v206
      %vm210 = vsmask.f32 7424
      %v212 = vshrl.u32 %v207, 16
      %v214 = vshll.u32 %v207, 16
      %v216 = vrot.slane %v214, 1
      %v217 = vor.u32 %v212, %v216
      %v219 = vshll.u32 %v208, 16
      %v221 = vrot.slane %v219, 1
      %v222 = vsel %vm210, %v217, %v221
      %v223 = vshrl.u32 %v208, 16
      %v225 = vor.u32 %v223, %v221
      %v227 = vshll.u32 %v209, 16
      %v229 = vrot.slane %v227, 1
      %v230 = vsel %vm210, %v225, %v229
      %231 = vrot.lane.b32.xlu0 %v222, 16
      %v232 = vpop.permute.xlu0 %231
      %233 = vrot.lane.b32.xlu0 %v230, 16
      %v234 = vpop.permute.xlu0 %233
      %vm237 = vcmask 261248
      %238 = vst.msk [vmem:[#allocation2] sm:$0xff] %vm237, %v232
      %239 = vst.msk [vmem:[#allocation2 + $0x8] sm:$0xff] %vm237, %v234
      %v240 = vld [vmem:[%s165] sm:$0xe]
      %v241 = vld [vmem:[%s165 + $0x8] sm:$0xf]
      %v242 = vld [vmem:[%s165 + $0x10] sm:$0xf]
      %v243 = vld [vmem:[%s165 + $0x18] sm:$0xf]
      %v244 = vld [vmem:[%s165 + $0x20] sm:$0x1]
      %v250 = vunpack.c.l.b16 %v240
      %v251 = vunpack.c.l.b16 %v241
      %v252 = vunpack.c.l.b16 %v242
      %v253 = vunpack.c.l.b16 %v243
      %v254 = vunpack.c.l.b16 %v244
      %v255 = vpack.c.b16 %v251, %v250
      %v256 = vpack.c.b16 %v253, %v252
      %v257 = vpack.c.b16 %v254, %v254
      %vm258 = vcmask 1046528
      %v259 = vrot.slane %v255, 1
      %v260 = vrot.slane %v256, 1
      %v261 = vsel %vm258, %v259, %v260
      %v262 = vrot.slane %v257, 1
      %v263 = vsel %vm258, %v260, %v262
      %264 = vrot.lane.b32.xlu0 %v261, 32
      %v265 = vpop.permute.xlu0 %264
      %266 = vrot.lane.b32.xlu0 %v263, 32
      %v267 = vpop.permute.xlu0 %266
      %vm270 = vcmask 392448
      %271 = vst.msk [vmem:[#allocation2] sm:$0xff] %vm270, %v265
      %272 = vst.msk [vmem:[#allocation2 + $0x8] sm:$0xff] %vm270, %v267
      %v273 = vld [vmem:[%s165] sm:$0xe]
      %v274 = vld [vmem:[%s165 + $0x8] sm:$0xf]
      %v275 = vld [vmem:[%s165 + $0x10] sm:$0xf]
      %v276 = vld [vmem:[%s165 + $0x18] sm:$0xf]
      %v277 = vld [vmem:[%s165 + $0x20] sm:$0x3]
      %v283 = vunpack.c.l.b16 %v273
      %v284 = vunpack.c.l.b16 %v274
      %v285 = vunpack.c.l.b16 %v275
      %v286 = vunpack.c.l.b16 %v276
      %v287 = vunpack.c.l.b16 %v277
      %v288 = vpack.c.b16 %v284, %v283
      %v289 = vpack.c.b16 %v286, %v285
      %v290 = vpack.c.b16 %v287, %v287
      %vm291 = vsmask.f32 6400
      %v293 = vshrl.u32 %v288, 16
      %v295 = vrot.slane %v293, 1
      %v296 = vshll.u32 %v288, 16
      %v298 = vrot.slane %v296, 2
      %v299 = vor.u32 %v295, %v298
      %v301 = vshrl.u32 %v289, 16
      %v303 = vrot.slane %v301, 1
      %v304 = vshll.u32 %v289, 16
      %v306 = vrot.slane %v304, 2
      %v307 = vor.u32 %v303, %v306
      %v308 = vsel %vm291, %v299, %v307
      %v310 = vshrl.u32 %v290, 16
      %v312 = vrot.slane %v310, 1
      %v313 = vshll.u32 %v290, 16
      %v315 = vrot.slane %v313, 2
      %v316 = vor.u32 %v312, %v315
      %v317 = vsel %vm291, %v307, %v316
      %318 = vrot.lane.b32.xlu0 %v308, 48
      %v319 = vpop.permute.xlu0 %318
      %320 = vrot.lane.b32.xlu0 %v317, 48
      %v321 = vpop.permute.xlu0 %320
      %vm324 = vcmask 523648
      %325 = vst.msk [vmem:[#allocation2] sm:$0xff] %vm324, %v319
      %326 = vst.msk [vmem:[#allocation2 + $0x8] sm:$0xff] %vm324, %v321
      %v327 = vld [vmem:[#allocation2] sm:$0xff]
      %v328 = vld [vmem:[#allocation2 + $0x8] sm:$0xff]
      %v329 = vld [vmem:[%s1] sm:$0xf]
      %v330 = vld [vmem:[%s1 + $0x4] sm:$0xf]
      %v331 = vld [vmem:[%s1 + $0x8] sm:$0xf]
      %v332 = vld [vmem:[%s1 + $0xc] sm:$0xf]
      %v333 = vld [vmem:[%s1 + $0x10] sm:$0xf]
      %v334 = vld [vmem:[%s1 + $0x14] sm:$0xf]
      %v335 = vld [vmem:[%s1 + $0x18] sm:$0xf]
      %v336 = vld [vmem:[%s1 + $0x1c] sm:$0xf]
      %v338 = vlaneseq
      %v339 = vshrl.u32 %v338, 7
      %v340 = vsub.s32 0, %v339
      %v341 = vrot.slane %v172, %v340
      %v351 = vunpack.c.l.b16 %v329
      %v352 = vunpack.c.l.b16 %v330
      %v353 = vunpack.c.l.b16 %v331
      %v354 = vunpack.c.l.b16 %v332
      %v355 = vunpack.c.l.b16 %v333
      %v356 = vunpack.c.l.b16 %v334
      %v357 = vunpack.c.l.b16 %v335
      %v358 = vunpack.c.l.b16 %v336
      %v359 = vpack.c.b16 %v352, %v351
      %v360 = vpack.c.b16 %v354, %v353
      %v361 = vpack.c.b16 %v356, %v355
      %v362 = vpack.c.b16 %v358, %v357
      %vm367 = vcmask 523264
      %v369 = vsel %vm367, %v327, 0
      %v372 = vsel %vm367, %v328, 0
      %374 = vmatprep.subr.bf16.mxu0 0
      %375 = vmatpush1.bf16.msra.mxu0 %v359
      %376 = vmatprep.subr.bf16.mxu0 0
      %377 = vmatpush1.bf16.msra.mxu0 %v360
      %378 = vmatprep.subr.bf16.mxu0 0
      %379 = vmatpush1.bf16.msra.mxu0 %v361
      %380 = vmatprep.subr.bf16.mxu0 0
      %381 = vmatpush1.bf16.msra.mxu0 %v362
      %382 = vmatprep.subr.bf16.mxu0 0
      %383 = vmatpush1.bf16.msra.mxu0 0
      %384 = vmatprep.subr.bf16.mxu0 0
      %385 = vmatpush1.bf16.msra.mxu0 0
      %386 = vmatprep.subr.bf16.mxu0 0
      %387 = vmatpush1.bf16.msra.mxu0 0
      %388 = vmatprep.subr.bf16.mxu0 0
      %389 = vmatpush1.bf16.msra.mxu0 0
      %390 = vmatprep.subr.bf16.mxu0 0
      %391 = vmatpush1.bf16.msra.mxu0 0
      %392 = vmatprep.subr.bf16.mxu0 0
      %393 = vmatpush1.bf16.msra.mxu0 0
      %394 = vmatprep.subr.bf16.mxu0 0
      %395 = vmatpush1.bf16.msra.mxu0 0
      %396 = vmatprep.subr.bf16.mxu0 0
      %397 = vmatpush1.bf16.msra.mxu0 0
      %398 = vmatprep.subr.bf16.mxu0 0
      %399 = vmatpush1.bf16.msra.mxu0 0
      %400 = vmatprep.subr.bf16.mxu0 0
      %401 = vmatpush1.bf16.msra.mxu0 0
      %402 = vmatprep.subr.bf16.mxu0 0
      %403 = vmatpush1.bf16.msra.mxu0 0
      %404 = vmatprep.subr.bf16.mxu0 0
      %405 = vmatpush1.bf16.msra.mxu0 0
      %406 = vmatprep.mubr.bf16.mxu0 0
      %407 = vmatmul.mubr.bf16.gmra.mrb[0].mxu0 %v369
      %v408 = vpop.f32.mrb[0].mxu0
      %v409 = vadd.f32 %v341, %v408
      %v410 = vpop.f32.mrb[0].mxu0
      %v411 = vpop.f32.mrb[0].mxu0
      %v412 = vadd.f32 %v341, %v411
      %v413 = vpop.f32.mrb[0].mxu0
      %414 = vmatprep.mubr.bf16.mxu0 0
      %415 = vmatmul.mubr.bf16.gmra.mrb[0].mxu0 %v372
      %v416 = vpop.f32.mrb[0].mxu0
      %v417 = vadd.f32 %v341, %v416
      %v418 = vpop.f32.mrb[0].mxu0
      %v419 = vpop.f32.mrb[0].mxu0
      %v420 = vadd.f32 %v341, %v419
      %v421 = vpop.f32.mrb[0].mxu0
      %422 = vdwg.mxu0
      %vm423 = vcmp.ge.f32.partialorder %v409, 0.0
      %vm424 = vcmp.ge.f32.partialorder %v412, 0.0
      %vm425 = vcmp.ge.f32.partialorder %v417, 0.0
      %vm426 = vcmp.ge.f32.partialorder %v420, 0.0
      %v427 = vmul.f32 %v409, 0.1
      %v428 = vmul.f32 %v412, 0.1
      %v429 = vmul.f32 %v417, 0.1
      %v430 = vmul.f32 %v420, 0.1
      %v431 = vsel %vm423, %v409, %v427
      %v432 = vsel %vm424, %v412, %v428
      %v433 = vsel %vm425, %v417, %v429
      %v434 = vsel %vm426, %v420, %v430
      %v435 = vpack.c.bf16 %v432, %v431
      %v436 = vpack.c.bf16 %v434, %v433
      %v439 = vunpack.c.l.b16 %v435
      %v440 = vunpack.c.h.b16 %v435
      %v441 = vunpack.c.l.b16 %v436
      %v442 = vunpack.c.h.b16 %v436
      %v443 = vpack.c.b16 %v439, %v439
      %v444 = vpack.c.b16 %v440, %v440
      %v445 = vpack.c.b16 %v441, %v441
      %v446 = vpack.c.b16 %v442, %v442
      %vm451 = vcmask 125952
      %452 = vst.msk [vmem:[%s170] sm:$0xf] %vm451, %v443
      %453 = vst.msk [vmem:[%s170 + $0x4] sm:$0xf] %vm451, %v444
      %454 = vst.msk [vmem:[%s170 + $0x8] sm:$0xf] %vm451, %v445
      %455 = vst.msk [vmem:[%s170 + $0xc] sm:$0xf] %vm451, %v446
      %v456 = vld [vmem:[%s165] sm:$0xf]
      %v457 = vld [vmem:[%s165 + $0x8] sm:$0xf]
      %v458 = vld [vmem:[%s165 + $0x10] sm:$0xf]
      %v459 = vld [vmem:[%s165 + $0x18] sm:$0xf]
      %v464 = vunpack.c.l.b16 %v456
      %v465 = vunpack.c.l.b16 %v457
      %v466 = vunpack.c.l.b16 %v458
      %v467 = vunpack.c.l.b16 %v459
      %v468 = vpack.c.b16 %v465, %v464
      %v469 = vpack.c.b16 %v467, %v466
      %470 = vrot.lane.b32.xlu0 %v468, 112
      %v471 = vpop.permute.xlu0 %470
      %472 = vrot.lane.b32.xlu0 %v469, 112
      %v473 = vpop.permute.xlu0 %472
      %476 = vst.msk [vmem:[#allocation2] sm:$0xff] %vm189, %v471
      %477 = vst.msk [vmem:[#allocation2 + $0x8] sm:$0xff] %vm189, %v473
      %v478 = vld [vmem:[%s165] sm:$0xf]
      %v479 = vld [vmem:[%s165 + $0x8] sm:$0xf]
      %v480 = vld [vmem:[%s165 + $0x10] sm:$0xf]
      %v481 = vld [vmem:[%s165 + $0x18] sm:$0xf]
      %v482 = vld [vmem:[%s165 + $0x20] sm:$0x1]
      %v488 = vunpack.c.l.b16 %v478
      %v489 = vunpack.c.l.b16 %v479
      %v490 = vunpack.c.l.b16 %v480
      %v491 = vunpack.c.l.b16 %v481
      %v492 = vunpack.c.l.b16 %v482
      %v493 = vpack.c.b16 %v489, %v488
      %v494 = vpack.c.b16 %v491, %v490
      %v495 = vpack.c.b16 %v492, %v492
      %v497 = vshrl.u32 %v493, 16
      %v499 = vshll.u32 %v493, 16
      %v501 = vrot.slane %v499, 1
      %v502 = vor.u32 %v497, %v501
      %v504 = vshll.u32 %v494, 16
      %v506 = vrot.slane %v504, 1
      %v507 = vsel %vm210, %v502, %v506
      %v508 = vshrl.u32 %v494, 16
      %v510 = vor.u32 %v508, %v506
      %v512 = vshll.u32 %v495, 16
      %v514 = vrot.slane %v512, 1
      %v515 = vsel %vm210, %v510, %v514
      %518 = vst.msk [vmem:[#allocation2] sm:$0xff] %vm237, %v507
      %519 = vst.msk [vmem:[#allocation2 + $0x8] sm:$0xff] %vm237, %v515
      %v520 = vld [vmem:[%s165] sm:$0xe]
      %v521 = vld [vmem:[%s165 + $0x8] sm:$0xf]
      %v522 = vld [vmem:[%s165 + $0x10] sm:$0xf]
      %v523 = vld [vmem:[%s165 + $0x18] sm:$0xf]
      %v524 = vld [vmem:[%s165 + $0x20] sm:$0x1]
      %v530 = vunpack.c.l.b16 %v520
      %v531 = vunpack.c.l.b16 %v521
      %v532 = vunpack.c.l.b16 %v522
      %v533 = vunpack.c.l.b16 %v523
      %v534 = vunpack.c.l.b16 %v524
      %v535 = vpack.c.b16 %v531, %v530
      %v536 = vpack.c.b16 %v533, %v532
      %v537 = vpack.c.b16 %v534, %v534
      %v538 = vrot.slane %v535, 1
      %v539 = vrot.slane %v536, 1
      %v540 = vsel %vm258, %v538, %v539
      %v541 = vrot.slane %v537, 1
      %v542 = vsel %vm258, %v539, %v541
      %543 = vrot.lane.b32.xlu0 %v540, 16
      %v544 = vpop.permute.xlu0 %543
      %545 = vrot.lane.b32.xlu0 %v542, 16
      %v546 = vpop.permute.xlu0 %545
      %549 = vst.msk [vmem:[#allocation2] sm:$0xff] %vm270, %v544
      %550 = vst.msk [vmem:[#allocation2 + $0x8] sm:$0xff] %vm270, %v546
      %v551 = vld [vmem:[%s165] sm:$0xe]
      %v552 = vld [vmem:[%s165 + $0x8] sm:$0xf]
      %v553 = vld [vmem:[%s165 + $0x10] sm:$0xf]
      %v554 = vld [vmem:[%s165 + $0x18] sm:$0xf]
      %v555 = vld [vmem:[%s165 + $0x20] sm:$0x3]
      %v561 = vunpack.c.l.b16 %v551
      %v562 = vunpack.c.l.b16 %v552
      %v563 = vunpack.c.l.b16 %v553
      %v564 = vunpack.c.l.b16 %v554
      %v565 = vunpack.c.l.b16 %v555
      %v566 = vpack.c.b16 %v562, %v561
      %v567 = vpack.c.b16 %v564, %v563
      %v568 = vpack.c.b16 %v565, %v565
      %v570 = vshrl.u32 %v566, 16
      %v572 = vrot.slane %v570, 1
      %v573 = vshll.u32 %v566, 16
      %v575 = vrot.slane %v573, 2
      %v576 = vor.u32 %v572, %v575
      %v578 = vshrl.u32 %v567, 16
      %v580 = vrot.slane %v578, 1
      %v581 = vshll.u32 %v567, 16
      %v583 = vrot.slane %v581, 2
      %v584 = vor.u32 %v580, %v583
      %v585 = vsel %vm291, %v576, %v584
      %v587 = vshrl.u32 %v568, 16
      %v589 = vrot.slane %v587, 1
      %v590 = vshll.u32 %v568, 16
      %v592 = vrot.slane %v590, 2
      %v593 = vor.u32 %v589, %v592
      %v594 = vsel %vm291, %v584, %v593
      %595 = vrot.lane.b32.xlu0 %v585, 32
      %v596 = vpop.permute.xlu0 %595
      %597 = vrot.lane.b32.xlu0 %v594, 32
      %v598 = vpop.permute.xlu0 %597
      %601 = vst.msk [vmem:[#allocation2] sm:$0xff] %vm324, %v596
      %602 = vst.msk [vmem:[#allocation2 + $0x8] sm:$0xff] %vm324, %v598
      %v603 = vld [vmem:[#allocation2] sm:$0xff]
      %v604 = vld [vmem:[#allocation2 + $0x8] sm:$0xff]
      %s605 = scalar_lea.vmem %s1, 32
      %v606 = vld [vmem:[%s605] sm:$0xf]
      %v607 = vld [vmem:[%s605 + $0x4] sm:$0xf]
      %v608 = vld [vmem:[%s605 + $0x8] sm:$0xf]
      %v609 = vld [vmem:[%s605 + $0xc] sm:$0xf]
      %v610 = vld [vmem:[%s605 + $0x10] sm:$0xf]
      %v611 = vld [vmem:[%s605 + $0x14] sm:$0xf]
      %v612 = vld [vmem:[%s605 + $0x18] sm:$0xf]
      %v613 = vld [vmem:[%s605 + $0x1c] sm:$0xf]
      %v622 = vunpack.c.l.b16 %v606
      %v623 = vunpack.c.l.b16 %v607
      %v624 = vunpack.c.l.b16 %v608
      %v625 = vunpack.c.l.b16 %v609
      %v626 = vunpack.c.l.b16 %v610
      %v627 = vunpack.c.l.b16 %v611
      %v628 = vunpack.c.l.b16 %v612
      %v629 = vunpack.c.l.b16 %v613
      %v630 = vpack.c.b16 %v623, %v622
      %v631 = vpack.c.b16 %v625, %v624
      %v632 = vpack.c.b16 %v627, %v626
      %v633 = vpack.c.b16 %v629, %v628
      %638 = vrot.lane.b32.xlu0 %v341, 112
      %v639 = vpop.permute.xlu0 %638
      %v642 = vsel %vm367, %v603, 0
      %v645 = vsel %vm367, %v604, 0
      %647 = vmatprep.subr.bf16.mxu0 0
      %648 = vmatpush1.bf16.msra.mxu0 %v630
      %649 = vmatprep.subr.bf16.mxu0 0
      %650 = vmatpush1.bf16.msra.mxu0 %v631
      %651 = vmatprep.subr.bf16.mxu0 0
      %652 = vmatpush1.bf16.msra.mxu0 %v632
      %653 = vmatprep.subr.bf16.mxu0 0
      %654 = vmatpush1.bf16.msra.mxu0 %v633
      %655 = vmatprep.subr.bf16.mxu0 0
      %656 = vmatpush1.bf16.msra.mxu0 0
      %657 = vmatprep.subr.bf16.mxu0 0
      %658 = vmatpush1.bf16.msra.mxu0 0
      %659 = vmatprep.subr.bf16.mxu0 0
      %660 = vmatpush1.bf16.msra.mxu0 0
      %661 = vmatprep.subr.bf16.mxu0 0
      %662 = vmatpush1.bf16.msra.mxu0 0
      %663 = vmatprep.subr.bf16.mxu0 0
      %664 = vmatpush1.bf16.msra.mxu0 0
      %665 = vmatprep.subr.bf16.mxu0 0
      %666 = vmatpush1.bf16.msra.mxu0 0
      %667 = vmatprep.subr.bf16.mxu0 0
      %668 = vmatpush1.bf16.msra.mxu0 0
      %669 = vmatprep.subr.bf16.mxu0 0
      %670 = vmatpush1.bf16.msra.mxu0 0
      %671 = vmatprep.subr.bf16.mxu0 0
      %672 = vmatpush1.bf16.msra.mxu0 0
      %673 = vmatprep.subr.bf16.mxu0 0
      %674 = vmatpush1.bf16.msra.mxu0 0
      %675 = vmatprep.subr.bf16.mxu0 0
      %676 = vmatpush1.bf16.msra.mxu0 0
      %677 = vmatprep.subr.bf16.mxu0 0
      %678 = vmatpush1.bf16.msra.mxu0 0
      %679 = vmatprep.mubr.bf16.mxu0 0
      %680 = vmatmul.mubr.bf16.gmra.mrb[0].mxu0 %v642
      %v681 = vpop.f32.mrb[0].mxu0
      %v682 = vadd.f32 %v639, %v681
      %v683 = vpop.f32.mrb[0].mxu0
      %v684 = vpop.f32.mrb[0].mxu0
      %v685 = vadd.f32 %v639, %v684
      %v686 = vpop.f32.mrb[0].mxu0
      %687 = vmatprep.mubr.bf16.mxu0 0
      %688 = vmatmul.mubr.bf16.gmra.mrb[0].mxu0 %v645
      %v689 = vpop.f32.mrb[0].mxu0
      %v690 = vadd.f32 %v639, %v689
      %v691 = vpop.f32.mrb[0].mxu0
      %v692 = vpop.f32.mrb[0].mxu0
      %v693 = vadd.f32 %v639, %v692
      %v694 = vpop.f32.mrb[0].mxu0
      %695 = vdwg.mxu0
      %vm696 = vcmp.ge.f32.partialorder %v682, 0.0
      %vm697 = vcmp.ge.f32.partialorder %v685, 0.0
      %vm698 = vcmp.ge.f32.partialorder %v690, 0.0
      %vm699 = vcmp.ge.f32.partialorder %v693, 0.0
      %v700 = vmul.f32 %v682, 0.1
      %v701 = vmul.f32 %v685, 0.1
      %v702 = vmul.f32 %v690, 0.1
      %v703 = vmul.f32 %v693, 0.1
      %v704 = vsel %vm696, %v682, %v700
      %v705 = vsel %vm697, %v685, %v701
      %v706 = vsel %vm698, %v690, %v702
      %v707 = vsel %vm699, %v693, %v703
      %v708 = vpack.c.bf16 %v705, %v704
      %v709 = vpack.c.bf16 %v707, %v706
      %v712 = vunpack.c.l.b16 %v708
      %v713 = vunpack.c.h.b16 %v708
      %v714 = vunpack.c.l.b16 %v709
      %v715 = vunpack.c.h.b16 %v709
      %v716 = vpack.c.b16 %v712, %v712
      %v717 = vpack.c.b16 %v713, %v713
      %v718 = vpack.c.b16 %v714, %v714
      %v719 = vpack.c.b16 %v715, %v715
      %720 = vrot.lane.b32.xlu0 %v716, 16
      %v721 = vpop.permute.xlu0 %720
      %722 = vrot.lane.b32.xlu0 %v717, 16
      %v723 = vpop.permute.xlu0 %722
      %724 = vrot.lane.b32.xlu0 %v718, 16
      %v725 = vpop.permute.xlu0 %724
      %726 = vrot.lane.b32.xlu0 %v719, 16
      %v727 = vpop.permute.xlu0 %726
      %vm732 = vcmask 257152
      %733 = vst.msk [vmem:[%s170] sm:$0xf] %vm732, %v721
      %734 = vst.msk [vmem:[%s170 + $0x4] sm:$0xf] %vm732, %v723
      %735 = vst.msk [vmem:[%s170 + $0x8] sm:$0xf] %vm732, %v725
      %736 = vst.msk [vmem:[%s170 + $0xc] sm:$0xf] %vm732, %v727
      %v737 = vld [vmem:[%s165] sm:$0xf]
      %v738 = vld [vmem:[%s165 + $0x8] sm:$0xf]
      %v739 = vld [vmem:[%s165 + $0x10] sm:$0xf]
      %v740 = vld [vmem:[%s165 + $0x18] sm:$0xf]
      %v745 = vunpack.c.l.b16 %v737
      %v746 = vunpack.c.l.b16 %v738
      %v747 = vunpack.c.l.b16 %v739
      %v748 = vunpack.c.l.b16 %v740
      %v749 = vpack.c.b16 %v746, %v745
      %v750 = vpack.c.b16 %v748, %v747
      %751 = vrot.lane.b32.xlu0 %v749, 96
      %v752 = vpop.permute.xlu0 %751
      %753 = vrot.lane.b32.xlu0 %v750, 96
      %v754 = vpop.permute.xlu0 %753
      %757 = vst.msk [vmem:[#allocation2] sm:$0xff] %vm189, %v752
      %758 = vst.msk [vmem:[#allocation2 + $0x8] sm:$0xff] %vm189, %v754
      %v759 = vld [vmem:[%s165] sm:$0xf]
      %v760 = vld [vmem:[%s165 + $0x8] sm:$0xf]
      %v761 = vld [vmem:[%s165 + $0x10] sm:$0xf]
      %v762 = vld [vmem:[%s165 + $0x18] sm:$0xf]
      %v763 = vld [vmem:[%s165 + $0x20] sm:$0x1]
      %v769 = vunpack.c.l.b16 %v759
      %v770 = vunpack.c.l.b16 %v760
      %v771 = vunpack.c.l.b16 %v761
      %v772 = vunpack.c.l.b16 %v762
      %v773 = vunpack.c.l.b16 %v763
      %v774 = vpack.c.b16 %v770, %v769
      %v775 = vpack.c.b16 %v772, %v771
      %v776 = vpack.c.b16 %v773, %v773
      %v778 = vshrl.u32 %v774, 16
      %v780 = vshll.u32 %v774, 16
      %v782 = vrot.slane %v780, 1
      %v783 = vor.u32 %v778, %v782
      %v785 = vshll.u32 %v775, 16
      %v787 = vrot.slane %v785, 1
      %v788 = vsel %vm210, %v783, %v787
      %v789 = vshrl.u32 %v775, 16
      %v791 = vor.u32 %v789, %v787
      %v793 = vshll.u32 %v776, 16
      %v795 = vrot.slane %v793, 1
      %v796 = vsel %vm210, %v791, %v795
      %797 = vrot.lane.b32.xlu0 %v788, 112
      %v798 = vpop.permute.xlu0 %797
      %799 = vrot.lane.b32.xlu0 %v796, 112
      %v800 = vpop.permute.xlu0 %799
      %803 = vst.msk [vmem:[#allocation2] sm:$0xff] %vm237, %v798
      %804 = vst.msk [vmem:[#allocation2 + $0x8] sm:$0xff] %vm237, %v800
      %v805 = vld [vmem:[%s165] sm:$0xe]
      %v806 = vld [vmem:[%s165 + $0x8] sm:$0xf]
      %v807 = vld [vmem:[%s165 + $0x10] sm:$0xf]
      %v808 = vld [vmem:[%s165 + $0x18] sm:$0xf]
      %v809 = vld [vmem:[%s165 + $0x20] sm:$0x1]
      %v815 = vunpack.c.l.b16 %v805
      %v816 = vunpack.c.l.b16 %v806
      %v817 = vunpack.c.l.b16 %v807
      %v818 = vunpack.c.l.b16 %v808
      %v819 = vunpack.c.l.b16 %v809
      %v820 = vpack.c.b16 %v816, %v815
      %v821 = vpack.c.b16 %v818, %v817
      %v822 = vpack.c.b16 %v819, %v819
      %v823 = vrot.slane %v820, 1
      %v824 = vrot.slane %v821, 1
      %v825 = vsel %vm258, %v823, %v824
      %v826 = vrot.slane %v822, 1
      %v827 = vsel %vm258, %v824, %v826
      %830 = vst.msk [vmem:[#allocation2] sm:$0xff] %vm270, %v825
      %831 = vst.msk [vmem:[#allocation2 + $0x8] sm:$0xff] %vm270, %v827
      %v832 = vld [vmem:[%s165] sm:$0xe]
      %v833 = vld [vmem:[%s165 + $0x8] sm:$0xf]
      %v834 = vld [vmem:[%s165 + $0x10] sm:$0xf]
      %v835 = vld [vmem:[%s165 + $0x18] sm:$0xf]
      %v836 = vld [vmem:[%s165 + $0x20] sm:$0x3]
      %v842 = vunpack.c.l.b16 %v832
      %v843 = vunpack.c.l.b16 %v833
      %v844 = vunpack.c.l.b16 %v834
      %v845 = vunpack.c.l.b16 %v835
      %v846 = vunpack.c.l.b16 %v836
      %v847 = vpack.c.b16 %v843, %v842
      %v848 = vpack.c.b16 %v845, %v844
      %v849 = vpack.c.b16 %v846, %v846
      %v851 = vshrl.u32 %v847, 16
      %v853 = vrot.slane %v851, 1
      %v854 = vshll.u32 %v847, 16
      %v856 = vrot.slane %v854, 2
      %v857 = vor.u32 %v853, %v856
      %v859 = vshrl.u32 %v848, 16
      %v861 = vrot.slane %v859, 1
      %v862 = vshll.u32 %v848, 16
      %v864 = vrot.slane %v862, 2
      %v865 = vor.u32 %v861, %v864
      %v866 = vsel %vm291, %v857, %v865
      %v868 = vshrl.u32 %v849, 16
      %v870 = vrot.slane %v868, 1
      %v871 = vshll.u32 %v849, 16
      %v873 = vrot.slane %v871, 2
      %v874 = vor.u32 %v870, %v873
      %v875 = vsel %vm291, %v865, %v874
      %876 = vrot.lane.b32.xlu0 %v866, 16
      %v877 = vpop.permute.xlu0 %876
      %878 = vrot.lane.b32.xlu0 %v875, 16
      %v879 = vpop.permute.xlu0 %878
      %882 = vst.msk [vmem:[#allocation2] sm:$0xff] %vm324, %v877
      %883 = vst.msk [vmem:[#allocation2 + $0x8] sm:$0xff] %vm324, %v879
      %v884 = vld [vmem:[#allocation2] sm:$0xff]
      %v885 = vld [vmem:[#allocation2 + $0x8] sm:$0xff]
      %s886 = scalar_lea.vmem %s1, 64
      %v887 = vld [vmem:[%s886] sm:$0xf]
      %v888 = vld [vmem:[%s886 + $0x4] sm:$0xf]
      %v889 = vld [vmem:[%s886 + $0x8] sm:$0xf]
      %v890 = vld [vmem:[%s886 + $0xc] sm:$0xf]
      %v891 = vld [vmem:[%s886 + $0x10] sm:$0xf]
      %v892 = vld [vmem:[%s886 + $0x14] sm:$0xf]
      %v893 = vld [vmem:[%s886 + $0x18] sm:$0xf]
      %v894 = vld [vmem:[%s886 + $0x1c] sm:$0xf]
      %v903 = vunpack.c.l.b16 %v887
      %v904 = vunpack.c.l.b16 %v888
      %v905 = vunpack.c.l.b16 %v889
      %v906 = vunpack.c.l.b16 %v890
      %v907 = vunpack.c.l.b16 %v891
      %v908 = vunpack.c.l.b16 %v892
      %v909 = vunpack.c.l.b16 %v893
      %v910 = vunpack.c.l.b16 %v894
      %v911 = vpack.c.b16 %v904, %v903
      %v912 = vpack.c.b16 %v906, %v905
      %v913 = vpack.c.b16 %v908, %v907
      %v914 = vpack.c.b16 %v910, %v909
      %919 = vrot.lane.b32.xlu0 %v341, 96
      %v920 = vpop.permute.xlu0 %919
      %v923 = vsel %vm367, %v884, 0
      %v926 = vsel %vm367, %v885, 0
      %928 = vmatprep.subr.bf16.mxu0 0
      %929 = vmatpush1.bf16.msra.mxu0 %v911
      %930 = vmatprep.subr.bf16.mxu0 0
      %931 = vmatpush1.bf16.msra.mxu0 %v912
      %932 = vmatprep.subr.bf16.mxu0 0
      %933 = vmatpush1.bf16.msra.mxu0 %v913
      %934 = vmatprep.subr.bf16.mxu0 0
      %935 = vmatpush1.bf16.msra.mxu0 %v914
      %936 = vmatprep.subr.bf16.mxu0 0
      %937 = vmatpush1.bf16.msra.mxu0 0
      %938 = vmatprep.subr.bf16.mxu0 0
      %939 = vmatpush1.bf16.msra.mxu0 0
      %940 = vmatprep.subr.bf16.mxu0 0
      %941 = vmatpush1.bf16.msra.mxu0 0
      %942 = vmatprep.subr.bf16.mxu0 0
      %943 = vmatpush1.bf16.msra.mxu0 0
      %944 = vmatprep.subr.bf16.mxu0 0
      %945 = vmatpush1.bf16.msra.mxu0 0
      %946 = vmatprep.subr.bf16.mxu0 0
      %947 = vmatpush1.bf16.msra.mxu0 0
      %948 = vmatprep.subr.bf16.mxu0 0
      %949 = vmatpush1.bf16.msra.mxu0 0
      %950 = vmatprep.subr.bf16.mxu0 0
      %951 = vmatpush1.bf16.msra.mxu0 0
      %952 = vmatprep.subr.bf16.mxu0 0
      %953 = vmatpush1.bf16.msra.mxu0 0
      %954 = vmatprep.subr.bf16.mxu0 0
      %955 = vmatpush1.bf16.msra.mxu0 0
      %956 = vmatprep.subr.bf16.mxu0 0
      %957 = vmatpush1.bf16.msra.mxu0 0
      %958 = vmatprep.subr.bf16.mxu0 0
      %959 = vmatpush1.bf16.msra.mxu0 0
      %960 = vmatprep.mubr.bf16.mxu0 0
      %961 = vmatmul.mubr.bf16.gmra.mrb[0].mxu0 %v923
      %v962 = vpop.f32.mrb[0].mxu0
      %v963 = vadd.f32 %v920, %v962
      %v964 = vpop.f32.mrb[0].mxu0
      %v965 = vpop.f32.mrb[0].mxu0
      %v966 = vadd.f32 %v920, %v965
      %v967 = vpop.f32.mrb[0].mxu0
      %968 = vmatprep.mubr.bf16.mxu0 0
      %969 = vmatmul.mubr.bf16.gmra.mrb[0].mxu0 %v926
      %v970 = vpop.f32.mrb[0].mxu0
      %v971 = vadd.f32 %v920, %v970
      %v972 = vpop.f32.mrb[0].mxu0
      %v973 = vpop.f32.mrb[0].mxu0
      %v974 = vadd.f32 %v920, %v973
      %v975 = vpop.f32.mrb[0].mxu0
      %976 = vdwg.mxu0
      %vm977 = vcmp.ge.f32.partialorder %v963, 0.0
      %vm978 = vcmp.ge.f32.partialorder %v966, 0.0
      %vm979 = vcmp.ge.f32.partialorder %v971, 0.0
      %vm980 = vcmp.ge.f32.partialorder %v974, 0.0
      %v981 = vmul.f32 %v963, 0.1
      %v982 = vmul.f32 %v966, 0.1
      %v983 = vmul.f32 %v971, 0.1
      %v984 = vmul.f32 %v974, 0.1
      %v985 = vsel %vm977, %v963, %v981
      %v986 = vsel %vm978, %v966, %v982
      %v987 = vsel %vm979, %v971, %v983
      %v988 = vsel %vm980, %v974, %v984
      %v989 = vpack.c.bf16 %v986, %v985
      %v990 = vpack.c.bf16 %v988, %v987
      %v993 = vunpack.c.l.b16 %v989
      %v994 = vunpack.c.h.b16 %v989
      %v995 = vunpack.c.l.b16 %v990
      %v996 = vunpack.c.h.b16 %v990
      %v997 = vpack.c.b16 %v993, %v993
      %v998 = vpack.c.b16 %v994, %v994
      %v999 = vpack.c.b16 %v995, %v995
      %v1000 = vpack.c.b16 %v996, %v996
      %1001 = vrot.lane.b32.xlu0 %v997, 32
      %v1002 = vpop.permute.xlu0 %1001
      %1003 = vrot.lane.b32.xlu0 %v998, 32
      %v1004 = vpop.permute.xlu0 %1003
      %1005 = vrot.lane.b32.xlu0 %v999, 32
      %v1006 = vpop.permute.xlu0 %1005
      %1007 = vrot.lane.b32.xlu0 %v1000, 32
      %v1008 = vpop.permute.xlu0 %1007
      %vm1013 = vcmask 388352
      %1014 = vst.msk [vmem:[%s170] sm:$0xf] %vm1013, %v1002
      %1015 = vst.msk [vmem:[%s170 + $0x4] sm:$0xf] %vm1013, %v1004
      %1016 = vst.msk [vmem:[%s170 + $0x8] sm:$0xf] %vm1013, %v1006
      %1017 = vst.msk [vmem:[%s170 + $0xc] sm:$0xf] %vm1013, %v1008
      %v1018 = vld [vmem:[%s165] sm:$0xf]
      %v1019 = vld [vmem:[%s165 + $0x8] sm:$0xf]
      %v1020 = vld [vmem:[%s165 + $0x10] sm:$0xf]
      %v1021 = vld [vmem:[%s165 + $0x18] sm:$0xf]
      %v1026 = vunpack.c.l.b16 %v1018
      %v1027 = vunpack.c.l.b16 %v1019
      %v1028 = vunpack.c.l.b16 %v1020
      %v1029 = vunpack.c.l.b16 %v1021
      %v1030 = vpack.c.b16 %v1027, %v1026
      %v1031 = vpack.c.b16 %v1029, %v1028
      %1032 = vrot.lane.b32.xlu0 %v1030, 80
      %v1033 = vpop.permute.xlu0 %1032
      %1034 = vrot.lane.b32.xlu0 %v1031, 80
      %v1035 = vpop.permute.xlu0 %1034
      %1038 = vst.msk [vmem:[#allocation2] sm:$0xff] %vm189, %v1033
      %1039 = vst.msk [vmem:[#allocation2 + $0x8] sm:$0xff] %vm189, %v1035
      %v1040 = vld [vmem:[%s165] sm:$0xf]
      %v1041 = vld [vmem:[%s165 + $0x8] sm:$0xf]
      %v1042 = vld [vmem:[%s165 + $0x10] sm:$0xf]
      %v1043 = vld [vmem:[%s165 + $0x18] sm:$0xf]
      %v1044 = vld [vmem:[%s165 + $0x20] sm:$0x1]
      %v1050 = vunpack.c.l.b16 %v1040
      %v1051 = vunpack.c.l.b16 %v1041
      %v1052 = vunpack.c.l.b16 %v1042
      %v1053 = vunpack.c.l.b16 %v1043
      %v1054 = vunpack.c.l.b16 %v1044
      %v1055 = vpack.c.b16 %v1051, %v1050
      %v1056 = vpack.c.b16 %v1053, %v1052
      %v1057 = vpack.c.b16 %v1054, %v1054
      %v1059 = vshrl.u32 %v1055, 16
      %v1061 = vshll.u32 %v1055, 16
      %v1063 = vrot.slane %v1061, 1
      %v1064 = vor.u32 %v1059, %v1063
      %v1066 = vshll.u32 %v1056, 16
      %v1068 = vrot.slane %v1066, 1
      %v1069 = vsel %vm210, %v1064, %v1068
      %v1070 = vshrl.u32 %v1056, 16
      %v1072 = vor.u32 %v1070, %v1068
      %v1074 = vshll.u32 %v1057, 16
      %v1076 = vrot.slane %v1074, 1
      %v1077 = vsel %vm210, %v1072, %v1076
      %1078 = vrot.lane.b32.xlu0 %v1069, 96
      %v1079 = vpop.permute.xlu0 %1078
      %1080 = vrot.lane.b32.xlu0 %v1077, 96
      %v1081 = vpop.permute.xlu0 %1080
      %1084 = vst.msk [vmem:[#allocation2] sm:$0xff] %vm237, %v1079
      %1085 = vst.msk [vmem:[#allocation2 + $0x8] sm:$0xff] %vm237, %v1081
      %v1086 = vld [vmem:[%s165] sm:$0xe]
      %v1087 = vld [vmem:[%s165 + $0x8] sm:$0xf]
      %v1088 = vld [vmem:[%s165 + $0x10] sm:$0xf]
      %v1089 = vld [vmem:[%s165 + $0x18] sm:$0xf]
      %v1090 = vld [vmem:[%s165 + $0x20] sm:$0x1]
      %v1096 = vunpack.c.l.b16 %v1086
      %v1097 = vunpack.c.l.b16 %v1087
      %v1098 = vunpack.c.l.b16 %v1088
      %v1099 = vunpack.c.l.b16 %v1089
      %v1100 = vunpack.c.l.b16 %v1090
      %v1101 = vpack.c.b16 %v1097, %v1096
      %v1102 = vpack.c.b16 %v1099, %v1098
      %v1103 = vpack.c.b16 %v1100, %v1100
      %v1104 = vrot.slane %v1101, 1
      %v1105 = vrot.slane %v1102, 1
      %v1106 = vsel %vm258, %v1104, %v1105
      %v1107 = vrot.slane %v1103, 1
      %v1108 = vsel %vm258, %v1105, %v1107
      %1109 = vrot.lane.b32.xlu0 %v1106, 112
      %v1110 = vpop.permute.xlu0 %1109
      %1111 = vrot.lane.b32.xlu0 %v1108, 112
      %v1112 = vpop.permute.xlu0 %1111
      %1115 = vst.msk [vmem:[#allocation2] sm:$0xff] %vm270, %v1110
      %1116 = vst.msk [vmem:[#allocation2 + $0x8] sm:$0xff] %vm270, %v1112
      %v1117 = vld [vmem:[%s165] sm:$0xe]
      %v1118 = vld [vmem:[%s165 + $0x8] sm:$0xf]
      %v1119 = vld [vmem:[%s165 + $0x10] sm:$0xf]
      %v1120 = vld [vmem:[%s165 + $0x18] sm:$0xf]
      %v1121 = vld [vmem:[%s165 + $0x20] sm:$0x3]
      %v1127 = vunpack.c.l.b16 %v1117
      %v1128 = vunpack.c.l.b16 %v1118
      %v1129 = vunpack.c.l.b16 %v1119
      %v1130 = vunpack.c.l.b16 %v1120
      %v1131 = vunpack.c.l.b16 %v1121
      %v1132 = vpack.c.b16 %v1128, %v1127
      %v1133 = vpack.c.b16 %v1130, %v1129
      %v1134 = vpack.c.b16 %v1131, %v1131
      %v1136 = vshrl.u32 %v1132, 16
      %v1138 = vrot.slane %v1136, 1
      %v1139 = vshll.u32 %v1132, 16
      %v1141 = vrot.slane %v1139, 2
      %v1142 = vor.u32 %v1138, %v1141
      %v1144 = vshrl.u32 %v1133, 16
      %v1146 = vrot.slane %v1144, 1
      %v1147 = vshll.u32 %v1133, 16
      %v1149 = vrot.slane %v1147, 2
      %v1150 = vor.u32 %v1146, %v1149
      %v1151 = vsel %vm291, %v1142, %v1150
      %v1153 = vshrl.u32 %v1134, 16
      %v1155 = vrot.slane %v1153, 1
      %v1156 = vshll.u32 %v1134, 16
      %v1158 = vrot.slane %v1156, 2
      %v1159 = vor.u32 %v1155, %v1158
      %v1160 = vsel %vm291, %v1150, %v1159
      %1163 = vst.msk [vmem:[#allocation2] sm:$0xff] %vm324, %v1151
      %1164 = vst.msk [vmem:[#allocation2 + $0x8] sm:$0xff] %vm324, %v1160
      %v1165 = vld [vmem:[#allocation2] sm:$0xff]
      %v1166 = vld [vmem:[#allocation2 + $0x8] sm:$0xff]
      %s1167 = scalar_lea.vmem %s1, 96
      %v1168 = vld [vmem:[%s1167] sm:$0xf]
      %v1169 = vld [vmem:[%s1167 + $0x4] sm:$0xf]
      %v1170 = vld [vmem:[%s1167 + $0x8] sm:$0xf]
      %v1171 = vld [vmem:[%s1167 + $0xc] sm:$0xf]
      %v1172 = vld [vmem:[%s1167 + $0x10] sm:$0xf]
      %v1173 = vld [vmem:[%s1167 + $0x14] sm:$0xf]
      %v1174 = vld [vmem:[%s1167 + $0x18] sm:$0xf]
      %v1175 = vld [vmem:[%s1167 + $0x1c] sm:$0xf]
      %v1184 = vunpack.c.l.b16 %v1168
      %v1185 = vunpack.c.l.b16 %v1169
      %v1186 = vunpack.c.l.b16 %v1170
      %v1187 = vunpack.c.l.b16 %v1171
      %v1188 = vunpack.c.l.b16 %v1172
      %v1189 = vunpack.c.l.b16 %v1173
      %v1190 = vunpack.c.l.b16 %v1174
      %v1191 = vunpack.c.l.b16 %v1175
      %v1192 = vpack.c.b16 %v1185, %v1184
      %v1193 = vpack.c.b16 %v1187, %v1186
      %v1194 = vpack.c.b16 %v1189, %v1188
      %v1195 = vpack.c.b16 %v1191, %v1190
      %1200 = vrot.lane.b32.xlu0 %v341, 80
      %v1201 = vpop.permute.xlu0 %1200
      %v1204 = vsel %vm367, %v1165, 0
      %v1207 = vsel %vm367, %v1166, 0
      %1209 = vmatprep.subr.bf16.mxu0 0
      %1210 = vmatpush1.bf16.msra.mxu0 %v1192
      %1211 = vmatprep.subr.bf16.mxu0 0
      %1212 = vmatpush1.bf16.msra.mxu0 %v1193
      %1213 = vmatprep.subr.bf16.mxu0 0
      %1214 = vmatpush1.bf16.msra.mxu0 %v1194
      %1215 = vmatprep.subr.bf16.mxu0 0
      %1216 = vmatpush1.bf16.msra.mxu0 %v1195
      %1217 = vmatprep.subr.bf16.mxu0 0
      %1218 = vmatpush1.bf16.msra.mxu0 0
      %1219 = vmatprep.subr.bf16.mxu0 0
      %1220 = vmatpush1.bf16.msra.mxu0 0
      %1221 = vmatprep.subr.bf16.mxu0 0
      %1222 = vmatpush1.bf16.msra.mxu0 0
      %1223 = vmatprep.subr.bf16.mxu0 0
      %1224 = vmatpush1.bf16.msra.mxu0 0
      %1225 = vmatprep.subr.bf16.mxu0 0
      %1226 = vmatpush1.bf16.msra.mxu0 0
      %1227 = vmatprep.subr.bf16.mxu0 0
      %1228 = vmatpush1.bf16.msra.mxu0 0
      %1229 = vmatprep.subr.bf16.mxu0 0
      %1230 = vmatpush1.bf16.msra.mxu0 0
      %1231 = vmatprep.subr.bf16.mxu0 0
      %1232 = vmatpush1.bf16.msra.mxu0 0
      %1233 = vmatprep.subr.bf16.mxu0 0
      %1234 = vmatpush1.bf16.msra.mxu0 0
      %1235 = vmatprep.subr.bf16.mxu0 0
      %1236 = vmatpush1.bf16.msra.mxu0 0
      %1237 = vmatprep.subr.bf16.mxu0 0
      %1238 = vmatpush1.bf16.msra.mxu0 0
      %1239 = vmatprep.subr.bf16.mxu0 0
      %1240 = vmatpush1.bf16.msra.mxu0 0
      %1241 = vmatprep.mubr.bf16.mxu0 0
      %1242 = vmatmul.mubr.bf16.gmra.mrb[0].mxu0 %v1204
      %v1243 = vpop.f32.mrb[0].mxu0
      %v1244 = vadd.f32 %v1201, %v1243
      %v1245 = vpop.f32.mrb[0].mxu0
      %v1246 = vpop.f32.mrb[0].mxu0
      %v1247 = vadd.f32 %v1201, %v1246
      %v1248 = vpop.f32.mrb[0].mxu0
      %1249 = vmatprep.mubr.bf16.mxu0 0
      %1250 = vmatmul.mubr.bf16.gmra.mrb[0].mxu0 %v1207
      %v1251 = vpop.f32.mrb[0].mxu0
      %v1252 = vadd.f32 %v1201, %v1251
      %v1253 = vpop.f32.mrb[0].mxu0
      %v1254 = vpop.f32.mrb[0].mxu0
      %v1255 = vadd.f32 %v1201, %v1254
      %v1256 = vpop.f32.mrb[0].mxu0
      %1257 = vdwg.mxu0
      %vm1258 = vcmp.ge.f32.partialorder %v1244, 0.0
      %vm1259 = vcmp.ge.f32.partialorder %v1247, 0.0
      %vm1260 = vcmp.ge.f32.partialorder %v1252, 0.0
      %vm1261 = vcmp.ge.f32.partialorder %v1255, 0.0
      %v1262 = vmul.f32 %v1244, 0.1
      %v1263 = vmul.f32 %v1247, 0.1
      %v1264 = vmul.f32 %v1252, 0.1
      %v1265 = vmul.f32 %v1255, 0.1
      %v1266 = vsel %vm1258, %v1244, %v1262
      %v1267 = vsel %vm1259, %v1247, %v1263
      %v1268 = vsel %vm1260, %v1252, %v1264
      %v1269 = vsel %vm1261, %v1255, %v1265
      %v1270 = vpack.c.bf16 %v1267, %v1266
      %v1271 = vpack.c.bf16 %v1269, %v1268
      %v1274 = vunpack.c.l.b16 %v1270
      %v1275 = vunpack.c.h.b16 %v1270
      %v1276 = vunpack.c.l.b16 %v1271
      %v1277 = vunpack.c.h.b16 %v1271
      %v1278 = vpack.c.b16 %v1274, %v1274
      %v1279 = vpack.c.b16 %v1275, %v1275
      %v1280 = vpack.c.b16 %v1276, %v1276
      %v1281 = vpack.c.b16 %v1277, %v1277
      %1282 = vrot.lane.b32.xlu0 %v1278, 48
      %v1283 = vpop.permute.xlu0 %1282
      %1284 = vrot.lane.b32.xlu0 %v1279, 48
      %v1285 = vpop.permute.xlu0 %1284
      %1286 = vrot.lane.b32.xlu0 %v1280, 48
      %v1287 = vpop.permute.xlu0 %1286
      %1288 = vrot.lane.b32.xlu0 %v1281, 48
      %v1289 = vpop.permute.xlu0 %1288
      %vm1294 = vcmask 519552
      %1295 = vst.msk [vmem:[%s170] sm:$0xf] %vm1294, %v1283
      %1296 = vst.msk [vmem:[%s170 + $0x4] sm:$0xf] %vm1294, %v1285
      %1297 = vst.msk [vmem:[%s170 + $0x8] sm:$0xf] %vm1294, %v1287
      %1298 = vst.msk [vmem:[%s170 + $0xc] sm:$0xf] %vm1294, %v1289
      %vm1299 = vcmask 1043968
      %1300 = vst.msk [vmem:[%s170] sm:$0xf] %vm1299, 0
      %1301 = vst.msk [vmem:[%s170 + $0x4] sm:$0xf] %vm1299, 0
      %1302 = vst.msk [vmem:[%s170 + $0x8] sm:$0xf] %vm1299, 0
      %1303 = vst.msk [vmem:[%s170 + $0xc] sm:$0xf] %vm1299, 0
      %p1304 = scmp.lt.s32.totalorder %s14, 1
      %s1305 = scalar_select %p1304, %s14, 1
      %s1306 = smul.addr %s1305, 4
      %s1307 = smul.addr %s1306, 4
      %s1308 = scalar_lea.vmem %s3, %s1307
      // Predicated region
      $region33: #{fwd.7} parent=31 // pred_check
        %p1309 = pneg %p100
      $region34: #{fwd.7} parent=31 // pred_check_branch
        %1311 = sbr.rel (%p1309) target = $region36
      $region35: #{fwd.7} parent=31 // pred_region
        _
      $region36: #{fwd.7} parent=31 // pred_fallthru
        _
    $region32: #{fwd.7} parent=5 // pred_fallthru
      _
    %p1312 = scmp.le.s32.totalorder 2, %s9
    // Predicated region
    $region37: #{fwd.7} parent=5 // pred_check
      %p1313 = pneg %p1312
    $region38: #{fwd.7} parent=5 // pred_check_branch
      %1315 = sbr.rel (%p1313) target = $region40
    $region39: #{fwd.7} parent=5 // pred_region
      %s1316 = ssub.s32 %s9, 2
      // Predicated region
      $region41: #{fwd.7} parent=39 // pred_check
        %p1317 = pneg %p106
      $region42: #{fwd.7} parent=39 // pred_check_branch
        %1319 = sbr.rel (%p1317) target = $region44
      $region43: #{fwd.7} parent=39 // pred_region
        %p1320 = scmp.lt.s32.totalorder %s15, 1
        %s1321 = scalar_select %p1320, %s15, 1
        %s1322 = smul.addr %s1321, 4
        %s1323 = smul.addr %s1322, 4
        %s1324 = scalar_lea.vmem %s3, %s1323
      $region44: #{fwd.7} parent=39 // pred_fallthru
        _
    $region40: #{fwd.7} parent=5 // pred_fallthru
      _
  $region6: #{fwd.7} parent=0 // loop_footer
    %s13 = sadd.s32 1, %s9
  $region7: #{fwd.7} parent=0 // loop_footer_branch
    %8 = sbr.rel target = $region3
  $region8: #{fwd.7} parent=0 // loop_exit
    _

</llo_original>
